<compile_context>
chip_gen: v6e
topology: v6e:2x2x1
jax: 0.10.0
libtpu: 0.0.40
codegen_flags: <defaults>
</compile_context>

<pallas_src>
import jax
import jax.numpy as jnp
from jax.experimental import pallas as pl
from jax.experimental.pallas import tpu as pltpu


# ------------------------------ fused kernel --------------------------------
def _make_encoder_kernel(num_layers, T, B, H):
    fourH = 4 * H
    TB = T * B
    n_rest = 3 * (num_layers - 1)          # (wih, whh, bias) per layer >= 1

    def kernel(*refs):
        # refs = [seq (SMEM), gate_table, whh0, (wih, whh, bias) * (L-1),
        #         out, gx_scratch, y_scratch]
        seq_ref = refs[0]                  # (T*B,) int32  token ids in SMEM
        gt_ref = refs[1]                   # (vocab, 4H)   f32 gate table
        whh0_ref = refs[2]                 # (H, 4H)       f32 layer-0 W_hh^T
        layer_refs = refs[3:3 + n_rest]
        out_ref = refs[3 + n_rest]         # (T*B, H)      last-layer output
        gx_ref = refs[4 + n_rest]          # (T*B, 4H)     VMEM: input projections
        y_ref = refs[5 + n_rest]           # (T*B, H)      VMEM: inter-layer acts

        for l in range(num_layers):
            if l == 0:
                # Layer 0 pre-pass: gather precomputed (embed @ W_ih^T + bias)
                # rows from the VMEM gate table using SMEM token ids.
                for r in range(TB):
                    idx = seq_ref[r]
                    gx_ref[pl.ds(r, 1), :] = gt_ref[pl.ds(idx, 1), :]
                whh = whh0_ref[...]
            else:
                wih_ref = layer_refs[3 * (l - 1)]       # (H, 4H) bf16
                whh_ref = layer_refs[3 * (l - 1) + 1]   # (H, 4H) f32
                b_ref = layer_refs[3 * (l - 1) + 2]     # (1, 4H) f32
                # Pre-pass: input projection + bias for ALL timesteps, one MXU
                # op with bf16 operands / f32 accumulation, staged to VMEM.
                gx_ref[...] = jnp.dot(
                    y_ref[...].astype(jnp.bfloat16), wih_ref[...],
                    preferred_element_type=jnp.float32) + b_ref[...]
                whh = whh_ref[...]          # hoisted out of the time loop

            dst_ref = out_ref if l == num_layers - 1 else y_ref
            h = jnp.zeros((B, H), jnp.float32)
            c = jnp.zeros((B, H), jnp.float32)

            # Recurrence: T is small & static -> fully unrolled, static indices.
            for t in range(T):
                gates = gx_ref[pl.ds(t * B, B), :] + jnp.dot(
                    h, whh, preferred_element_type=jnp.float32)   # (B, 4H) f32
                # Two full-width EUP passes instead of four quarter-width ones.
                sig = jax.nn.sigmoid(gates)
                th = jnp.tanh(gates)
                i = sig[:, 0 * H:1 * H]
                f = sig[:, 1 * H:2 * H]
                g = th[:, 2 * H:3 * H]
                o = sig[:, 3 * H:4 * H]
                c = f * c + i * g
                h = o * jnp.tanh(c)
                dst_ref[pl.ds(t * B, B), :] = h

    return kernel


def _encoder_pallas(prepared, melody_seq):
    """melody_seq: (T, B) int32 -> (T, B, H) f32."""
    T, B = melody_seq.shape
    gt = prepared["gate_table"]
    vocab, fourH = gt.shape
    H = fourH // 4
    num_layers = 1 + len(prepared["layers"])
    TB = T * B

    seq_flat = melody_seq.reshape(TB).astype(jnp.int32)

    in_specs = [pl.BlockSpec(gt.shape, lambda i, s: (0, 0)),
                pl.BlockSpec(prepared["whh0"].shape, lambda i, s: (0, 0))]
    args = [gt, prepared["whh0"]]
    for layer in prepared["layers"]:
        for name in ("wih_t", "whh_t", "bias"):
            w = layer[name]
            in_specs.append(pl.BlockSpec(w.shape, lambda i, s: (0, 0)))
            args.append(w)

    kernel = _make_encoder_kernel(num_layers, T, B, H)

    out2d = pl.pallas_call(
        kernel,
        out_shape=jax.ShapeDtypeStruct((TB, H), jnp.float32),
        grid_spec=pltpu.PrefetchScalarGridSpec(
            num_scalar_prefetch=1,               # token ids -> SMEM
            grid=(1,),                           # single fused invocation
            in_specs=in_specs,
            out_specs=pl.BlockSpec((TB, H), lambda i, s: (0, 0)),
            scratch_shapes=[pltpu.VMEM((TB, fourH), jnp.float32),   # gx stage
                            pltpu.VMEM((TB, H), jnp.float32)]),     # layer acts
        compiler_params=pltpu.CompilerParams(
            dimension_semantics=("arbitrary",)),
    )(seq_flat, *args)
    return out2d.reshape(T, B, H)


@jax.jit
def encoder_forward(prepared_params, melody_seq):
    """melody_seq: (T, B) int32  ->  output (T, B, H) f32."""
    # Embedding lookup is folded into the precomputed gate table; no separate
    # XLA gather op or (T,B,E) HBM round trip.
    return _encoder_pallas(prepared_params, melody_seq)
    # TODO(synk): inter-layer dropout is train-time only (identity in eval).


# ------------------------- parameter init / prep ----------------------------
def init_encoder_params(key, source_melody_size, embedding_dim,
                        num_layers, hidden_size):
    """Parameters in native PyTorch layout."""
    keys = jax.random.split(key, 1 + 4 * num_layers)
    # nn.Embedding default init: N(0, 1)
    embedding = jax.random.normal(
        keys[0], (source_melody_size, embedding_dim), jnp.float32)

    k = 1.0 / jnp.sqrt(hidden_size)
    layers = []
    for l in range(num_layers):
        in_dim = embedding_dim if l == 0 else hidden_size
        kw = keys[1 + 4 * l: 1 + 4 * (l + 1)]
        layers.append({
            "w_ih": jax.random.uniform(kw[0], (4 * hidden_size, in_dim),
                                       jnp.float32, -k, k),
            "w_hh": jax.random.uniform(kw[1], (4 * hidden_size, hidden_size),
                                       jnp.float32, -k, k),
            "b_ih": jax.random.uniform(kw[2], (4 * hidden_size,),
                                       jnp.float32, -k, k),
            "b_hh": jax.random.uniform(kw[3], (4 * hidden_size,),
                                       jnp.float32, -k, k),
        })
    return {"embedding": embedding, "lstm": layers}


def prepare_encoder_params(params):
    """One-time prep: fold embedding + layer-0 projection into a gate table,
    hoist transposes + bias fusion, and cast inter-layer W_ih to bf16."""
    emb = jnp.asarray(params["embedding"], jnp.float32)
    l0 = params["lstm"][0]
    gate_table = (emb @ jnp.asarray(l0["w_ih"], jnp.float32).T
                  + (l0["b_ih"] + l0["b_hh"])).astype(jnp.float32)   # (vocab,4H)

    layers = []
    for layer in params["lstm"][1:]:
        fourH = layer["w_ih"].shape[0]
        layers.append({
            # bf16 MXU operand (f32 accumulation inside the kernel).
            "wih_t": jnp.asarray(layer["w_ih"], jnp.float32).T
                     .astype(jnp.bfloat16),                          # (H, 4H)
            # W_hh kept f32 to bound recurrent drift (and f32 VPU math on v5e).
            "whh_t": jnp.asarray(layer["w_hh"], jnp.float32).T,      # (H, 4H)
            "bias": (layer["b_ih"] + layer["b_hh"]).reshape(1, fourH)
                    .astype(jnp.float32),                            # (1, 4H)
        })
    return {"gate_table": gate_table,
            "whh0": jnp.asarray(l0["w_hh"], jnp.float32).T,          # (H, 4H)
            "layers": layers}


# ---------------- pure-JAX reference (for correctness check) ----------------
def _lstm_layer_ref(x, w_ih, w_hh, b_ih, b_hh):
    T, B, E = x.shape
    H = w_hh.shape[1]

    def step(carry, x_t):
        h, c = carry
        gates = x_t @ w_ih.T + h @ w_hh.T + b_ih + b_hh
        i, f, g, o = jnp.split(gates, 4, axis=-1)
        i = jax.nn.sigmoid(i)
        f = jax.nn.sigmoid(f)
        g = jnp.tanh(g)
        o = jax.nn.sigmoid(o)
        c = f * c + i * g
        h = o * jnp.tanh(c)
        return (h, c), h

    init = (jnp.zeros((B, H), jnp.float32), jnp.zeros((B, H), jnp.float32))
    _, ys = jax.lax.scan(step, init, x)
    return ys


def _encoder_ref(params, melody_seq):
    x = jnp.take(params["embedding"], melody_seq, axis=0)
    for layer in params["lstm"]:
        x = _lstm_layer_ref(x, layer["w_ih"], layer["w_hh"],
                            layer["b_ih"], layer["b_hh"])
    return x


# --------------------------------- main --------------------------------------
if __name__ == "__main__":
    # Module hyper-params (small, consistent with the forward pass).
    source_melody_size = 50
    embedding_dim = 32
    num_layers = 2
    hidden_size = 32
    T, B = 10, 8          # sequence_length * batch_size (seq-first)

    key = jax.random.PRNGKey(0)
    pkey, dkey = jax.random.split(key)
    params = init_encoder_params(pkey, source_melody_size, embedding_dim,
                                 num_layers, hidden_size)
    prepared = prepare_encoder_params(params)
    melody_seq = jax.random.randint(dkey, (T, B), 0, source_melody_size,
                                    dtype=jnp.int32)

    out = encoder_forward(prepared, melody_seq)
    out = jax.block_until_ready(out)

    ref = _encoder_ref(params, melody_seq)
    assert out.shape == (T, B, hidden_size)
    # Tolerance relaxed vs the all-f32 version because the inter-layer input
    # projection uses bf16 MXU operands (f32 accumulation, f32 W_hh).
    assert jnp.allclose(out, ref, atol=2e-2, rtol=2e-2), "mismatch vs reference"

    print("KERNEL_OK")
</pallas_src>

<mosaic_0001>
module attributes {stable_mosaic.version = 11 : i64} {
  func.func @kernel(%arg0: i32, %arg1: memref<80xi32, #tpu.memory_space<smem>>, %arg2: memref<50x128xf32, #tpu.memory_space<vmem>>, %arg3: memref<32x128xf32, #tpu.memory_space<vmem>>, %arg4: memref<32x128xbf16, #tpu.memory_space<vmem>>, %arg5: memref<32x128xf32, #tpu.memory_space<vmem>>, %arg6: memref<1x128xf32, #tpu.memory_space<vmem>>, %arg7: memref<80x32xf32, #tpu.memory_space<vmem>>, %arg8: memref<80x128xf32, #tpu.memory_space<vmem>>, %arg9: memref<80x32xf32, #tpu.memory_space<vmem>>) attributes {dimension_semantics = [#tpu.dimension_semantics<arbitrary>], iteration_bounds = array<i64: 1>, scalar_prefetch = 1 : i64, scratch_operands = 2 : i64, tpu.core_type = #tpu.core_type<tc>, window_params = [{pipeline_mode = #tpu.pipeline_mode<synchronous>, transform_indices = @transform_0, window_bounds = array<i64: 50, 128>}, {pipeline_mode = #tpu.pipeline_mode<synchronous>, transform_indices = @transform_1, window_bounds = array<i64: 32, 128>}, {pipeline_mode = #tpu.pipeline_mode<synchronous>, transform_indices = @transform_2, window_bounds = array<i64: 32, 128>}, {pipeline_mode = #tpu.pipeline_mode<synchronous>, transform_indices = @transform_3, window_bounds = array<i64: 32, 128>}, {pipeline_mode = #tpu.pipeline_mode<synchronous>, transform_indices = @transform_4, window_bounds = array<i64: 1, 128>}, {pipeline_mode = #tpu.pipeline_mode<synchronous>, transform_indices = @transform_5, window_bounds = array<i64: 80, 32>}]} {
    %c0 = arith.constant 0 : index
    %0 = memref.load %arg1[%c0] : memref<80xi32, #tpu.memory_space<smem>>
    %1 = arith.index_cast %0 : i32 to index
    %c0_0 = arith.constant 0 : index
    %2 = vector.load %arg2[%1, %c0_0] : memref<50x128xf32, #tpu.memory_space<vmem>>, vector<1x128xf32>
    %c0_1 = arith.constant 0 : index
    %c0_2 = arith.constant 0 : index
    %3 = vector.load %arg8[%c0_1, %c0_2] : memref<80x128xf32, #tpu.memory_space<vmem>>, vector<1x128xf32>
    tpu.vector_store %arg8[%c0_1, %c0_2], %2 {strides = array<i32>} : memref<80x128xf32, #tpu.memory_space<vmem>>, vector<1x128xf32>,
    %c1 = arith.constant 1 : index
    %4 = memref.load %arg1[%c1] : memref<80xi32, #tpu.memory_space<smem>>
    %5 = arith.index_cast %4 : i32 to index
    %c0_3 = arith.constant 0 : index
    %6 = vector.load %arg2[%5, %c0_3] : memref<50x128xf32, #tpu.memory_space<vmem>>, vector<1x128xf32>
    %c1_4 = arith.constant 1 : index
    %c0_5 = arith.constant 0 : index
    %7 = vector.load %arg8[%c1_4, %c0_5] : memref<80x128xf32, #tpu.memory_space<vmem>>, vector<1x128xf32>
    tpu.vector_store %arg8[%c1_4, %c0_5], %6 {strides = array<i32>} : memref<80x128xf32, #tpu.memory_space<vmem>>, vector<1x128xf32>,
    %c2 = arith.constant 2 : index
    %8 = memref.load %arg1[%c2] : memref<80xi32, #tpu.memory_space<smem>>
    %9 = arith.index_cast %8 : i32 to index
    %c0_6 = arith.constant 0 : index
    %10 = vector.load %arg2[%9, %c0_6] : memref<50x128xf32, #tpu.memory_space<vmem>>, vector<1x128xf32>
    %c2_7 = arith.constant 2 : index
    %c0_8 = arith.constant 0 : index
    %11 = vector.load %arg8[%c2_7, %c0_8] : memref<80x128xf32, #tpu.memory_space<vmem>>, vector<1x128xf32>
    tpu.vector_store %arg8[%c2_7, %c0_8], %10 {strides = array<i32>} : memref<80x128xf32, #tpu.memory_space<vmem>>, vector<1x128xf32>,
    %c3 = arith.constant 3 : index
    %12 = memref.load %arg1[%c3] : memref<80xi32, #tpu.memory_space<smem>>
    %13 = arith.index_cast %12 : i32 to index
    %c0_9 = arith.constant 0 : index
    %14 = vector.load %arg2[%13, %c0_9] : memref<50x128xf32, #tpu.memory_space<vmem>>, vector<1x128xf32>
    %c3_10 = arith.constant 3 : index
    %c0_11 = arith.constant 0 : index
    %15 = vector.load %arg8[%c3_10, %c0_11] : memref<80x128xf32, #tpu.memory_space<vmem>>, vector<1x128xf32>
    tpu.vector_store %arg8[%c3_10, %c0_11], %14 {strides = array<i32>} : memref<80x128xf32, #tpu.memory_space<vmem>>, vector<1x128xf32>,
    %c4 = arith.constant 4 : index
    %16 = memref.load %arg1[%c4] : memref<80xi32, #tpu.memory_space<smem>>
    %17 = arith.index_cast %16 : i32 to index
    %c0_12 = arith.constant 0 : index
    %18 = vector.load %arg2[%17, %c0_12] : memref<50x128xf32, #tpu.memory_space<vmem>>, vector<1x128xf32>
    %c4_13 = arith.constant 4 : index
    %c0_14 = arith.constant 0 : index
    %19 = vector.load %arg8[%c4_13, %c0_14] : memref<80x128xf32, #tpu.memory_space<vmem>>, vector<1x128xf32>
    tpu.vector_store %arg8[%c4_13, %c0_14], %18 {strides = array<i32>} : memref<80x128xf32, #tpu.memory_space<vmem>>, vector<1x128xf32>,
    %c5 = arith.constant 5 : index
    %20 = memref.load %arg1[%c5] : memref<80xi32, #tpu.memory_space<smem>>
    %21 = arith.index_cast %20 : i32 to index
    %c0_15 = arith.constant 0 : index
    %22 = vector.load %arg2[%21, %c0_15] : memref<50x128xf32, #tpu.memory_space<vmem>>, vector<1x128xf32>
    %c5_16 = arith.constant 5 : index
    %c0_17 = arith.constant 0 : index
    %23 = vector.load %arg8[%c5_16, %c0_17] : memref<80x128xf32, #tpu.memory_space<vmem>>, vector<1x128xf32>
    tpu.vector_store %arg8[%c5_16, %c0_17], %22 {strides = array<i32>} : memref<80x128xf32, #tpu.memory_space<vmem>>, vector<1x128xf32>,
    %c6 = arith.constant 6 : index
    %24 = memref.load %arg1[%c6] : memref<80xi32, #tpu.memory_space<smem>>
    %25 = arith.index_cast %24 : i32 to index
    %c0_18 = arith.constant 0 : index
    %26 = vector.load %arg2[%25, %c0_18] : memref<50x128xf32, #tpu.memory_space<vmem>>, vector<1x128xf32>
    %c6_19 = arith.constant 6 : index
    %c0_20 = arith.constant 0 : index
    %27 = vector.load %arg8[%c6_19, %c0_20] : memref<80x128xf32, #tpu.memory_space<vmem>>, vector<1x128xf32>
    tpu.vector_store %arg8[%c6_19, %c0_20], %26 {strides = array<i32>} : memref<80x128xf32, #tpu.memory_space<vmem>>, vector<1x128xf32>,
    %c7 = arith.constant 7 : index
    %28 = memref.load %arg1[%c7] : memref<80xi32, #tpu.memory_space<smem>>
    %29 = arith.index_cast %28 : i32 to index
    %c0_21 = arith.constant 0 : index
    %30 = vector.load %arg2[%29, %c0_21] : memref<50x128xf32, #tpu.memory_space<vmem>>, vector<1x128xf32>
    %c7_22 = arith.constant 7 : index
    %c0_23 = arith.constant 0 : index
    %31 = vector.load %arg8[%c7_22, %c0_23] : memref<80x128xf32, #tpu.memory_space<vmem>>, vector<1x128xf32>
    tpu.vector_store %arg8[%c7_22, %c0_23], %30 {strides = array<i32>} : memref<80x128xf32, #tpu.memory_space<vmem>>, vector<1x128xf32>,
    %c8 = arith.constant 8 : index
    %32 = memref.load %arg1[%c8] : memref<80xi32, #tpu.memory_space<smem>>
    %33 = arith.index_cast %32 : i32 to index
    %c0_24 = arith.constant 0 : index
    %34 = vector.load %arg2[%33, %c0_24] : memref<50x128xf32, #tpu.memory_space<vmem>>, vector<1x128xf32>
    %c8_25 = arith.constant 8 : index
    %c0_26 = arith.constant 0 : index
    %35 = vector.load %arg8[%c8_25, %c0_26] : memref<80x128xf32, #tpu.memory_space<vmem>>, vector<1x128xf32>
    tpu.vector_store %arg8[%c8_25, %c0_26], %34 {strides = array<i32>} : memref<80x128xf32, #tpu.memory_space<vmem>>, vector<1x128xf32>,
    %c9 = arith.constant 9 : index
    %36 = memref.load %arg1[%c9] : memref<80xi32, #tpu.memory_space<smem>>
    %37 = arith.index_cast %36 : i32 to index
    %c0_27 = arith.constant 0 : index
    %38 = vector.load %arg2[%37, %c0_27] : memref<50x128xf32, #tpu.memory_space<vmem>>, vector<1x128xf32>
    %c9_28 = arith.constant 9 : index
    %c0_29 = arith.constant 0 : index
    %39 = vector.load %arg8[%c9_28, %c0_29] : memref<80x128xf32, #tpu.memory_space<vmem>>, vector<1x128xf32>
    tpu.vector_store %arg8[%c9_28, %c0_29], %38 {strides = array<i32>} : memref<80x128xf32, #tpu.memory_space<vmem>>, vector<1x128xf32>,
    %c10 = arith.constant 10 : index
    %40 = memref.load %arg1[%c10] : memref<80xi32, #tpu.memory_space<smem>>
    %41 = arith.index_cast %40 : i32 to index
    %c0_30 = arith.constant 0 : index
    %42 = vector.load %arg2[%41, %c0_30] : memref<50x128xf32, #tpu.memory_space<vmem>>, vector<1x128xf32>
    %c10_31 = arith.constant 10 : index
    %c0_32 = arith.constant 0 : index
    %43 = vector.load %arg8[%c10_31, %c0_32] : memref<80x128xf32, #tpu.memory_space<vmem>>, vector<1x128xf32>
    tpu.vector_store %arg8[%c10_31, %c0_32], %42 {strides = array<i32>} : memref<80x128xf32, #tpu.memory_space<vmem>>, vector<1x128xf32>,
    %c11 = arith.constant 11 : index
    %44 = memref.load %arg1[%c11] : memref<80xi32, #tpu.memory_space<smem>>
    %45 = arith.index_cast %44 : i32 to index
    %c0_33 = arith.constant 0 : index
    %46 = vector.load %arg2[%45, %c0_33] : memref<50x128xf32, #tpu.memory_space<vmem>>, vector<1x128xf32>
    %c11_34 = arith.constant 11 : index
    %c0_35 = arith.constant 0 : index
    %47 = vector.load %arg8[%c11_34, %c0_35] : memref<80x128xf32, #tpu.memory_space<vmem>>, vector<1x128xf32>
    tpu.vector_store %arg8[%c11_34, %c0_35], %46 {strides = array<i32>} : memref<80x128xf32, #tpu.memory_space<vmem>>, vector<1x128xf32>,
    %c12 = arith.constant 12 : index
    %48 = memref.load %arg1[%c12] : memref<80xi32, #tpu.memory_space<smem>>
    %49 = arith.index_cast %48 : i32 to index
    %c0_36 = arith.constant 0 : index
    %50 = vector.load %arg2[%49, %c0_36] : memref<50x128xf32, #tpu.memory_space<vmem>>, vector<1x128xf32>
    %c12_37 = arith.constant 12 : index
    %c0_38 = arith.constant 0 : index
    %51 = vector.load %arg8[%c12_37, %c0_38] : memref<80x128xf32, #tpu.memory_space<vmem>>, vector<1x128xf32>
    tpu.vector_store %arg8[%c12_37, %c0_38], %50 {strides = array<i32>} : memref<80x128xf32, #tpu.memory_space<vmem>>, vector<1x128xf32>,
    %c13 = arith.constant 13 : index
    %52 = memref.load %arg1[%c13] : memref<80xi32, #tpu.memory_space<smem>>
    %53 = arith.index_cast %52 : i32 to index
    %c0_39 = arith.constant 0 : index
    %54 = vector.load %arg2[%53, %c0_39] : memref<50x128xf32, #tpu.memory_space<vmem>>, vector<1x128xf32>
    %c13_40 = arith.constant 13 : index
    %c0_41 = arith.constant 0 : index
    %55 = vector.load %arg8[%c13_40, %c0_41] : memref<80x128xf32, #tpu.memory_space<vmem>>, vector<1x128xf32>
    tpu.vector_store %arg8[%c13_40, %c0_41], %54 {strides = array<i32>} : memref<80x128xf32, #tpu.memory_space<vmem>>, vector<1x128xf32>,
    %c14 = arith.constant 14 : index
    %56 = memref.load %arg1[%c14] : memref<80xi32, #tpu.memory_space<smem>>
    %57 = arith.index_cast %56 : i32 to index
    %c0_42 = arith.constant 0 : index
    %58 = vector.load %arg2[%57, %c0_42] : memref<50x128xf32, #tpu.memory_space<vmem>>, vector<1x128xf32>
    %c14_43 = arith.constant 14 : index
    %c0_44 = arith.constant 0 : index
    %59 = vector.load %arg8[%c14_43, %c0_44] : memref<80x128xf32, #tpu.memory_space<vmem>>, vector<1x128xf32>
    tpu.vector_store %arg8[%c14_43, %c0_44], %58 {strides = array<i32>} : memref<80x128xf32, #tpu.memory_space<vmem>>, vector<1x128xf32>,
    %c15 = arith.constant 15 : index
    %60 = memref.load %arg1[%c15] : memref<80xi32, #tpu.memory_space<smem>>
    %61 = arith.index_cast %60 : i32 to index
    %c0_45 = arith.constant 0 : index
    %62 = vector.load %arg2[%61, %c0_45] : memref<50x128xf32, #tpu.memory_space<vmem>>, vector<1x128xf32>
    %c15_46 = arith.constant 15 : index
    %c0_47 = arith.constant 0 : index
    %63 = vector.load %arg8[%c15_46, %c0_47] : memref<80x128xf32, #tpu.memory_space<vmem>>, vector<1x128xf32>
    tpu.vector_store %arg8[%c15_46, %c0_47], %62 {strides = array<i32>} : memref<80x128xf32, #tpu.memory_space<vmem>>, vector<1x128xf32>,
    %c16 = arith.constant 16 : index
    %64 = memref.load %arg1[%c16] : memref<80xi32, #tpu.memory_space<smem>>
    %65 = arith.index_cast %64 : i32 to index
    %c0_48 = arith.constant 0 : index
    %66 = vector.load %arg2[%65, %c0_48] : memref<50x128xf32, #tpu.memory_space<vmem>>, vector<1x128xf32>
    %c16_49 = arith.constant 16 : index
    %c0_50 = arith.constant 0 : index
    %67 = vector.load %arg8[%c16_49, %c0_50] : memref<80x128xf32, #tpu.memory_space<vmem>>, vector<1x128xf32>
    tpu.vector_store %arg8[%c16_49, %c0_50], %66 {strides = array<i32>} : memref<80x128xf32, #tpu.memory_space<vmem>>, vector<1x128xf32>,
    %c17 = arith.constant 17 : index
    %68 = memref.load %arg1[%c17] : memref<80xi32, #tpu.memory_space<smem>>
    %69 = arith.index_cast %68 : i32 to index
    %c0_51 = arith.constant 0 : index
    %70 = vector.load %arg2[%69, %c0_51] : memref<50x128xf32, #tpu.memory_space<vmem>>, vector<1x128xf32>
    %c17_52 = arith.constant 17 : index
    %c0_53 = arith.constant 0 : index
    %71 = vector.load %arg8[%c17_52, %c0_53] : memref<80x128xf32, #tpu.memory_space<vmem>>, vector<1x128xf32>
    tpu.vector_store %arg8[%c17_52, %c0_53], %70 {strides = array<i32>} : memref<80x128xf32, #tpu.memory_space<vmem>>, vector<1x128xf32>,
    %c18 = arith.constant 18 : index
    %72 = memref.load %arg1[%c18] : memref<80xi32, #tpu.memory_space<smem>>
    %73 = arith.index_cast %72 : i32 to index
    %c0_54 = arith.constant 0 : index
    %74 = vector.load %arg2[%73, %c0_54] : memref<50x128xf32, #tpu.memory_space<vmem>>, vector<1x128xf32>
    %c18_55 = arith.constant 18 : index
    %c0_56 = arith.constant 0 : index
    %75 = vector.load %arg8[%c18_55, %c0_56] : memref<80x128xf32, #tpu.memory_space<vmem>>, vector<1x128xf32>
    tpu.vector_store %arg8[%c18_55, %c0_56], %74 {strides = array<i32>} : memref<80x128xf32, #tpu.memory_space<vmem>>, vector<1x128xf32>,
    %c19 = arith.constant 19 : index
    %76 = memref.load %arg1[%c19] : memref<80xi32, #tpu.memory_space<smem>>
    %77 = arith.index_cast %76 : i32 to index
    %c0_57 = arith.constant 0 : index
    %78 = vector.load %arg2[%77, %c0_57] : memref<50x128xf32, #tpu.memory_space<vmem>>, vector<1x128xf32>
    %c19_58 = arith.constant 19 : index
    %c0_59 = arith.constant 0 : index
    %79 = vector.load %arg8[%c19_58, %c0_59] : memref<80x128xf32, #tpu.memory_space<vmem>>, vector<1x128xf32>
    tpu.vector_store %arg8[%c19_58, %c0_59], %78 {strides = array<i32>} : memref<80x128xf32, #tpu.memory_space<vmem>>, vector<1x128xf32>,
    %c20 = arith.constant 20 : index
    %80 = memref.load %arg1[%c20] : memref<80xi32, #tpu.memory_space<smem>>
    %81 = arith.index_cast %80 : i32 to index
    %c0_60 = arith.constant 0 : index
    %82 = vector.load %arg2[%81, %c0_60] : memref<50x128xf32, #tpu.memory_space<vmem>>, vector<1x128xf32>
    %c20_61 = arith.constant 20 : index
    %c0_62 = arith.constant 0 : index
    %83 = vector.load %arg8[%c20_61, %c0_62] : memref<80x128xf32, #tpu.memory_space<vmem>>, vector<1x128xf32>
    tpu.vector_store %arg8[%c20_61, %c0_62], %82 {strides = array<i32>} : memref<80x128xf32, #tpu.memory_space<vmem>>, vector<1x128xf32>,
    %c21 = arith.constant 21 : index
    %84 = memref.load %arg1[%c21] : memref<80xi32, #tpu.memory_space<smem>>
    %85 = arith.index_cast %84 : i32 to index
    %c0_63 = arith.constant 0 : index
    %86 = vector.load %arg2[%85, %c0_63] : memref<50x128xf32, #tpu.memory_space<vmem>>, vector<1x128xf32>
    %c21_64 = arith.constant 21 : index
    %c0_65 = arith.constant 0 : index
    %87 = vector.load %arg8[%c21_64, %c0_65] : memref<80x128xf32, #tpu.memory_space<vmem>>, vector<1x128xf32>
    tpu.vector_store %arg8[%c21_64, %c0_65], %86 {strides = array<i32>} : memref<80x128xf32, #tpu.memory_space<vmem>>, vector<1x128xf32>,
    %c22 = arith.constant 22 : index
    %88 = memref.load %arg1[%c22] : memref<80xi32, #tpu.memory_space<smem>>
    %89 = arith.index_cast %88 : i32 to index
    %c0_66 = arith.constant 0 : index
    %90 = vector.load %arg2[%89, %c0_66] : memref<50x128xf32, #tpu.memory_space<vmem>>, vector<1x128xf32>
    %c22_67 = arith.constant 22 : index
    %c0_68 = arith.constant 0 : index
    %91 = vector.load %arg8[%c22_67, %c0_68] : memref<80x128xf32, #tpu.memory_space<vmem>>, vector<1x128xf32>
    tpu.vector_store %arg8[%c22_67, %c0_68], %90 {strides = array<i32>} : memref<80x128xf32, #tpu.memory_space<vmem>>, vector<1x128xf32>,
    %c23 = arith.constant 23 : index
    %92 = memref.load %arg1[%c23] : memref<80xi32, #tpu.memory_space<smem>>
    %93 = arith.index_cast %92 : i32 to index
    %c0_69 = arith.constant 0 : index
    %94 = vector.load %arg2[%93, %c0_69] : memref<50x128xf32, #tpu.memory_space<vmem>>, vector<1x128xf32>
    %c23_70 = arith.constant 23 : index
    %c0_71 = arith.constant 0 : index
    %95 = vector.load %arg8[%c23_70, %c0_71] : memref<80x128xf32, #tpu.memory_space<vmem>>, vector<1x128xf32>
    tpu.vector_store %arg8[%c23_70, %c0_71], %94 {strides = array<i32>} : memref<80x128xf32, #tpu.memory_space<vmem>>, vector<1x128xf32>,
    %c24 = arith.constant 24 : index
    %96 = memref.load %arg1[%c24] : memref<80xi32, #tpu.memory_space<smem>>
    %97 = arith.index_cast %96 : i32 to index
    %c0_72 = arith.constant 0 : index
    %98 = vector.load %arg2[%97, %c0_72] : memref<50x128xf32, #tpu.memory_space<vmem>>, vector<1x128xf32>
    %c24_73 = arith.constant 24 : index
    %c0_74 = arith.constant 0 : index
    %99 = vector.load %arg8[%c24_73, %c0_74] : memref<80x128xf32, #tpu.memory_space<vmem>>, vector<1x128xf32>
    tpu.vector_store %arg8[%c24_73, %c0_74], %98 {strides = array<i32>} : memref<80x128xf32, #tpu.memory_space<vmem>>, vector<1x128xf32>,
    %c25 = arith.constant 25 : index
    %100 = memref.load %arg1[%c25] : memref<80xi32, #tpu.memory_space<smem>>
    %101 = arith.index_cast %100 : i32 to index
    %c0_75 = arith.constant 0 : index
    %102 = vector.load %arg2[%101, %c0_75] : memref<50x128xf32, #tpu.memory_space<vmem>>, vector<1x128xf32>
    %c25_76 = arith.constant 25 : index
    %c0_77 = arith.constant 0 : index
    %103 = vector.load %arg8[%c25_76, %c0_77] : memref<80x128xf32, #tpu.memory_space<vmem>>, vector<1x128xf32>
    tpu.vector_store %arg8[%c25_76, %c0_77], %102 {strides = array<i32>} : memref<80x128xf32, #tpu.memory_space<vmem>>, vector<1x128xf32>,
    %c26 = arith.constant 26 : index
    %104 = memref.load %arg1[%c26] : memref<80xi32, #tpu.memory_space<smem>>
    %105 = arith.index_cast %104 : i32 to index
    %c0_78 = arith.constant 0 : index
    %106 = vector.load %arg2[%105, %c0_78] : memref<50x128xf32, #tpu.memory_space<vmem>>, vector<1x128xf32>
    %c26_79 = arith.constant 26 : index
    %c0_80 = arith.constant 0 : index
    %107 = vector.load %arg8[%c26_79, %c0_80] : memref<80x128xf32, #tpu.memory_space<vmem>>, vector<1x128xf32>
    tpu.vector_store %arg8[%c26_79, %c0_80], %106 {strides = array<i32>} : memref<80x128xf32, #tpu.memory_space<vmem>>, vector<1x128xf32>,
    %c27 = arith.constant 27 : index
    %108 = memref.load %arg1[%c27] : memref<80xi32, #tpu.memory_space<smem>>
    %109 = arith.index_cast %108 : i32 to index
    %c0_81 = arith.constant 0 : index
    %110 = vector.load %arg2[%109, %c0_81] : memref<50x128xf32, #tpu.memory_space<vmem>>, vector<1x128xf32>
    %c27_82 = arith.constant 27 : index
    %c0_83 = arith.constant 0 : index
    %111 = vector.load %arg8[%c27_82, %c0_83] : memref<80x128xf32, #tpu.memory_space<vmem>>, vector<1x128xf32>
    tpu.vector_store %arg8[%c27_82, %c0_83], %110 {strides = array<i32>} : memref<80x128xf32, #tpu.memory_space<vmem>>, vector<1x128xf32>,
    %c28 = arith.constant 28 : index
    %112 = memref.load %arg1[%c28] : memref<80xi32, #tpu.memory_space<smem>>
    %113 = arith.index_cast %112 : i32 to index
    %c0_84 = arith.constant 0 : index
    %114 = vector.load %arg2[%113, %c0_84] : memref<50x128xf32, #tpu.memory_space<vmem>>, vector<1x128xf32>
    %c28_85 = arith.constant 28 : index
    %c0_86 = arith.constant 0 : index
    %115 = vector.load %arg8[%c28_85, %c0_86] : memref<80x128xf32, #tpu.memory_space<vmem>>, vector<1x128xf32>
    tpu.vector_store %arg8[%c28_85, %c0_86], %114 {strides = array<i32>} : memref<80x128xf32, #tpu.memory_space<vmem>>, vector<1x128xf32>,
    %c29 = arith.constant 29 : index
    %116 = memref.load %arg1[%c29] : memref<80xi32, #tpu.memory_space<smem>>
    %117 = arith.index_cast %116 : i32 to index
    %c0_87 = arith.constant 0 : index
    %118 = vector.load %arg2[%117, %c0_87] : memref<50x128xf32, #tpu.memory_space<vmem>>, vector<1x128xf32>
    %c29_88 = arith.constant 29 : index
    %c0_89 = arith.constant 0 : index
    %119 = vector.load %arg8[%c29_88, %c0_89] : memref<80x128xf32, #tpu.memory_space<vmem>>, vector<1x128xf32>
    tpu.vector_store %arg8[%c29_88, %c0_89], %118 {strides = array<i32>} : memref<80x128xf32, #tpu.memory_space<vmem>>, vector<1x128xf32>,
    %c30 = arith.constant 30 : index
    %120 = memref.load %arg1[%c30] : memref<80xi32, #tpu.memory_space<smem>>
    %121 = arith.index_cast %120 : i32 to index
    %c0_90 = arith.constant 0 : index
    %122 = vector.load %arg2[%121, %c0_90] : memref<50x128xf32, #tpu.memory_space<vmem>>, vector<1x128xf32>
    %c30_91 = arith.constant 30 : index
    %c0_92 = arith.constant 0 : index
    %123 = vector.load %arg8[%c30_91, %c0_92] : memref<80x128xf32, #tpu.memory_space<vmem>>, vector<1x128xf32>
    tpu.vector_store %arg8[%c30_91, %c0_92], %122 {strides = array<i32>} : memref<80x128xf32, #tpu.memory_space<vmem>>, vector<1x128xf32>,
    %c31 = arith.constant 31 : index
    %124 = memref.load %arg1[%c31] : memref<80xi32, #tpu.memory_space<smem>>
    %125 = arith.index_cast %124 : i32 to index
    %c0_93 = arith.constant 0 : index
    %126 = vector.load %arg2[%125, %c0_93] : memref<50x128xf32, #tpu.memory_space<vmem>>, vector<1x128xf32>
    %c31_94 = arith.constant 31 : index
    %c0_95 = arith.constant 0 : index
    %127 = vector.load %arg8[%c31_94, %c0_95] : memref<80x128xf32, #tpu.memory_space<vmem>>, vector<1x128xf32>
    tpu.vector_store %arg8[%c31_94, %c0_95], %126 {strides = array<i32>} : memref<80x128xf32, #tpu.memory_space<vmem>>, vector<1x128xf32>,
    %c32 = arith.constant 32 : index
    %128 = memref.load %arg1[%c32] : memref<80xi32, #tpu.memory_space<smem>>
    %129 = arith.index_cast %128 : i32 to index
    %c0_96 = arith.constant 0 : index
    %130 = vector.load %arg2[%129, %c0_96] : memref<50x128xf32, #tpu.memory_space<vmem>>, vector<1x128xf32>
    %c32_97 = arith.constant 32 : index
    %c0_98 = arith.constant 0 : index
    %131 = vector.load %arg8[%c32_97, %c0_98] : memref<80x128xf32, #tpu.memory_space<vmem>>, vector<1x128xf32>
    tpu.vector_store %arg8[%c32_97, %c0_98], %130 {strides = array<i32>} : memref<80x128xf32, #tpu.memory_space<vmem>>, vector<1x128xf32>,
    %c33 = arith.constant 33 : index
    %132 = memref.load %arg1[%c33] : memref<80xi32, #tpu.memory_space<smem>>
    %133 = arith.index_cast %132 : i32 to index
    %c0_99 = arith.constant 0 : index
    %134 = vector.load %arg2[%133, %c0_99] : memref<50x128xf32, #tpu.memory_space<vmem>>, vector<1x128xf32>
    %c33_100 = arith.constant 33 : index
    %c0_101 = arith.constant 0 : index
    %135 = vector.load %arg8[%c33_100, %c0_101] : memref<80x128xf32, #tpu.memory_space<vmem>>, vector<1x128xf32>
    tpu.vector_store %arg8[%c33_100, %c0_101], %134 {strides = array<i32>} : memref<80x128xf32, #tpu.memory_space<vmem>>, vector<1x128xf32>,
    %c34 = arith.constant 34 : index
    %136 = memref.load %arg1[%c34] : memref<80xi32, #tpu.memory_space<smem>>
    %137 = arith.index_cast %136 : i32 to index
    %c0_102 = arith.constant 0 : index
    %138 = vector.load %arg2[%137, %c0_102] : memref<50x128xf32, #tpu.memory_space<vmem>>, vector<1x128xf32>
    %c34_103 = arith.constant 34 : index
    %c0_104 = arith.constant 0 : index
    %139 = vector.load %arg8[%c34_103, %c0_104] : memref<80x128xf32, #tpu.memory_space<vmem>>, vector<1x128xf32>
    tpu.vector_store %arg8[%c34_103, %c0_104], %138 {strides = array<i32>} : memref<80x128xf32, #tpu.memory_space<vmem>>, vector<1x128xf32>,
    %c35 = arith.constant 35 : index
    %140 = memref.load %arg1[%c35] : memref<80xi32, #tpu.memory_space<smem>>
    %141 = arith.index_cast %140 : i32 to index
    %c0_105 = arith.constant 0 : index
    %142 = vector.load %arg2[%141, %c0_105] : memref<50x128xf32, #tpu.memory_space<vmem>>, vector<1x128xf32>
    %c35_106 = arith.constant 35 : index
    %c0_107 = arith.constant 0 : index
    %143 = vector.load %arg8[%c35_106, %c0_107] : memref<80x128xf32, #tpu.memory_space<vmem>>, vector<1x128xf32>
    tpu.vector_store %arg8[%c35_106, %c0_107], %142 {strides = array<i32>} : memref<80x128xf32, #tpu.memory_space<vmem>>, vector<1x128xf32>,
    %c36 = arith.constant 36 : index
    %144 = memref.load %arg1[%c36] : memref<80xi32, #tpu.memory_space<smem>>
    %145 = arith.index_cast %144 : i32 to index
    %c0_108 = arith.constant 0 : index
    %146 = vector.load %arg2[%145, %c0_108] : memref<50x128xf32, #tpu.memory_space<vmem>>, vector<1x128xf32>
    %c36_109 = arith.constant 36 : index
    %c0_110 = arith.constant 0 : index
    %147 = vector.load %arg8[%c36_109, %c0_110] : memref<80x128xf32, #tpu.memory_space<vmem>>, vector<1x128xf32>
    tpu.vector_store %arg8[%c36_109, %c0_110], %146 {strides = array<i32>} : memref<80x128xf32, #tpu.memory_space<vmem>>, vector<1x128xf32>,
    %c37 = arith.constant 37 : index
    %148 = memref.load %arg1[%c37] : memref<80xi32, #tpu.memory_space<smem>>
    %149 = arith.index_cast %148 : i32 to index
    %c0_111 = arith.constant 0 : index
    %150 = vector.load %arg2[%149, %c0_111] : memref<50x128xf32, #tpu.memory_space<vmem>>, vector<1x128xf32>
    %c37_112 = arith.constant 37 : index
    %c0_113 = arith.constant 0 : index
    %151 = vector.load %arg8[%c37_112, %c0_113] : memref<80x128xf32, #tpu.memory_space<vmem>>, vector<1x128xf32>
    tpu.vector_store %arg8[%c37_112, %c0_113], %150 {strides = array<i32>} : memref<80x128xf32, #tpu.memory_space<vmem>>, vector<1x128xf32>,
    %c38 = arith.constant 38 : index
    %152 = memref.load %arg1[%c38] : memref<80xi32, #tpu.memory_space<smem>>
    %153 = arith.index_cast %152 : i32 to index
    %c0_114 = arith.constant 0 : index
    %154 = vector.load %arg2[%153, %c0_114] : memref<50x128xf32, #tpu.memory_space<vmem>>, vector<1x128xf32>
    %c38_115 = arith.constant 38 : index
    %c0_116 = arith.constant 0 : index
    %155 = vector.load %arg8[%c38_115, %c0_116] : memref<80x128xf32, #tpu.memory_space<vmem>>, vector<1x128xf32>
    tpu.vector_store %arg8[%c38_115, %c0_116], %154 {strides = array<i32>} : memref<80x128xf32, #tpu.memory_space<vmem>>, vector<1x128xf32>,
    %c39 = arith.constant 39 : index
    %156 = memref.load %arg1[%c39] : memref<80xi32, #tpu.memory_space<smem>>
    %157 = arith.index_cast %156 : i32 to index
    %c0_117 = arith.constant 0 : index
    %158 = vector.load %arg2[%157, %c0_117] : memref<50x128xf32, #tpu.memory_space<vmem>>, vector<1x128xf32>
    %c39_118 = arith.constant 39 : index
    %c0_119 = arith.constant 0 : index
    %159 = vector.load %arg8[%c39_118, %c0_119] : memref<80x128xf32, #tpu.memory_space<vmem>>, vector<1x128xf32>
    tpu.vector_store %arg8[%c39_118, %c0_119], %158 {strides = array<i32>} : memref<80x128xf32, #tpu.memory_space<vmem>>, vector<1x128xf32>,
    %c40 = arith.constant 40 : index
    %160 = memref.load %arg1[%c40] : memref<80xi32, #tpu.memory_space<smem>>
    %161 = arith.index_cast %160 : i32 to index
    %c0_120 = arith.constant 0 : index
    %162 = vector.load %arg2[%161, %c0_120] : memref<50x128xf32, #tpu.memory_space<vmem>>, vector<1x128xf32>
    %c40_121 = arith.constant 40 : index
    %c0_122 = arith.constant 0 : index
    %163 = vector.load %arg8[%c40_121, %c0_122] : memref<80x128xf32, #tpu.memory_space<vmem>>, vector<1x128xf32>
    tpu.vector_store %arg8[%c40_121, %c0_122], %162 {strides = array<i32>} : memref<80x128xf32, #tpu.memory_space<vmem>>, vector<1x128xf32>,
    %c41 = arith.constant 41 : index
    %164 = memref.load %arg1[%c41] : memref<80xi32, #tpu.memory_space<smem>>
    %165 = arith.index_cast %164 : i32 to index
    %c0_123 = arith.constant 0 : index
    %166 = vector.load %arg2[%165, %c0_123] : memref<50x128xf32, #tpu.memory_space<vmem>>, vector<1x128xf32>
    %c41_124 = arith.constant 41 : index
    %c0_125 = arith.constant 0 : index
    %167 = vector.load %arg8[%c41_124, %c0_125] : memref<80x128xf32, #tpu.memory_space<vmem>>, vector<1x128xf32>
    tpu.vector_store %arg8[%c41_124, %c0_125], %166 {strides = array<i32>} : memref<80x128xf32, #tpu.memory_space<vmem>>, vector<1x128xf32>,
    %c42 = arith.constant 42 : index
    %168 = memref.load %arg1[%c42] : memref<80xi32, #tpu.memory_space<smem>>
    %169 = arith.index_cast %168 : i32 to index
    %c0_126 = arith.constant 0 : index
    %170 = vector.load %arg2[%169, %c0_126] : memref<50x128xf32, #tpu.memory_space<vmem>>, vector<1x128xf32>
    %c42_127 = arith.constant 42 : index
    %c0_128 = arith.constant 0 : index
    %171 = vector.load %arg8[%c42_127, %c0_128] : memref<80x128xf32, #tpu.memory_space<vmem>>, vector<1x128xf32>
    tpu.vector_store %arg8[%c42_127, %c0_128], %170 {strides = array<i32>} : memref<80x128xf32, #tpu.memory_space<vmem>>, vector<1x128xf32>,
    %c43 = arith.constant 43 : index
    %172 = memref.load %arg1[%c43] : memref<80xi32, #tpu.memory_space<smem>>
    %173 = arith.index_cast %172 : i32 to index
    %c0_129 = arith.constant 0 : index
    %174 = vector.load %arg2[%173, %c0_129] : memref<50x128xf32, #tpu.memory_space<vmem>>, vector<1x128xf32>
    %c43_130 = arith.constant 43 : index
    %c0_131 = arith.constant 0 : index
    %175 = vector.load %arg8[%c43_130, %c0_131] : memref<80x128xf32, #tpu.memory_space<vmem>>, vector<1x128xf32>
    tpu.vector_store %arg8[%c43_130, %c0_131], %174 {strides = array<i32>} : memref<80x128xf32, #tpu.memory_space<vmem>>, vector<1x128xf32>,
    %c44 = arith.constant 44 : index
    %176 = memref.load %arg1[%c44] : memref<80xi32, #tpu.memory_space<smem>>
    %177 = arith.index_cast %176 : i32 to index
    %c0_132 = arith.constant 0 : index
    %178 = vector.load %arg2[%177, %c0_132] : memref<50x128xf32, #tpu.memory_space<vmem>>, vector<1x128xf32>
    %c44_133 = arith.constant 44 : index
    %c0_134 = arith.constant 0 : index
    %179 = vector.load %arg8[%c44_133, %c0_134] : memref<80x128xf32, #tpu.memory_space<vmem>>, vector<1x128xf32>
    tpu.vector_store %arg8[%c44_133, %c0_134], %178 {strides = array<i32>} : memref<80x128xf32, #tpu.memory_space<vmem>>, vector<1x128xf32>,
    %c45 = arith.constant 45 : index
    %180 = memref.load %arg1[%c45] : memref<80xi32, #tpu.memory_space<smem>>
    %181 = arith.index_cast %180 : i32 to index
    %c0_135 = arith.constant 0 : index
    %182 = vector.load %arg2[%181, %c0_135] : memref<50x128xf32, #tpu.memory_space<vmem>>, vector<1x128xf32>
    %c45_136 = arith.constant 45 : index
    %c0_137 = arith.constant 0 : index
    %183 = vector.load %arg8[%c45_136, %c0_137] : memref<80x128xf32, #tpu.memory_space<vmem>>, vector<1x128xf32>
    tpu.vector_store %arg8[%c45_136, %c0_137], %182 {strides = array<i32>} : memref<80x128xf32, #tpu.memory_space<vmem>>, vector<1x128xf32>,
    %c46 = arith.constant 46 : index
    %184 = memref.load %arg1[%c46] : memref<80xi32, #tpu.memory_space<smem>>
    %185 = arith.index_cast %184 : i32 to index
    %c0_138 = arith.constant 0 : index
    %186 = vector.load %arg2[%185, %c0_138] : memref<50x128xf32, #tpu.memory_space<vmem>>, vector<1x128xf32>
    %c46_139 = arith.constant 46 : index
    %c0_140 = arith.constant 0 : index
    %187 = vector.load %arg8[%c46_139, %c0_140] : memref<80x128xf32, #tpu.memory_space<vmem>>, vector<1x128xf32>
    tpu.vector_store %arg8[%c46_139, %c0_140], %186 {strides = array<i32>} : memref<80x128xf32, #tpu.memory_space<vmem>>, vector<1x128xf32>,
    %c47 = arith.constant 47 : index
    %188 = memref.load %arg1[%c47] : memref<80xi32, #tpu.memory_space<smem>>
    %189 = arith.index_cast %188 : i32 to index
    %c0_141 = arith.constant 0 : index
    %190 = vector.load %arg2[%189, %c0_141] : memref<50x128xf32, #tpu.memory_space<vmem>>, vector<1x128xf32>
    %c47_142 = arith.constant 47 : index
    %c0_143 = arith.constant 0 : index
    %191 = vector.load %arg8[%c47_142, %c0_143] : memref<80x128xf32, #tpu.memory_space<vmem>>, vector<1x128xf32>
    tpu.vector_store %arg8[%c47_142, %c0_143], %190 {strides = array<i32>} : memref<80x128xf32, #tpu.memory_space<vmem>>, vector<1x128xf32>,
    %c48 = arith.constant 48 : index
    %192 = memref.load %arg1[%c48] : memref<80xi32, #tpu.memory_space<smem>>
    %193 = arith.index_cast %192 : i32 to index
    %c0_144 = arith.constant 0 : index
    %194 = vector.load %arg2[%193, %c0_144] : memref<50x128xf32, #tpu.memory_space<vmem>>, vector<1x128xf32>
    %c48_145 = arith.constant 48 : index
    %c0_146 = arith.constant 0 : index
    %195 = vector.load %arg8[%c48_145, %c0_146] : memref<80x128xf32, #tpu.memory_space<vmem>>, vector<1x128xf32>
    tpu.vector_store %arg8[%c48_145, %c0_146], %194 {strides = array<i32>} : memref<80x128xf32, #tpu.memory_space<vmem>>, vector<1x128xf32>,
    %c49 = arith.constant 49 : index
    %196 = memref.load %arg1[%c49] : memref<80xi32, #tpu.memory_space<smem>>
    %197 = arith.index_cast %196 : i32 to index
    %c0_147 = arith.constant 0 : index
    %198 = vector.load %arg2[%197, %c0_147] : memref<50x128xf32, #tpu.memory_space<vmem>>, vector<1x128xf32>
    %c49_148 = arith.constant 49 : index
    %c0_149 = arith.constant 0 : index
    %199 = vector.load %arg8[%c49_148, %c0_149] : memref<80x128xf32, #tpu.memory_space<vmem>>, vector<1x128xf32>
    tpu.vector_store %arg8[%c49_148, %c0_149], %198 {strides = array<i32>} : memref<80x128xf32, #tpu.memory_space<vmem>>, vector<1x128xf32>,
    %c50 = arith.constant 50 : index
    %200 = memref.load %arg1[%c50] : memref<80xi32, #tpu.memory_space<smem>>
    %201 = arith.index_cast %200 : i32 to index
    %c0_150 = arith.constant 0 : index
    %202 = vector.load %arg2[%201, %c0_150] : memref<50x128xf32, #tpu.memory_space<vmem>>, vector<1x128xf32>
    %c50_151 = arith.constant 50 : index
    %c0_152 = arith.constant 0 : index
    %203 = vector.load %arg8[%c50_151, %c0_152] : memref<80x128xf32, #tpu.memory_space<vmem>>, vector<1x128xf32>
    tpu.vector_store %arg8[%c50_151, %c0_152], %202 {strides = array<i32>} : memref<80x128xf32, #tpu.memory_space<vmem>>, vector<1x128xf32>,
    %c51 = arith.constant 51 : index
    %204 = memref.load %arg1[%c51] : memref<80xi32, #tpu.memory_space<smem>>
    %205 = arith.index_cast %204 : i32 to index
    %c0_153 = arith.constant 0 : index
    %206 = vector.load %arg2[%205, %c0_153] : memref<50x128xf32, #tpu.memory_space<vmem>>, vector<1x128xf32>
    %c51_154 = arith.constant 51 : index
    %c0_155 = arith.constant 0 : index
    %207 = vector.load %arg8[%c51_154, %c0_155] : memref<80x128xf32, #tpu.memory_space<vmem>>, vector<1x128xf32>
    tpu.vector_store %arg8[%c51_154, %c0_155], %206 {strides = array<i32>} : memref<80x128xf32, #tpu.memory_space<vmem>>, vector<1x128xf32>,
    %c52 = arith.constant 52 : index
    %208 = memref.load %arg1[%c52] : memref<80xi32, #tpu.memory_space<smem>>
    %209 = arith.index_cast %208 : i32 to index
    %c0_156 = arith.constant 0 : index
    %210 = vector.load %arg2[%209, %c0_156] : memref<50x128xf32, #tpu.memory_space<vmem>>, vector<1x128xf32>
    %c52_157 = arith.constant 52 : index
    %c0_158 = arith.constant 0 : index
    %211 = vector.load %arg8[%c52_157, %c0_158] : memref<80x128xf32, #tpu.memory_space<vmem>>, vector<1x128xf32>
    tpu.vector_store %arg8[%c52_157, %c0_158], %210 {strides = array<i32>} : memref<80x128xf32, #tpu.memory_space<vmem>>, vector<1x128xf32>,
    %c53 = arith.constant 53 : index
    %212 = memref.load %arg1[%c53] : memref<80xi32, #tpu.memory_space<smem>>
    %213 = arith.index_cast %212 : i32 to index
    %c0_159 = arith.constant 0 : index
    %214 = vector.load %arg2[%213, %c0_159] : memref<50x128xf32, #tpu.memory_space<vmem>>, vector<1x128xf32>
    %c53_160 = arith.constant 53 : index
    %c0_161 = arith.constant 0 : index
    %215 = vector.load %arg8[%c53_160, %c0_161] : memref<80x128xf32, #tpu.memory_space<vmem>>, vector<1x128xf32>
    tpu.vector_store %arg8[%c53_160, %c0_161], %214 {strides = array<i32>} : memref<80x128xf32, #tpu.memory_space<vmem>>, vector<1x128xf32>,
    %c54 = arith.constant 54 : index
    %216 = memref.load %arg1[%c54] : memref<80xi32, #tpu.memory_space<smem>>
    %217 = arith.index_cast %216 : i32 to index
    %c0_162 = arith.constant 0 : index
    %218 = vector.load %arg2[%217, %c0_162] : memref<50x128xf32, #tpu.memory_space<vmem>>, vector<1x128xf32>
    %c54_163 = arith.constant 54 : index
    %c0_164 = arith.constant 0 : index
    %219 = vector.load %arg8[%c54_163, %c0_164] : memref<80x128xf32, #tpu.memory_space<vmem>>, vector<1x128xf32>
    tpu.vector_store %arg8[%c54_163, %c0_164], %218 {strides = array<i32>} : memref<80x128xf32, #tpu.memory_space<vmem>>, vector<1x128xf32>,
    %c55 = arith.constant 55 : index
    %220 = memref.load %arg1[%c55] : memref<80xi32, #tpu.memory_space<smem>>
    %221 = arith.index_cast %220 : i32 to index
    %c0_165 = arith.constant 0 : index
    %222 = vector.load %arg2[%221, %c0_165] : memref<50x128xf32, #tpu.memory_space<vmem>>, vector<1x128xf32>
    %c55_166 = arith.constant 55 : index
    %c0_167 = arith.constant 0 : index
    %223 = vector.load %arg8[%c55_166, %c0_167] : memref<80x128xf32, #tpu.memory_space<vmem>>, vector<1x128xf32>
    tpu.vector_store %arg8[%c55_166, %c0_167], %222 {strides = array<i32>} : memref<80x128xf32, #tpu.memory_space<vmem>>, vector<1x128xf32>,
    %c56 = arith.constant 56 : index
    %224 = memref.load %arg1[%c56] : memref<80xi32, #tpu.memory_space<smem>>
    %225 = arith.index_cast %224 : i32 to index
    %c0_168 = arith.constant 0 : index
    %226 = vector.load %arg2[%225, %c0_168] : memref<50x128xf32, #tpu.memory_space<vmem>>, vector<1x128xf32>
    %c56_169 = arith.constant 56 : index
    %c0_170 = arith.constant 0 : index
    %227 = vector.load %arg8[%c56_169, %c0_170] : memref<80x128xf32, #tpu.memory_space<vmem>>, vector<1x128xf32>
    tpu.vector_store %arg8[%c56_169, %c0_170], %226 {strides = array<i32>} : memref<80x128xf32, #tpu.memory_space<vmem>>, vector<1x128xf32>,
    %c57 = arith.constant 57 : index
    %228 = memref.load %arg1[%c57] : memref<80xi32, #tpu.memory_space<smem>>
    %229 = arith.index_cast %228 : i32 to index
    %c0_171 = arith.constant 0 : index
    %230 = vector.load %arg2[%229, %c0_171] : memref<50x128xf32, #tpu.memory_space<vmem>>, vector<1x128xf32>
    %c57_172 = arith.constant 57 : index
    %c0_173 = arith.constant 0 : index
    %231 = vector.load %arg8[%c57_172, %c0_173] : memref<80x128xf32, #tpu.memory_space<vmem>>, vector<1x128xf32>
    tpu.vector_store %arg8[%c57_172, %c0_173], %230 {strides = array<i32>} : memref<80x128xf32, #tpu.memory_space<vmem>>, vector<1x128xf32>,
    %c58 = arith.constant 58 : index
    %232 = memref.load %arg1[%c58] : memref<80xi32, #tpu.memory_space<smem>>
    %233 = arith.index_cast %232 : i32 to index
    %c0_174 = arith.constant 0 : index
    %234 = vector.load %arg2[%233, %c0_174] : memref<50x128xf32, #tpu.memory_space<vmem>>, vector<1x128xf32>
    %c58_175 = arith.constant 58 : index
    %c0_176 = arith.constant 0 : index
    %235 = vector.load %arg8[%c58_175, %c0_176] : memref<80x128xf32, #tpu.memory_space<vmem>>, vector<1x128xf32>
    tpu.vector_store %arg8[%c58_175, %c0_176], %234 {strides = array<i32>} : memref<80x128xf32, #tpu.memory_space<vmem>>, vector<1x128xf32>,
    %c59 = arith.constant 59 : index
    %236 = memref.load %arg1[%c59] : memref<80xi32, #tpu.memory_space<smem>>
    %237 = arith.index_cast %236 : i32 to index
    %c0_177 = arith.constant 0 : index
    %238 = vector.load %arg2[%237, %c0_177] : memref<50x128xf32, #tpu.memory_space<vmem>>, vector<1x128xf32>
    %c59_178 = arith.constant 59 : index
    %c0_179 = arith.constant 0 : index
    %239 = vector.load %arg8[%c59_178, %c0_179] : memref<80x128xf32, #tpu.memory_space<vmem>>, vector<1x128xf32>
    tpu.vector_store %arg8[%c59_178, %c0_179], %238 {strides = array<i32>} : memref<80x128xf32, #tpu.memory_space<vmem>>, vector<1x128xf32>,
    %c60 = arith.constant 60 : index
    %240 = memref.load %arg1[%c60] : memref<80xi32, #tpu.memory_space<smem>>
    %241 = arith.index_cast %240 : i32 to index
    %c0_180 = arith.constant 0 : index
    %242 = vector.load %arg2[%241, %c0_180] : memref<50x128xf32, #tpu.memory_space<vmem>>, vector<1x128xf32>
    %c60_181 = arith.constant 60 : index
    %c0_182 = arith.constant 0 : index
    %243 = vector.load %arg8[%c60_181, %c0_182] : memref<80x128xf32, #tpu.memory_space<vmem>>, vector<1x128xf32>
    tpu.vector_store %arg8[%c60_181, %c0_182], %242 {strides = array<i32>} : memref<80x128xf32, #tpu.memory_space<vmem>>, vector<1x128xf32>,
    %c61 = arith.constant 61 : index
    %244 = memref.load %arg1[%c61] : memref<80xi32, #tpu.memory_space<smem>>
    %245 = arith.index_cast %244 : i32 to index
    %c0_183 = arith.constant 0 : index
    %246 = vector.load %arg2[%245, %c0_183] : memref<50x128xf32, #tpu.memory_space<vmem>>, vector<1x128xf32>
    %c61_184 = arith.constant 61 : index
    %c0_185 = arith.constant 0 : index
    %247 = vector.load %arg8[%c61_184, %c0_185] : memref<80x128xf32, #tpu.memory_space<vmem>>, vector<1x128xf32>
    tpu.vector_store %arg8[%c61_184, %c0_185], %246 {strides = array<i32>} : memref<80x128xf32, #tpu.memory_space<vmem>>, vector<1x128xf32>,
    %c62 = arith.constant 62 : index
    %248 = memref.load %arg1[%c62] : memref<80xi32, #tpu.memory_space<smem>>
    %249 = arith.index_cast %248 : i32 to index
    %c0_186 = arith.constant 0 : index
    %250 = vector.load %arg2[%249, %c0_186] : memref<50x128xf32, #tpu.memory_space<vmem>>, vector<1x128xf32>
    %c62_187 = arith.constant 62 : index
    %c0_188 = arith.constant 0 : index
    %251 = vector.load %arg8[%c62_187, %c0_188] : memref<80x128xf32, #tpu.memory_space<vmem>>, vector<1x128xf32>
    tpu.vector_store %arg8[%c62_187, %c0_188], %250 {strides = array<i32>} : memref<80x128xf32, #tpu.memory_space<vmem>>, vector<1x128xf32>,
    %c63 = arith.constant 63 : index
    %252 = memref.load %arg1[%c63] : memref<80xi32, #tpu.memory_space<smem>>
    %253 = arith.index_cast %252 : i32 to index
    %c0_189 = arith.constant 0 : index
    %254 = vector.load %arg2[%253, %c0_189] : memref<50x128xf32, #tpu.memory_space<vmem>>, vector<1x128xf32>
    %c63_190 = arith.constant 63 : index
    %c0_191 = arith.constant 0 : index
    %255 = vector.load %arg8[%c63_190, %c0_191] : memref<80x128xf32, #tpu.memory_space<vmem>>, vector<1x128xf32>
    tpu.vector_store %arg8[%c63_190, %c0_191], %254 {strides = array<i32>} : memref<80x128xf32, #tpu.memory_space<vmem>>, vector<1x128xf32>,
    %c64 = arith.constant 64 : index
    %256 = memref.load %arg1[%c64] : memref<80xi32, #tpu.memory_space<smem>>
    %257 = arith.index_cast %256 : i32 to index
    %c0_192 = arith.constant 0 : index
    %258 = vector.load %arg2[%257, %c0_192] : memref<50x128xf32, #tpu.memory_space<vmem>>, vector<1x128xf32>
    %c64_193 = arith.constant 64 : index
    %c0_194 = arith.constant 0 : index
    %259 = vector.load %arg8[%c64_193, %c0_194] : memref<80x128xf32, #tpu.memory_space<vmem>>, vector<1x128xf32>
    tpu.vector_store %arg8[%c64_193, %c0_194], %258 {strides = array<i32>} : memref<80x128xf32, #tpu.memory_space<vmem>>, vector<1x128xf32>,
    %c65 = arith.constant 65 : index
    %260 = memref.load %arg1[%c65] : memref<80xi32, #tpu.memory_space<smem>>
    %261 = arith.index_cast %260 : i32 to index
    %c0_195 = arith.constant 0 : index
    %262 = vector.load %arg2[%261, %c0_195] : memref<50x128xf32, #tpu.memory_space<vmem>>, vector<1x128xf32>
    %c65_196 = arith.constant 65 : index
    %c0_197 = arith.constant 0 : index
    %263 = vector.load %arg8[%c65_196, %c0_197] : memref<80x128xf32, #tpu.memory_space<vmem>>, vector<1x128xf32>
    tpu.vector_store %arg8[%c65_196, %c0_197], %262 {strides = array<i32>} : memref<80x128xf32, #tpu.memory_space<vmem>>, vector<1x128xf32>,
    %c66 = arith.constant 66 : index
    %264 = memref.load %arg1[%c66] : memref<80xi32, #tpu.memory_space<smem>>
    %265 = arith.index_cast %264 : i32 to index
    %c0_198 = arith.constant 0 : index
    %266 = vector.load %arg2[%265, %c0_198] : memref<50x128xf32, #tpu.memory_space<vmem>>, vector<1x128xf32>
    %c66_199 = arith.constant 66 : index
    %c0_200 = arith.constant 0 : index
    %267 = vector.load %arg8[%c66_199, %c0_200] : memref<80x128xf32, #tpu.memory_space<vmem>>, vector<1x128xf32>
    tpu.vector_store %arg8[%c66_199, %c0_200], %266 {strides = array<i32>} : memref<80x128xf32, #tpu.memory_space<vmem>>, vector<1x128xf32>,
    %c67 = arith.constant 67 : index
    %268 = memref.load %arg1[%c67] : memref<80xi32, #tpu.memory_space<smem>>
    %269 = arith.index_cast %268 : i32 to index
    %c0_201 = arith.constant 0 : index
    %270 = vector.load %arg2[%269, %c0_201] : memref<50x128xf32, #tpu.memory_space<vmem>>, vector<1x128xf32>
    %c67_202 = arith.constant 67 : index
    %c0_203 = arith.constant 0 : index
    %271 = vector.load %arg8[%c67_202, %c0_203] : memref<80x128xf32, #tpu.memory_space<vmem>>, vector<1x128xf32>
    tpu.vector_store %arg8[%c67_202, %c0_203], %270 {strides = array<i32>} : memref<80x128xf32, #tpu.memory_space<vmem>>, vector<1x128xf32>,
    %c68 = arith.constant 68 : index
    %272 = memref.load %arg1[%c68] : memref<80xi32, #tpu.memory_space<smem>>
    %273 = arith.index_cast %272 : i32 to index
    %c0_204 = arith.constant 0 : index
    %274 = vector.load %arg2[%273, %c0_204] : memref<50x128xf32, #tpu.memory_space<vmem>>, vector<1x128xf32>
    %c68_205 = arith.constant 68 : index
    %c0_206 = arith.constant 0 : index
    %275 = vector.load %arg8[%c68_205, %c0_206] : memref<80x128xf32, #tpu.memory_space<vmem>>, vector<1x128xf32>
    tpu.vector_store %arg8[%c68_205, %c0_206], %274 {strides = array<i32>} : memref<80x128xf32, #tpu.memory_space<vmem>>, vector<1x128xf32>,
    %c69 = arith.constant 69 : index
    %276 = memref.load %arg1[%c69] : memref<80xi32, #tpu.memory_space<smem>>
    %277 = arith.index_cast %276 : i32 to index
    %c0_207 = arith.constant 0 : index
    %278 = vector.load %arg2[%277, %c0_207] : memref<50x128xf32, #tpu.memory_space<vmem>>, vector<1x128xf32>
    %c69_208 = arith.constant 69 : index
    %c0_209 = arith.constant 0 : index
    %279 = vector.load %arg8[%c69_208, %c0_209] : memref<80x128xf32, #tpu.memory_space<vmem>>, vector<1x128xf32>
    tpu.vector_store %arg8[%c69_208, %c0_209], %278 {strides = array<i32>} : memref<80x128xf32, #tpu.memory_space<vmem>>, vector<1x128xf32>,
    %c70 = arith.constant 70 : index
    %280 = memref.load %arg1[%c70] : memref<80xi32, #tpu.memory_space<smem>>
    %281 = arith.index_cast %280 : i32 to index
    %c0_210 = arith.constant 0 : index
    %282 = vector.load %arg2[%281, %c0_210] : memref<50x128xf32, #tpu.memory_space<vmem>>, vector<1x128xf32>
    %c70_211 = arith.constant 70 : index
    %c0_212 = arith.constant 0 : index
    %283 = vector.load %arg8[%c70_211, %c0_212] : memref<80x128xf32, #tpu.memory_space<vmem>>, vector<1x128xf32>
    tpu.vector_store %arg8[%c70_211, %c0_212], %282 {strides = array<i32>} : memref<80x128xf32, #tpu.memory_space<vmem>>, vector<1x128xf32>,
    %c71 = arith.constant 71 : index
    %284 = memref.load %arg1[%c71] : memref<80xi32, #tpu.memory_space<smem>>
    %285 = arith.index_cast %284 : i32 to index
    %c0_213 = arith.constant 0 : index
    %286 = vector.load %arg2[%285, %c0_213] : memref<50x128xf32, #tpu.memory_space<vmem>>, vector<1x128xf32>
    %c71_214 = arith.constant 71 : index
    %c0_215 = arith.constant 0 : index
    %287 = vector.load %arg8[%c71_214, %c0_215] : memref<80x128xf32, #tpu.memory_space<vmem>>, vector<1x128xf32>
    tpu.vector_store %arg8[%c71_214, %c0_215], %286 {strides = array<i32>} : memref<80x128xf32, #tpu.memory_space<vmem>>, vector<1x128xf32>,
    %c72 = arith.constant 72 : index
    %288 = memref.load %arg1[%c72] : memref<80xi32, #tpu.memory_space<smem>>
    %289 = arith.index_cast %288 : i32 to index
    %c0_216 = arith.constant 0 : index
    %290 = vector.load %arg2[%289, %c0_216] : memref<50x128xf32, #tpu.memory_space<vmem>>, vector<1x128xf32>
    %c72_217 = arith.constant 72 : index
    %c0_218 = arith.constant 0 : index
    %291 = vector.load %arg8[%c72_217, %c0_218] : memref<80x128xf32, #tpu.memory_space<vmem>>, vector<1x128xf32>
    tpu.vector_store %arg8[%c72_217, %c0_218], %290 {strides = array<i32>} : memref<80x128xf32, #tpu.memory_space<vmem>>, vector<1x128xf32>,
    %c73 = arith.constant 73 : index
    %292 = memref.load %arg1[%c73] : memref<80xi32, #tpu.memory_space<smem>>
    %293 = arith.index_cast %292 : i32 to index
    %c0_219 = arith.constant 0 : index
    %294 = vector.load %arg2[%293, %c0_219] : memref<50x128xf32, #tpu.memory_space<vmem>>, vector<1x128xf32>
    %c73_220 = arith.constant 73 : index
    %c0_221 = arith.constant 0 : index
    %295 = vector.load %arg8[%c73_220, %c0_221] : memref<80x128xf32, #tpu.memory_space<vmem>>, vector<1x128xf32>
    tpu.vector_store %arg8[%c73_220, %c0_221], %294 {strides = array<i32>} : memref<80x128xf32, #tpu.memory_space<vmem>>, vector<1x128xf32>,
    %c74 = arith.constant 74 : index
    %296 = memref.load %arg1[%c74] : memref<80xi32, #tpu.memory_space<smem>>
    %297 = arith.index_cast %296 : i32 to index
    %c0_222 = arith.constant 0 : index
    %298 = vector.load %arg2[%297, %c0_222] : memref<50x128xf32, #tpu.memory_space<vmem>>, vector<1x128xf32>
    %c74_223 = arith.constant 74 : index
    %c0_224 = arith.constant 0 : index
    %299 = vector.load %arg8[%c74_223, %c0_224] : memref<80x128xf32, #tpu.memory_space<vmem>>, vector<1x128xf32>
    tpu.vector_store %arg8[%c74_223, %c0_224], %298 {strides = array<i32>} : memref<80x128xf32, #tpu.memory_space<vmem>>, vector<1x128xf32>,
    %c75 = arith.constant 75 : index
    %300 = memref.load %arg1[%c75] : memref<80xi32, #tpu.memory_space<smem>>
    %301 = arith.index_cast %300 : i32 to index
    %c0_225 = arith.constant 0 : index
    %302 = vector.load %arg2[%301, %c0_225] : memref<50x128xf32, #tpu.memory_space<vmem>>, vector<1x128xf32>
    %c75_226 = arith.constant 75 : index
    %c0_227 = arith.constant 0 : index
    %303 = vector.load %arg8[%c75_226, %c0_227] : memref<80x128xf32, #tpu.memory_space<vmem>>, vector<1x128xf32>
    tpu.vector_store %arg8[%c75_226, %c0_227], %302 {strides = array<i32>} : memref<80x128xf32, #tpu.memory_space<vmem>>, vector<1x128xf32>,
    %c76 = arith.constant 76 : index
    %304 = memref.load %arg1[%c76] : memref<80xi32, #tpu.memory_space<smem>>
    %305 = arith.index_cast %304 : i32 to index
    %c0_228 = arith.constant 0 : index
    %306 = vector.load %arg2[%305, %c0_228] : memref<50x128xf32, #tpu.memory_space<vmem>>, vector<1x128xf32>
    %c76_229 = arith.constant 76 : index
    %c0_230 = arith.constant 0 : index
    %307 = vector.load %arg8[%c76_229, %c0_230] : memref<80x128xf32, #tpu.memory_space<vmem>>, vector<1x128xf32>
    tpu.vector_store %arg8[%c76_229, %c0_230], %306 {strides = array<i32>} : memref<80x128xf32, #tpu.memory_space<vmem>>, vector<1x128xf32>,
    %c77 = arith.constant 77 : index
    %308 = memref.load %arg1[%c77] : memref<80xi32, #tpu.memory_space<smem>>
    %309 = arith.index_cast %308 : i32 to index
    %c0_231 = arith.constant 0 : index
    %310 = vector.load %arg2[%309, %c0_231] : memref<50x128xf32, #tpu.memory_space<vmem>>, vector<1x128xf32>
    %c77_232 = arith.constant 77 : index
    %c0_233 = arith.constant 0 : index
    %311 = vector.load %arg8[%c77_232, %c0_233] : memref<80x128xf32, #tpu.memory_space<vmem>>, vector<1x128xf32>
    tpu.vector_store %arg8[%c77_232, %c0_233], %310 {strides = array<i32>} : memref<80x128xf32, #tpu.memory_space<vmem>>, vector<1x128xf32>,
    %c78 = arith.constant 78 : index
    %312 = memref.load %arg1[%c78] : memref<80xi32, #tpu.memory_space<smem>>
    %313 = arith.index_cast %312 : i32 to index
    %c0_234 = arith.constant 0 : index
    %314 = vector.load %arg2[%313, %c0_234] : memref<50x128xf32, #tpu.memory_space<vmem>>, vector<1x128xf32>
    %c78_235 = arith.constant 78 : index
    %c0_236 = arith.constant 0 : index
    %315 = vector.load %arg8[%c78_235, %c0_236] : memref<80x128xf32, #tpu.memory_space<vmem>>, vector<1x128xf32>
    tpu.vector_store %arg8[%c78_235, %c0_236], %314 {strides = array<i32>} : memref<80x128xf32, #tpu.memory_space<vmem>>, vector<1x128xf32>,
    %c79 = arith.constant 79 : index
    %316 = memref.load %arg1[%c79] : memref<80xi32, #tpu.memory_space<smem>>
    %317 = arith.index_cast %316 : i32 to index
    %c0_237 = arith.constant 0 : index
    %318 = vector.load %arg2[%317, %c0_237] : memref<50x128xf32, #tpu.memory_space<vmem>>, vector<1x128xf32>
    %c79_238 = arith.constant 79 : index
    %c0_239 = arith.constant 0 : index
    %319 = vector.load %arg8[%c79_238, %c0_239] : memref<80x128xf32, #tpu.memory_space<vmem>>, vector<1x128xf32>
    tpu.vector_store %arg8[%c79_238, %c0_239], %318 {strides = array<i32>} : memref<80x128xf32, #tpu.memory_space<vmem>>, vector<1x128xf32>,
    %c0_240 = arith.constant 0 : index
    %c0_241 = arith.constant 0 : index
    %320 = vector.load %arg3[%c0_240, %c0_241] : memref<32x128xf32, #tpu.memory_space<vmem>>, vector<32x128xf32>
    %cst = arith.constant 0.000000e+00 : f32
    %321 = vector.broadcast %cst : f32 to vector<8x32xf32>
    %cst_242 = arith.constant 0.000000e+00 : f32
    %322 = vector.broadcast %cst_242 : f32 to vector<8x32xf32>
    %c0_243 = arith.constant 0 : index
    %c0_244 = arith.constant 0 : index
    %323 = vector.load %arg8[%c0_243, %c0_244] : memref<80x128xf32, #tpu.memory_space<vmem>>, vector<8x128xf32>
    %cst_245 = arith.constant dense<0.000000e+00> : vector<8x128xf32>
    %324 = tpu.matmul %321, %320, %cst_245 {dimension_numbers = #tpu.dot_dimension_numbers<[1], [0], [0], [1], [0, 0, 1, 1], [], []>} : vector<8x32xf32>, vector<32x128xf32>, vector<8x128xf32> -> vector<8x128xf32>
    %325 = arith.addf %323, %324 : vector<8x128xf32>
    %326 = arith.negf %325 : vector<8x128xf32>
    %327 = math.exp %326 : vector<8x128xf32>
    %cst_246 = arith.constant 1.000000e+00 : f32
    %328 = vector.broadcast %cst_246 : f32 to vector<8x128xf32>
    %329 = arith.addf %328, %327 : vector<8x128xf32>
    %330 = arith.divf %328, %329 : vector<8x128xf32>
    %331 = math.tanh %325 : vector<8x128xf32>
    %332 = vector.extract_strided_slice %330 {offsets = [0, 0], sizes = [8, 32], strides = [1, 1]} : vector<8x128xf32> to vector<8x32xf32>
    %333 = vector.extract_strided_slice %330 {offsets = [0, 32], sizes = [8, 32], strides = [1, 1]} : vector<8x128xf32> to vector<8x32xf32>
    %334 = vector.extract_strided_slice %331 {offsets = [0, 64], sizes = [8, 32], strides = [1, 1]} : vector<8x128xf32> to vector<8x32xf32>
    %335 = vector.extract_strided_slice %330 {offsets = [0, 96], sizes = [8, 32], strides = [1, 1]} : vector<8x128xf32> to vector<8x32xf32>
    %336 = arith.mulf %333, %322 : vector<8x32xf32>
    %337 = arith.mulf %332, %334 : vector<8x32xf32>
    %338 = arith.addf %336, %337 : vector<8x32xf32>
    %339 = math.tanh %338 : vector<8x32xf32>
    %340 = arith.mulf %335, %339 : vector<8x32xf32>
    %c0_247 = arith.constant 0 : index
    %c0_248 = arith.constant 0 : index
    %341 = vector.load %arg9[%c0_247, %c0_248] : memref<80x32xf32, #tpu.memory_space<vmem>>, vector<8x32xf32>
    tpu.vector_store %arg9[%c0_247, %c0_248], %340 {strides = array<i32>} : memref<80x32xf32, #tpu.memory_space<vmem>>, vector<8x32xf32>,
    %c8_249 = arith.constant 8 : index
    %c0_250 = arith.constant 0 : index
    %342 = vector.load %arg8[%c8_249, %c0_250] : memref<80x128xf32, #tpu.memory_space<vmem>>, vector<8x128xf32>
    %cst_251 = arith.constant dense<0.000000e+00> : vector<8x128xf32>
    %343 = tpu.matmul %340, %320, %cst_251 {dimension_numbers = #tpu.dot_dimension_numbers<[1], [0], [0], [1], [0, 0, 1, 1], [], []>} : vector<8x32xf32>, vector<32x128xf32>, vector<8x128xf32> -> vector<8x128xf32>
    %344 = arith.addf %342, %343 : vector<8x128xf32>
    %345 = arith.negf %344 : vector<8x128xf32>
    %346 = math.exp %345 : vector<8x128xf32>
    %cst_252 = arith.constant 1.000000e+00 : f32
    %347 = vector.broadcast %cst_252 : f32 to vector<8x128xf32>
    %348 = arith.addf %347, %346 : vector<8x128xf32>
    %349 = arith.divf %347, %348 : vector<8x128xf32>
    %350 = math.tanh %344 : vector<8x128xf32>
    %351 = vector.extract_strided_slice %349 {offsets = [0, 0], sizes = [8, 32], strides = [1, 1]} : vector<8x128xf32> to vector<8x32xf32>
    %352 = vector.extract_strided_slice %349 {offsets = [0, 32], sizes = [8, 32], strides = [1, 1]} : vector<8x128xf32> to vector<8x32xf32>
    %353 = vector.extract_strided_slice %350 {offsets = [0, 64], sizes = [8, 32], strides = [1, 1]} : vector<8x128xf32> to vector<8x32xf32>
    %354 = vector.extract_strided_slice %349 {offsets = [0, 96], sizes = [8, 32], strides = [1, 1]} : vector<8x128xf32> to vector<8x32xf32>
    %355 = arith.mulf %352, %338 : vector<8x32xf32>
    %356 = arith.mulf %351, %353 : vector<8x32xf32>
    %357 = arith.addf %355, %356 : vector<8x32xf32>
    %358 = math.tanh %357 : vector<8x32xf32>
    %359 = arith.mulf %354, %358 : vector<8x32xf32>
    %c8_253 = arith.constant 8 : index
    %c0_254 = arith.constant 0 : index
    %360 = vector.load %arg9[%c8_253, %c0_254] : memref<80x32xf32, #tpu.memory_space<vmem>>, vector<8x32xf32>
    tpu.vector_store %arg9[%c8_253, %c0_254], %359 {strides = array<i32>} : memref<80x32xf32, #tpu.memory_space<vmem>>, vector<8x32xf32>,
    %c16_255 = arith.constant 16 : index
    %c0_256 = arith.constant 0 : index
    %361 = vector.load %arg8[%c16_255, %c0_256] : memref<80x128xf32, #tpu.memory_space<vmem>>, vector<8x128xf32>
    %cst_257 = arith.constant dense<0.000000e+00> : vector<8x128xf32>
    %362 = tpu.matmul %359, %320, %cst_257 {dimension_numbers = #tpu.dot_dimension_numbers<[1], [0], [0], [1], [0, 0, 1, 1], [], []>} : vector<8x32xf32>, vector<32x128xf32>, vector<8x128xf32> -> vector<8x128xf32>
    %363 = arith.addf %361, %362 : vector<8x128xf32>
    %364 = arith.negf %363 : vector<8x128xf32>
    %365 = math.exp %364 : vector<8x128xf32>
    %cst_258 = arith.constant 1.000000e+00 : f32
    %366 = vector.broadcast %cst_258 : f32 to vector<8x128xf32>
    %367 = arith.addf %366, %365 : vector<8x128xf32>
    %368 = arith.divf %366, %367 : vector<8x128xf32>
    %369 = math.tanh %363 : vector<8x128xf32>
    %370 = vector.extract_strided_slice %368 {offsets = [0, 0], sizes = [8, 32], strides = [1, 1]} : vector<8x128xf32> to vector<8x32xf32>
    %371 = vector.extract_strided_slice %368 {offsets = [0, 32], sizes = [8, 32], strides = [1, 1]} : vector<8x128xf32> to vector<8x32xf32>
    %372 = vector.extract_strided_slice %369 {offsets = [0, 64], sizes = [8, 32], strides = [1, 1]} : vector<8x128xf32> to vector<8x32xf32>
    %373 = vector.extract_strided_slice %368 {offsets = [0, 96], sizes = [8, 32], strides = [1, 1]} : vector<8x128xf32> to vector<8x32xf32>
    %374 = arith.mulf %371, %357 : vector<8x32xf32>
    %375 = arith.mulf %370, %372 : vector<8x32xf32>
    %376 = arith.addf %374, %375 : vector<8x32xf32>
    %377 = math.tanh %376 : vector<8x32xf32>
    %378 = arith.mulf %373, %377 : vector<8x32xf32>
    %c16_259 = arith.constant 16 : index
    %c0_260 = arith.constant 0 : index
    %379 = vector.load %arg9[%c16_259, %c0_260] : memref<80x32xf32, #tpu.memory_space<vmem>>, vector<8x32xf32>
    tpu.vector_store %arg9[%c16_259, %c0_260], %378 {strides = array<i32>} : memref<80x32xf32, #tpu.memory_space<vmem>>, vector<8x32xf32>,
    %c24_261 = arith.constant 24 : index
    %c0_262 = arith.constant 0 : index
    %380 = vector.load %arg8[%c24_261, %c0_262] : memref<80x128xf32, #tpu.memory_space<vmem>>, vector<8x128xf32>
    %cst_263 = arith.constant dense<0.000000e+00> : vector<8x128xf32>
    %381 = tpu.matmul %378, %320, %cst_263 {dimension_numbers = #tpu.dot_dimension_numbers<[1], [0], [0], [1], [0, 0, 1, 1], [], []>} : vector<8x32xf32>, vector<32x128xf32>, vector<8x128xf32> -> vector<8x128xf32>
    %382 = arith.addf %380, %381 : vector<8x128xf32>
    %383 = arith.negf %382 : vector<8x128xf32>
    %384 = math.exp %383 : vector<8x128xf32>
    %cst_264 = arith.constant 1.000000e+00 : f32
    %385 = vector.broadcast %cst_264 : f32 to vector<8x128xf32>
    %386 = arith.addf %385, %384 : vector<8x128xf32>
    %387 = arith.divf %385, %386 : vector<8x128xf32>
    %388 = math.tanh %382 : vector<8x128xf32>
    %389 = vector.extract_strided_slice %387 {offsets = [0, 0], sizes = [8, 32], strides = [1, 1]} : vector<8x128xf32> to vector<8x32xf32>
    %390 = vector.extract_strided_slice %387 {offsets = [0, 32], sizes = [8, 32], strides = [1, 1]} : vector<8x128xf32> to vector<8x32xf32>
    %391 = vector.extract_strided_slice %388 {offsets = [0, 64], sizes = [8, 32], strides = [1, 1]} : vector<8x128xf32> to vector<8x32xf32>
    %392 = vector.extract_strided_slice %387 {offsets = [0, 96], sizes = [8, 32], strides = [1, 1]} : vector<8x128xf32> to vector<8x32xf32>
    %393 = arith.mulf %390, %376 : vector<8x32xf32>
    %394 = arith.mulf %389, %391 : vector<8x32xf32>
    %395 = arith.addf %393, %394 : vector<8x32xf32>
    %396 = math.tanh %395 : vector<8x32xf32>
    %397 = arith.mulf %392, %396 : vector<8x32xf32>
    %c24_265 = arith.constant 24 : index
    %c0_266 = arith.constant 0 : index
    %398 = vector.load %arg9[%c24_265, %c0_266] : memref<80x32xf32, #tpu.memory_space<vmem>>, vector<8x32xf32>
    tpu.vector_store %arg9[%c24_265, %c0_266], %397 {strides = array<i32>} : memref<80x32xf32, #tpu.memory_space<vmem>>, vector<8x32xf32>,
    %c32_267 = arith.constant 32 : index
    %c0_268 = arith.constant 0 : index
    %399 = vector.load %arg8[%c32_267, %c0_268] : memref<80x128xf32, #tpu.memory_space<vmem>>, vector<8x128xf32>
    %cst_269 = arith.constant dense<0.000000e+00> : vector<8x128xf32>
    %400 = tpu.matmul %397, %320, %cst_269 {dimension_numbers = #tpu.dot_dimension_numbers<[1], [0], [0], [1], [0, 0, 1, 1], [], []>} : vector<8x32xf32>, vector<32x128xf32>, vector<8x128xf32> -> vector<8x128xf32>
    %401 = arith.addf %399, %400 : vector<8x128xf32>
    %402 = arith.negf %401 : vector<8x128xf32>
    %403 = math.exp %402 : vector<8x128xf32>
    %cst_270 = arith.constant 1.000000e+00 : f32
    %404 = vector.broadcast %cst_270 : f32 to vector<8x128xf32>
    %405 = arith.addf %404, %403 : vector<8x128xf32>
    %406 = arith.divf %404, %405 : vector<8x128xf32>
    %407 = math.tanh %401 : vector<8x128xf32>
    %408 = vector.extract_strided_slice %406 {offsets = [0, 0], sizes = [8, 32], strides = [1, 1]} : vector<8x128xf32> to vector<8x32xf32>
    %409 = vector.extract_strided_slice %406 {offsets = [0, 32], sizes = [8, 32], strides = [1, 1]} : vector<8x128xf32> to vector<8x32xf32>
    %410 = vector.extract_strided_slice %407 {offsets = [0, 64], sizes = [8, 32], strides = [1, 1]} : vector<8x128xf32> to vector<8x32xf32>
    %411 = vector.extract_strided_slice %406 {offsets = [0, 96], sizes = [8, 32], strides = [1, 1]} : vector<8x128xf32> to vector<8x32xf32>
    %412 = arith.mulf %409, %395 : vector<8x32xf32>
    %413 = arith.mulf %408, %410 : vector<8x32xf32>
    %414 = arith.addf %412, %413 : vector<8x32xf32>
    %415 = math.tanh %414 : vector<8x32xf32>
    %416 = arith.mulf %411, %415 : vector<8x32xf32>
    %c32_271 = arith.constant 32 : index
    %c0_272 = arith.constant 0 : index
    %417 = vector.load %arg9[%c32_271, %c0_272] : memref<80x32xf32, #tpu.memory_space<vmem>>, vector<8x32xf32>
    tpu.vector_store %arg9[%c32_271, %c0_272], %416 {strides = array<i32>} : memref<80x32xf32, #tpu.memory_space<vmem>>, vector<8x32xf32>,
    %c40_273 = arith.constant 40 : index
    %c0_274 = arith.constant 0 : index
    %418 = vector.load %arg8[%c40_273, %c0_274] : memref<80x128xf32, #tpu.memory_space<vmem>>, vector<8x128xf32>
    %cst_275 = arith.constant dense<0.000000e+00> : vector<8x128xf32>
    %419 = tpu.matmul %416, %320, %cst_275 {dimension_numbers = #tpu.dot_dimension_numbers<[1], [0], [0], [1], [0, 0, 1, 1], [], []>} : vector<8x32xf32>, vector<32x128xf32>, vector<8x128xf32> -> vector<8x128xf32>
    %420 = arith.addf %418, %419 : vector<8x128xf32>
    %421 = arith.negf %420 : vector<8x128xf32>
    %422 = math.exp %421 : vector<8x128xf32>
    %cst_276 = arith.constant 1.000000e+00 : f32
    %423 = vector.broadcast %cst_276 : f32 to vector<8x128xf32>
    %424 = arith.addf %423, %422 : vector<8x128xf32>
    %425 = arith.divf %423, %424 : vector<8x128xf32>
    %426 = math.tanh %420 : vector<8x128xf32>
    %427 = vector.extract_strided_slice %425 {offsets = [0, 0], sizes = [8, 32], strides = [1, 1]} : vector<8x128xf32> to vector<8x32xf32>
    %428 = vector.extract_strided_slice %425 {offsets = [0, 32], sizes = [8, 32], strides = [1, 1]} : vector<8x128xf32> to vector<8x32xf32>
    %429 = vector.extract_strided_slice %426 {offsets = [0, 64], sizes = [8, 32], strides = [1, 1]} : vector<8x128xf32> to vector<8x32xf32>
    %430 = vector.extract_strided_slice %425 {offsets = [0, 96], sizes = [8, 32], strides = [1, 1]} : vector<8x128xf32> to vector<8x32xf32>
    %431 = arith.mulf %428, %414 : vector<8x32xf32>
    %432 = arith.mulf %427, %429 : vector<8x32xf32>
    %433 = arith.addf %431, %432 : vector<8x32xf32>
    %434 = math.tanh %433 : vector<8x32xf32>
    %435 = arith.mulf %430, %434 : vector<8x32xf32>
    %c40_277 = arith.constant 40 : index
    %c0_278 = arith.constant 0 : index
    %436 = vector.load %arg9[%c40_277, %c0_278] : memref<80x32xf32, #tpu.memory_space<vmem>>, vector<8x32xf32>
    tpu.vector_store %arg9[%c40_277, %c0_278], %435 {strides = array<i32>} : memref<80x32xf32, #tpu.memory_space<vmem>>, vector<8x32xf32>,
    %c48_279 = arith.constant 48 : index
    %c0_280 = arith.constant 0 : index
    %437 = vector.load %arg8[%c48_279, %c0_280] : memref<80x128xf32, #tpu.memory_space<vmem>>, vector<8x128xf32>
    %cst_281 = arith.constant dense<0.000000e+00> : vector<8x128xf32>
    %438 = tpu.matmul %435, %320, %cst_281 {dimension_numbers = #tpu.dot_dimension_numbers<[1], [0], [0], [1], [0, 0, 1, 1], [], []>} : vector<8x32xf32>, vector<32x128xf32>, vector<8x128xf32> -> vector<8x128xf32>
    %439 = arith.addf %437, %438 : vector<8x128xf32>
    %440 = arith.negf %439 : vector<8x128xf32>
    %441 = math.exp %440 : vector<8x128xf32>
    %cst_282 = arith.constant 1.000000e+00 : f32
    %442 = vector.broadcast %cst_282 : f32 to vector<8x128xf32>
    %443 = arith.addf %442, %441 : vector<8x128xf32>
    %444 = arith.divf %442, %443 : vector<8x128xf32>
    %445 = math.tanh %439 : vector<8x128xf32>
    %446 = vector.extract_strided_slice %444 {offsets = [0, 0], sizes = [8, 32], strides = [1, 1]} : vector<8x128xf32> to vector<8x32xf32>
    %447 = vector.extract_strided_slice %444 {offsets = [0, 32], sizes = [8, 32], strides = [1, 1]} : vector<8x128xf32> to vector<8x32xf32>
    %448 = vector.extract_strided_slice %445 {offsets = [0, 64], sizes = [8, 32], strides = [1, 1]} : vector<8x128xf32> to vector<8x32xf32>
    %449 = vector.extract_strided_slice %444 {offsets = [0, 96], sizes = [8, 32], strides = [1, 1]} : vector<8x128xf32> to vector<8x32xf32>
    %450 = arith.mulf %447, %433 : vector<8x32xf32>
    %451 = arith.mulf %446, %448 : vector<8x32xf32>
    %452 = arith.addf %450, %451 : vector<8x32xf32>
    %453 = math.tanh %452 : vector<8x32xf32>
    %454 = arith.mulf %449, %453 : vector<8x32xf32>
    %c48_283 = arith.constant 48 : index
    %c0_284 = arith.constant 0 : index
    %455 = vector.load %arg9[%c48_283, %c0_284] : memref<80x32xf32, #tpu.memory_space<vmem>>, vector<8x32xf32>
    tpu.vector_store %arg9[%c48_283, %c0_284], %454 {strides = array<i32>} : memref<80x32xf32, #tpu.memory_space<vmem>>, vector<8x32xf32>,
    %c56_285 = arith.constant 56 : index
    %c0_286 = arith.constant 0 : index
    %456 = vector.load %arg8[%c56_285, %c0_286] : memref<80x128xf32, #tpu.memory_space<vmem>>, vector<8x128xf32>
    %cst_287 = arith.constant dense<0.000000e+00> : vector<8x128xf32>
    %457 = tpu.matmul %454, %320, %cst_287 {dimension_numbers = #tpu.dot_dimension_numbers<[1], [0], [0], [1], [0, 0, 1, 1], [], []>} : vector<8x32xf32>, vector<32x128xf32>, vector<8x128xf32> -> vector<8x128xf32>
    %458 = arith.addf %456, %457 : vector<8x128xf32>
    %459 = arith.negf %458 : vector<8x128xf32>
    %460 = math.exp %459 : vector<8x128xf32>
    %cst_288 = arith.constant 1.000000e+00 : f32
    %461 = vector.broadcast %cst_288 : f32 to vector<8x128xf32>
    %462 = arith.addf %461, %460 : vector<8x128xf32>
    %463 = arith.divf %461, %462 : vector<8x128xf32>
    %464 = math.tanh %458 : vector<8x128xf32>
    %465 = vector.extract_strided_slice %463 {offsets = [0, 0], sizes = [8, 32], strides = [1, 1]} : vector<8x128xf32> to vector<8x32xf32>
    %466 = vector.extract_strided_slice %463 {offsets = [0, 32], sizes = [8, 32], strides = [1, 1]} : vector<8x128xf32> to vector<8x32xf32>
    %467 = vector.extract_strided_slice %464 {offsets = [0, 64], sizes = [8, 32], strides = [1, 1]} : vector<8x128xf32> to vector<8x32xf32>
    %468 = vector.extract_strided_slice %463 {offsets = [0, 96], sizes = [8, 32], strides = [1, 1]} : vector<8x128xf32> to vector<8x32xf32>
    %469 = arith.mulf %466, %452 : vector<8x32xf32>
    %470 = arith.mulf %465, %467 : vector<8x32xf32>
    %471 = arith.addf %469, %470 : vector<8x32xf32>
    %472 = math.tanh %471 : vector<8x32xf32>
    %473 = arith.mulf %468, %472 : vector<8x32xf32>
    %c56_289 = arith.constant 56 : index
    %c0_290 = arith.constant 0 : index
    %474 = vector.load %arg9[%c56_289, %c0_290] : memref<80x32xf32, #tpu.memory_space<vmem>>, vector<8x32xf32>
    tpu.vector_store %arg9[%c56_289, %c0_290], %473 {strides = array<i32>} : memref<80x32xf32, #tpu.memory_space<vmem>>, vector<8x32xf32>,
    %c64_291 = arith.constant 64 : index
    %c0_292 = arith.constant 0 : index
    %475 = vector.load %arg8[%c64_291, %c0_292] : memref<80x128xf32, #tpu.memory_space<vmem>>, vector<8x128xf32>
    %cst_293 = arith.constant dense<0.000000e+00> : vector<8x128xf32>
    %476 = tpu.matmul %473, %320, %cst_293 {dimension_numbers = #tpu.dot_dimension_numbers<[1], [0], [0], [1], [0, 0, 1, 1], [], []>} : vector<8x32xf32>, vector<32x128xf32>, vector<8x128xf32> -> vector<8x128xf32>
    %477 = arith.addf %475, %476 : vector<8x128xf32>
    %478 = arith.negf %477 : vector<8x128xf32>
    %479 = math.exp %478 : vector<8x128xf32>
    %cst_294 = arith.constant 1.000000e+00 : f32
    %480 = vector.broadcast %cst_294 : f32 to vector<8x128xf32>
    %481 = arith.addf %480, %479 : vector<8x128xf32>
    %482 = arith.divf %480, %481 : vector<8x128xf32>
    %483 = math.tanh %477 : vector<8x128xf32>
    %484 = vector.extract_strided_slice %482 {offsets = [0, 0], sizes = [8, 32], strides = [1, 1]} : vector<8x128xf32> to vector<8x32xf32>
    %485 = vector.extract_strided_slice %482 {offsets = [0, 32], sizes = [8, 32], strides = [1, 1]} : vector<8x128xf32> to vector<8x32xf32>
    %486 = vector.extract_strided_slice %483 {offsets = [0, 64], sizes = [8, 32], strides = [1, 1]} : vector<8x128xf32> to vector<8x32xf32>
    %487 = vector.extract_strided_slice %482 {offsets = [0, 96], sizes = [8, 32], strides = [1, 1]} : vector<8x128xf32> to vector<8x32xf32>
    %488 = arith.mulf %485, %471 : vector<8x32xf32>
    %489 = arith.mulf %484, %486 : vector<8x32xf32>
    %490 = arith.addf %488, %489 : vector<8x32xf32>
    %491 = math.tanh %490 : vector<8x32xf32>
    %492 = arith.mulf %487, %491 : vector<8x32xf32>
    %c64_295 = arith.constant 64 : index
    %c0_296 = arith.constant 0 : index
    %493 = vector.load %arg9[%c64_295, %c0_296] : memref<80x32xf32, #tpu.memory_space<vmem>>, vector<8x32xf32>
    tpu.vector_store %arg9[%c64_295, %c0_296], %492 {strides = array<i32>} : memref<80x32xf32, #tpu.memory_space<vmem>>, vector<8x32xf32>,
    %c72_297 = arith.constant 72 : index
    %c0_298 = arith.constant 0 : index
    %494 = vector.load %arg8[%c72_297, %c0_298] : memref<80x128xf32, #tpu.memory_space<vmem>>, vector<8x128xf32>
    %cst_299 = arith.constant dense<0.000000e+00> : vector<8x128xf32>
    %495 = tpu.matmul %492, %320, %cst_299 {dimension_numbers = #tpu.dot_dimension_numbers<[1], [0], [0], [1], [0, 0, 1, 1], [], []>} : vector<8x32xf32>, vector<32x128xf32>, vector<8x128xf32> -> vector<8x128xf32>
    %496 = arith.addf %494, %495 : vector<8x128xf32>
    %497 = arith.negf %496 : vector<8x128xf32>
    %498 = math.exp %497 : vector<8x128xf32>
    %cst_300 = arith.constant 1.000000e+00 : f32
    %499 = vector.broadcast %cst_300 : f32 to vector<8x128xf32>
    %500 = arith.addf %499, %498 : vector<8x128xf32>
    %501 = arith.divf %499, %500 : vector<8x128xf32>
    %502 = math.tanh %496 : vector<8x128xf32>
    %503 = vector.extract_strided_slice %501 {offsets = [0, 0], sizes = [8, 32], strides = [1, 1]} : vector<8x128xf32> to vector<8x32xf32>
    %504 = vector.extract_strided_slice %501 {offsets = [0, 32], sizes = [8, 32], strides = [1, 1]} : vector<8x128xf32> to vector<8x32xf32>
    %505 = vector.extract_strided_slice %502 {offsets = [0, 64], sizes = [8, 32], strides = [1, 1]} : vector<8x128xf32> to vector<8x32xf32>
    %506 = vector.extract_strided_slice %501 {offsets = [0, 96], sizes = [8, 32], strides = [1, 1]} : vector<8x128xf32> to vector<8x32xf32>
    %507 = arith.mulf %504, %490 : vector<8x32xf32>
    %508 = arith.mulf %503, %505 : vector<8x32xf32>
    %509 = arith.addf %507, %508 : vector<8x32xf32>
    %510 = math.tanh %509 : vector<8x32xf32>
    %511 = arith.mulf %506, %510 : vector<8x32xf32>
    %c72_301 = arith.constant 72 : index
    %c0_302 = arith.constant 0 : index
    %512 = vector.load %arg9[%c72_301, %c0_302] : memref<80x32xf32, #tpu.memory_space<vmem>>, vector<8x32xf32>
    tpu.vector_store %arg9[%c72_301, %c0_302], %511 {strides = array<i32>} : memref<80x32xf32, #tpu.memory_space<vmem>>, vector<8x32xf32>,
    %c0_303 = arith.constant 0 : index
    %c0_304 = arith.constant 0 : index
    %513 = vector.load %arg9[%c0_303, %c0_304] : memref<80x32xf32, #tpu.memory_space<vmem>>, vector<80x32xf32>
    %514 = arith.truncf %513 : vector<80x32xf32> to vector<80x32xbf16>
    %c0_305 = arith.constant 0 : index
    %c0_306 = arith.constant 0 : index
    %515 = vector.load %arg4[%c0_305, %c0_306] : memref<32x128xbf16, #tpu.memory_space<vmem>>, vector<32x128xbf16>
    %cst_307 = arith.constant dense<0.000000e+00> : vector<80x128xf32>
    %516 = tpu.matmul %514, %515, %cst_307 {dimension_numbers = #tpu.dot_dimension_numbers<[1], [0], [0], [1], [0, 0, 1, 1], [], []>} : vector<80x32xbf16>, vector<32x128xbf16>, vector<80x128xf32> -> vector<80x128xf32>
    %c0_308 = arith.constant 0 : index
    %c0_309 = arith.constant 0 : index
    %517 = vector.load %arg6[%c0_308, %c0_309] : memref<1x128xf32, #tpu.memory_space<vmem>>, vector<1x128xf32>
    %518 = vector.broadcast %517 : vector<1x128xf32> to vector<80x128xf32>
    %519 = arith.addf %516, %518 : vector<80x128xf32>
    %c0_310 = arith.constant 0 : index
    %c0_311 = arith.constant 0 : index
    %520 = vector.load %arg8[%c0_310, %c0_311] : memref<80x128xf32, #tpu.memory_space<vmem>>, vector<80x128xf32>
    tpu.vector_store %arg8[%c0_310, %c0_311], %519 {strides = array<i32>} : memref<80x128xf32, #tpu.memory_space<vmem>>, vector<80x128xf32>,
    %c0_312 = arith.constant 0 : index
    %c0_313 = arith.constant 0 : index
    %521 = vector.load %arg5[%c0_312, %c0_313] : memref<32x128xf32, #tpu.memory_space<vmem>>, vector<32x128xf32>
    %cst_314 = arith.constant 0.000000e+00 : f32
    %522 = vector.broadcast %cst_314 : f32 to vector<8x32xf32>
    %cst_315 = arith.constant 0.000000e+00 : f32
    %523 = vector.broadcast %cst_315 : f32 to vector<8x32xf32>
    %c0_316 = arith.constant 0 : index
    %c0_317 = arith.constant 0 : index
    %524 = vector.load %arg8[%c0_316, %c0_317] : memref<80x128xf32, #tpu.memory_space<vmem>>, vector<8x128xf32>
    %cst_318 = arith.constant dense<0.000000e+00> : vector<8x128xf32>
    %525 = tpu.matmul %522, %521, %cst_318 {dimension_numbers = #tpu.dot_dimension_numbers<[1], [0], [0], [1], [0, 0, 1, 1], [], []>} : vector<8x32xf32>, vector<32x128xf32>, vector<8x128xf32> -> vector<8x128xf32>
    %526 = arith.addf %524, %525 : vector<8x128xf32>
    %527 = arith.negf %526 : vector<8x128xf32>
    %528 = math.exp %527 : vector<8x128xf32>
    %cst_319 = arith.constant 1.000000e+00 : f32
    %529 = vector.broadcast %cst_319 : f32 to vector<8x128xf32>
    %530 = arith.addf %529, %528 : vector<8x128xf32>
    %531 = arith.divf %529, %530 : vector<8x128xf32>
    %532 = math.tanh %526 : vector<8x128xf32>
    %533 = vector.extract_strided_slice %531 {offsets = [0, 0], sizes = [8, 32], strides = [1, 1]} : vector<8x128xf32> to vector<8x32xf32>
    %534 = vector.extract_strided_slice %531 {offsets = [0, 32], sizes = [8, 32], strides = [1, 1]} : vector<8x128xf32> to vector<8x32xf32>
    %535 = vector.extract_strided_slice %532 {offsets = [0, 64], sizes = [8, 32], strides = [1, 1]} : vector<8x128xf32> to vector<8x32xf32>
    %536 = vector.extract_strided_slice %531 {offsets = [0, 96], sizes = [8, 32], strides = [1, 1]} : vector<8x128xf32> to vector<8x32xf32>
    %537 = arith.mulf %534, %523 : vector<8x32xf32>
    %538 = arith.mulf %533, %535 : vector<8x32xf32>
    %539 = arith.addf %537, %538 : vector<8x32xf32>
    %540 = math.tanh %539 : vector<8x32xf32>
    %541 = arith.mulf %536, %540 : vector<8x32xf32>
    %c0_320 = arith.constant 0 : index
    %c0_321 = arith.constant 0 : index
    %542 = vector.load %arg7[%c0_320, %c0_321] : memref<80x32xf32, #tpu.memory_space<vmem>>, vector<8x32xf32>
    tpu.vector_store %arg7[%c0_320, %c0_321], %541 {strides = array<i32>} : memref<80x32xf32, #tpu.memory_space<vmem>>, vector<8x32xf32>,
    %c8_322 = arith.constant 8 : index
    %c0_323 = arith.constant 0 : index
    %543 = vector.load %arg8[%c8_322, %c0_323] : memref<80x128xf32, #tpu.memory_space<vmem>>, vector<8x128xf32>
    %cst_324 = arith.constant dense<0.000000e+00> : vector<8x128xf32>
    %544 = tpu.matmul %541, %521, %cst_324 {dimension_numbers = #tpu.dot_dimension_numbers<[1], [0], [0], [1], [0, 0, 1, 1], [], []>} : vector<8x32xf32>, vector<32x128xf32>, vector<8x128xf32> -> vector<8x128xf32>
    %545 = arith.addf %543, %544 : vector<8x128xf32>
    %546 = arith.negf %545 : vector<8x128xf32>
    %547 = math.exp %546 : vector<8x128xf32>
    %cst_325 = arith.constant 1.000000e+00 : f32
    %548 = vector.broadcast %cst_325 : f32 to vector<8x128xf32>
    %549 = arith.addf %548, %547 : vector<8x128xf32>
    %550 = arith.divf %548, %549 : vector<8x128xf32>
    %551 = math.tanh %545 : vector<8x128xf32>
    %552 = vector.extract_strided_slice %550 {offsets = [0, 0], sizes = [8, 32], strides = [1, 1]} : vector<8x128xf32> to vector<8x32xf32>
    %553 = vector.extract_strided_slice %550 {offsets = [0, 32], sizes = [8, 32], strides = [1, 1]} : vector<8x128xf32> to vector<8x32xf32>
    %554 = vector.extract_strided_slice %551 {offsets = [0, 64], sizes = [8, 32], strides = [1, 1]} : vector<8x128xf32> to vector<8x32xf32>
    %555 = vector.extract_strided_slice %550 {offsets = [0, 96], sizes = [8, 32], strides = [1, 1]} : vector<8x128xf32> to vector<8x32xf32>
    %556 = arith.mulf %553, %539 : vector<8x32xf32>
    %557 = arith.mulf %552, %554 : vector<8x32xf32>
    %558 = arith.addf %556, %557 : vector<8x32xf32>
    %559 = math.tanh %558 : vector<8x32xf32>
    %560 = arith.mulf %555, %559 : vector<8x32xf32>
    %c8_326 = arith.constant 8 : index
    %c0_327 = arith.constant 0 : index
    %561 = vector.load %arg7[%c8_326, %c0_327] : memref<80x32xf32, #tpu.memory_space<vmem>>, vector<8x32xf32>
    tpu.vector_store %arg7[%c8_326, %c0_327], %560 {strides = array<i32>} : memref<80x32xf32, #tpu.memory_space<vmem>>, vector<8x32xf32>,
    %c16_328 = arith.constant 16 : index
    %c0_329 = arith.constant 0 : index
    %562 = vector.load %arg8[%c16_328, %c0_329] : memref<80x128xf32, #tpu.memory_space<vmem>>, vector<8x128xf32>
    %cst_330 = arith.constant dense<0.000000e+00> : vector<8x128xf32>
    %563 = tpu.matmul %560, %521, %cst_330 {dimension_numbers = #tpu.dot_dimension_numbers<[1], [0], [0], [1], [0, 0, 1, 1], [], []>} : vector<8x32xf32>, vector<32x128xf32>, vector<8x128xf32> -> vector<8x128xf32>
    %564 = arith.addf %562, %563 : vector<8x128xf32>
    %565 = arith.negf %564 : vector<8x128xf32>
    %566 = math.exp %565 : vector<8x128xf32>
    %cst_331 = arith.constant 1.000000e+00 : f32
    %567 = vector.broadcast %cst_331 : f32 to vector<8x128xf32>
    %568 = arith.addf %567, %566 : vector<8x128xf32>
    %569 = arith.divf %567, %568 : vector<8x128xf32>
    %570 = math.tanh %564 : vector<8x128xf32>
    %571 = vector.extract_strided_slice %569 {offsets = [0, 0], sizes = [8, 32], strides = [1, 1]} : vector<8x128xf32> to vector<8x32xf32>
    %572 = vector.extract_strided_slice %569 {offsets = [0, 32], sizes = [8, 32], strides = [1, 1]} : vector<8x128xf32> to vector<8x32xf32>
    %573 = vector.extract_strided_slice %570 {offsets = [0, 64], sizes = [8, 32], strides = [1, 1]} : vector<8x128xf32> to vector<8x32xf32>
    %574 = vector.extract_strided_slice %569 {offsets = [0, 96], sizes = [8, 32], strides = [1, 1]} : vector<8x128xf32> to vector<8x32xf32>
    %575 = arith.mulf %572, %558 : vector<8x32xf32>
    %576 = arith.mulf %571, %573 : vector<8x32xf32>
    %577 = arith.addf %575, %576 : vector<8x32xf32>
    %578 = math.tanh %577 : vector<8x32xf32>
    %579 = arith.mulf %574, %578 : vector<8x32xf32>
    %c16_332 = arith.constant 16 : index
    %c0_333 = arith.constant 0 : index
    %580 = vector.load %arg7[%c16_332, %c0_333] : memref<80x32xf32, #tpu.memory_space<vmem>>, vector<8x32xf32>
    tpu.vector_store %arg7[%c16_332, %c0_333], %579 {strides = array<i32>} : memref<80x32xf32, #tpu.memory_space<vmem>>, vector<8x32xf32>,
    %c24_334 = arith.constant 24 : index
    %c0_335 = arith.constant 0 : index
    %581 = vector.load %arg8[%c24_334, %c0_335] : memref<80x128xf32, #tpu.memory_space<vmem>>, vector<8x128xf32>
    %cst_336 = arith.constant dense<0.000000e+00> : vector<8x128xf32>
    %582 = tpu.matmul %579, %521, %cst_336 {dimension_numbers = #tpu.dot_dimension_numbers<[1], [0], [0], [1], [0, 0, 1, 1], [], []>} : vector<8x32xf32>, vector<32x128xf32>, vector<8x128xf32> -> vector<8x128xf32>
    %583 = arith.addf %581, %582 : vector<8x128xf32>
    %584 = arith.negf %583 : vector<8x128xf32>
    %585 = math.exp %584 : vector<8x128xf32>
    %cst_337 = arith.constant 1.000000e+00 : f32
    %586 = vector.broadcast %cst_337 : f32 to vector<8x128xf32>
    %587 = arith.addf %586, %585 : vector<8x128xf32>
    %588 = arith.divf %586, %587 : vector<8x128xf32>
    %589 = math.tanh %583 : vector<8x128xf32>
    %590 = vector.extract_strided_slice %588 {offsets = [0, 0], sizes = [8, 32], strides = [1, 1]} : vector<8x128xf32> to vector<8x32xf32>
    %591 = vector.extract_strided_slice %588 {offsets = [0, 32], sizes = [8, 32], strides = [1, 1]} : vector<8x128xf32> to vector<8x32xf32>
    %592 = vector.extract_strided_slice %589 {offsets = [0, 64], sizes = [8, 32], strides = [1, 1]} : vector<8x128xf32> to vector<8x32xf32>
    %593 = vector.extract_strided_slice %588 {offsets = [0, 96], sizes = [8, 32], strides = [1, 1]} : vector<8x128xf32> to vector<8x32xf32>
    %594 = arith.mulf %591, %577 : vector<8x32xf32>
    %595 = arith.mulf %590, %592 : vector<8x32xf32>
    %596 = arith.addf %594, %595 : vector<8x32xf32>
    %597 = math.tanh %596 : vector<8x32xf32>
    %598 = arith.mulf %593, %597 : vector<8x32xf32>
    %c24_338 = arith.constant 24 : index
    %c0_339 = arith.constant 0 : index
    %599 = vector.load %arg7[%c24_338, %c0_339] : memref<80x32xf32, #tpu.memory_space<vmem>>, vector<8x32xf32>
    tpu.vector_store %arg7[%c24_338, %c0_339], %598 {strides = array<i32>} : memref<80x32xf32, #tpu.memory_space<vmem>>, vector<8x32xf32>,
    %c32_340 = arith.constant 32 : index
    %c0_341 = arith.constant 0 : index
    %600 = vector.load %arg8[%c32_340, %c0_341] : memref<80x128xf32, #tpu.memory_space<vmem>>, vector<8x128xf32>
    %cst_342 = arith.constant dense<0.000000e+00> : vector<8x128xf32>
    %601 = tpu.matmul %598, %521, %cst_342 {dimension_numbers = #tpu.dot_dimension_numbers<[1], [0], [0], [1], [0, 0, 1, 1], [], []>} : vector<8x32xf32>, vector<32x128xf32>, vector<8x128xf32> -> vector<8x128xf32>
    %602 = arith.addf %600, %601 : vector<8x128xf32>
    %603 = arith.negf %602 : vector<8x128xf32>
    %604 = math.exp %603 : vector<8x128xf32>
    %cst_343 = arith.constant 1.000000e+00 : f32
    %605 = vector.broadcast %cst_343 : f32 to vector<8x128xf32>
    %606 = arith.addf %605, %604 : vector<8x128xf32>
    %607 = arith.divf %605, %606 : vector<8x128xf32>
    %608 = math.tanh %602 : vector<8x128xf32>
    %609 = vector.extract_strided_slice %607 {offsets = [0, 0], sizes = [8, 32], strides = [1, 1]} : vector<8x128xf32> to vector<8x32xf32>
    %610 = vector.extract_strided_slice %607 {offsets = [0, 32], sizes = [8, 32], strides = [1, 1]} : vector<8x128xf32> to vector<8x32xf32>
    %611 = vector.extract_strided_slice %608 {offsets = [0, 64], sizes = [8, 32], strides = [1, 1]} : vector<8x128xf32> to vector<8x32xf32>
    %612 = vector.extract_strided_slice %607 {offsets = [0, 96], sizes = [8, 32], strides = [1, 1]} : vector<8x128xf32> to vector<8x32xf32>
    %613 = arith.mulf %610, %596 : vector<8x32xf32>
    %614 = arith.mulf %609, %611 : vector<8x32xf32>
    %615 = arith.addf %613, %614 : vector<8x32xf32>
    %616 = math.tanh %615 : vector<8x32xf32>
    %617 = arith.mulf %612, %616 : vector<8x32xf32>
    %c32_344 = arith.constant 32 : index
    %c0_345 = arith.constant 0 : index
    %618 = vector.load %arg7[%c32_344, %c0_345] : memref<80x32xf32, #tpu.memory_space<vmem>>, vector<8x32xf32>
    tpu.vector_store %arg7[%c32_344, %c0_345], %617 {strides = array<i32>} : memref<80x32xf32, #tpu.memory_space<vmem>>, vector<8x32xf32>,
    %c40_346 = arith.constant 40 : index
    %c0_347 = arith.constant 0 : index
    %619 = vector.load %arg8[%c40_346, %c0_347] : memref<80x128xf32, #tpu.memory_space<vmem>>, vector<8x128xf32>
    %cst_348 = arith.constant dense<0.000000e+00> : vector<8x128xf32>
    %620 = tpu.matmul %617, %521, %cst_348 {dimension_numbers = #tpu.dot_dimension_numbers<[1], [0], [0], [1], [0, 0, 1, 1], [], []>} : vector<8x32xf32>, vector<32x128xf32>, vector<8x128xf32> -> vector<8x128xf32>
    %621 = arith.addf %619, %620 : vector<8x128xf32>
    %622 = arith.negf %621 : vector<8x128xf32>
    %623 = math.exp %622 : vector<8x128xf32>
    %cst_349 = arith.constant 1.000000e+00 : f32
    %624 = vector.broadcast %cst_349 : f32 to vector<8x128xf32>
    %625 = arith.addf %624, %623 : vector<8x128xf32>
    %626 = arith.divf %624, %625 : vector<8x128xf32>
    %627 = math.tanh %621 : vector<8x128xf32>
    %628 = vector.extract_strided_slice %626 {offsets = [0, 0], sizes = [8, 32], strides = [1, 1]} : vector<8x128xf32> to vector<8x32xf32>
    %629 = vector.extract_strided_slice %626 {offsets = [0, 32], sizes = [8, 32], strides = [1, 1]} : vector<8x128xf32> to vector<8x32xf32>
    %630 = vector.extract_strided_slice %627 {offsets = [0, 64], sizes = [8, 32], strides = [1, 1]} : vector<8x128xf32> to vector<8x32xf32>
    %631 = vector.extract_strided_slice %626 {offsets = [0, 96], sizes = [8, 32], strides = [1, 1]} : vector<8x128xf32> to vector<8x32xf32>
    %632 = arith.mulf %629, %615 : vector<8x32xf32>
    %633 = arith.mulf %628, %630 : vector<8x32xf32>
    %634 = arith.addf %632, %633 : vector<8x32xf32>
    %635 = math.tanh %634 : vector<8x32xf32>
    %636 = arith.mulf %631, %635 : vector<8x32xf32>
    %c40_350 = arith.constant 40 : index
    %c0_351 = arith.constant 0 : index
    %637 = vector.load %arg7[%c40_350, %c0_351] : memref<80x32xf32, #tpu.memory_space<vmem>>, vector<8x32xf32>
    tpu.vector_store %arg7[%c40_350, %c0_351], %636 {strides = array<i32>} : memref<80x32xf32, #tpu.memory_space<vmem>>, vector<8x32xf32>,
    %c48_352 = arith.constant 48 : index
    %c0_353 = arith.constant 0 : index
    %638 = vector.load %arg8[%c48_352, %c0_353] : memref<80x128xf32, #tpu.memory_space<vmem>>, vector<8x128xf32>
    %cst_354 = arith.constant dense<0.000000e+00> : vector<8x128xf32>
    %639 = tpu.matmul %636, %521, %cst_354 {dimension_numbers = #tpu.dot_dimension_numbers<[1], [0], [0], [1], [0, 0, 1, 1], [], []>} : vector<8x32xf32>, vector<32x128xf32>, vector<8x128xf32> -> vector<8x128xf32>
    %640 = arith.addf %638, %639 : vector<8x128xf32>
    %641 = arith.negf %640 : vector<8x128xf32>
    %642 = math.exp %641 : vector<8x128xf32>
    %cst_355 = arith.constant 1.000000e+00 : f32
    %643 = vector.broadcast %cst_355 : f32 to vector<8x128xf32>
    %644 = arith.addf %643, %642 : vector<8x128xf32>
    %645 = arith.divf %643, %644 : vector<8x128xf32>
    %646 = math.tanh %640 : vector<8x128xf32>
    %647 = vector.extract_strided_slice %645 {offsets = [0, 0], sizes = [8, 32], strides = [1, 1]} : vector<8x128xf32> to vector<8x32xf32>
    %648 = vector.extract_strided_slice %645 {offsets = [0, 32], sizes = [8, 32], strides = [1, 1]} : vector<8x128xf32> to vector<8x32xf32>
    %649 = vector.extract_strided_slice %646 {offsets = [0, 64], sizes = [8, 32], strides = [1, 1]} : vector<8x128xf32> to vector<8x32xf32>
    %650 = vector.extract_strided_slice %645 {offsets = [0, 96], sizes = [8, 32], strides = [1, 1]} : vector<8x128xf32> to vector<8x32xf32>
    %651 = arith.mulf %648, %634 : vector<8x32xf32>
    %652 = arith.mulf %647, %649 : vector<8x32xf32>
    %653 = arith.addf %651, %652 : vector<8x32xf32>
    %654 = math.tanh %653 : vector<8x32xf32>
    %655 = arith.mulf %650, %654 : vector<8x32xf32>
    %c48_356 = arith.constant 48 : index
    %c0_357 = arith.constant 0 : index
    %656 = vector.load %arg7[%c48_356, %c0_357] : memref<80x32xf32, #tpu.memory_space<vmem>>, vector<8x32xf32>
    tpu.vector_store %arg7[%c48_356, %c0_357], %655 {strides = array<i32>} : memref<80x32xf32, #tpu.memory_space<vmem>>, vector<8x32xf32>,
    %c56_358 = arith.constant 56 : index
    %c0_359 = arith.constant 0 : index
    %657 = vector.load %arg8[%c56_358, %c0_359] : memref<80x128xf32, #tpu.memory_space<vmem>>, vector<8x128xf32>
    %cst_360 = arith.constant dense<0.000000e+00> : vector<8x128xf32>
    %658 = tpu.matmul %655, %521, %cst_360 {dimension_numbers = #tpu.dot_dimension_numbers<[1], [0], [0], [1], [0, 0, 1, 1], [], []>} : vector<8x32xf32>, vector<32x128xf32>, vector<8x128xf32> -> vector<8x128xf32>
    %659 = arith.addf %657, %658 : vector<8x128xf32>
    %660 = arith.negf %659 : vector<8x128xf32>
    %661 = math.exp %660 : vector<8x128xf32>
    %cst_361 = arith.constant 1.000000e+00 : f32
    %662 = vector.broadcast %cst_361 : f32 to vector<8x128xf32>
    %663 = arith.addf %662, %661 : vector<8x128xf32>
    %664 = arith.divf %662, %663 : vector<8x128xf32>
    %665 = math.tanh %659 : vector<8x128xf32>
    %666 = vector.extract_strided_slice %664 {offsets = [0, 0], sizes = [8, 32], strides = [1, 1]} : vector<8x128xf32> to vector<8x32xf32>
    %667 = vector.extract_strided_slice %664 {offsets = [0, 32], sizes = [8, 32], strides = [1, 1]} : vector<8x128xf32> to vector<8x32xf32>
    %668 = vector.extract_strided_slice %665 {offsets = [0, 64], sizes = [8, 32], strides = [1, 1]} : vector<8x128xf32> to vector<8x32xf32>
    %669 = vector.extract_strided_slice %664 {offsets = [0, 96], sizes = [8, 32], strides = [1, 1]} : vector<8x128xf32> to vector<8x32xf32>
    %670 = arith.mulf %667, %653 : vector<8x32xf32>
    %671 = arith.mulf %666, %668 : vector<8x32xf32>
    %672 = arith.addf %670, %671 : vector<8x32xf32>
    %673 = math.tanh %672 : vector<8x32xf32>
    %674 = arith.mulf %669, %673 : vector<8x32xf32>
    %c56_362 = arith.constant 56 : index
    %c0_363 = arith.constant 0 : index
    %675 = vector.load %arg7[%c56_362, %c0_363] : memref<80x32xf32, #tpu.memory_space<vmem>>, vector<8x32xf32>
    tpu.vector_store %arg7[%c56_362, %c0_363], %674 {strides = array<i32>} : memref<80x32xf32, #tpu.memory_space<vmem>>, vector<8x32xf32>,
    %c64_364 = arith.constant 64 : index
    %c0_365 = arith.constant 0 : index
    %676 = vector.load %arg8[%c64_364, %c0_365] : memref<80x128xf32, #tpu.memory_space<vmem>>, vector<8x128xf32>
    %cst_366 = arith.constant dense<0.000000e+00> : vector<8x128xf32>
    %677 = tpu.matmul %674, %521, %cst_366 {dimension_numbers = #tpu.dot_dimension_numbers<[1], [0], [0], [1], [0, 0, 1, 1], [], []>} : vector<8x32xf32>, vector<32x128xf32>, vector<8x128xf32> -> vector<8x128xf32>
    %678 = arith.addf %676, %677 : vector<8x128xf32>
    %679 = arith.negf %678 : vector<8x128xf32>
    %680 = math.exp %679 : vector<8x128xf32>
    %cst_367 = arith.constant 1.000000e+00 : f32
    %681 = vector.broadcast %cst_367 : f32 to vector<8x128xf32>
    %682 = arith.addf %681, %680 : vector<8x128xf32>
    %683 = arith.divf %681, %682 : vector<8x128xf32>
    %684 = math.tanh %678 : vector<8x128xf32>
    %685 = vector.extract_strided_slice %683 {offsets = [0, 0], sizes = [8, 32], strides = [1, 1]} : vector<8x128xf32> to vector<8x32xf32>
    %686 = vector.extract_strided_slice %683 {offsets = [0, 32], sizes = [8, 32], strides = [1, 1]} : vector<8x128xf32> to vector<8x32xf32>
    %687 = vector.extract_strided_slice %684 {offsets = [0, 64], sizes = [8, 32], strides = [1, 1]} : vector<8x128xf32> to vector<8x32xf32>
    %688 = vector.extract_strided_slice %683 {offsets = [0, 96], sizes = [8, 32], strides = [1, 1]} : vector<8x128xf32> to vector<8x32xf32>
    %689 = arith.mulf %686, %672 : vector<8x32xf32>
    %690 = arith.mulf %685, %687 : vector<8x32xf32>
    %691 = arith.addf %689, %690 : vector<8x32xf32>
    %692 = math.tanh %691 : vector<8x32xf32>
    %693 = arith.mulf %688, %692 : vector<8x32xf32>
    %c64_368 = arith.constant 64 : index
    %c0_369 = arith.constant 0 : index
    %694 = vector.load %arg7[%c64_368, %c0_369] : memref<80x32xf32, #tpu.memory_space<vmem>>, vector<8x32xf32>
    tpu.vector_store %arg7[%c64_368, %c0_369], %693 {strides = array<i32>} : memref<80x32xf32, #tpu.memory_space<vmem>>, vector<8x32xf32>,
    %c72_370 = arith.constant 72 : index
    %c0_371 = arith.constant 0 : index
    %695 = vector.load %arg8[%c72_370, %c0_371] : memref<80x128xf32, #tpu.memory_space<vmem>>, vector<8x128xf32>
    %cst_372 = arith.constant dense<0.000000e+00> : vector<8x128xf32>
    %696 = tpu.matmul %693, %521, %cst_372 {dimension_numbers = #tpu.dot_dimension_numbers<[1], [0], [0], [1], [0, 0, 1, 1], [], []>} : vector<8x32xf32>, vector<32x128xf32>, vector<8x128xf32> -> vector<8x128xf32>
    %697 = arith.addf %695, %696 : vector<8x128xf32>
    %698 = arith.negf %697 : vector<8x128xf32>
    %699 = math.exp %698 : vector<8x128xf32>
    %cst_373 = arith.constant 1.000000e+00 : f32
    %700 = vector.broadcast %cst_373 : f32 to vector<8x128xf32>
    %701 = arith.addf %700, %699 : vector<8x128xf32>
    %702 = arith.divf %700, %701 : vector<8x128xf32>
    %703 = math.tanh %697 : vector<8x128xf32>
    %704 = vector.extract_strided_slice %702 {offsets = [0, 0], sizes = [8, 32], strides = [1, 1]} : vector<8x128xf32> to vector<8x32xf32>
    %705 = vector.extract_strided_slice %702 {offsets = [0, 32], sizes = [8, 32], strides = [1, 1]} : vector<8x128xf32> to vector<8x32xf32>
    %706 = vector.extract_strided_slice %703 {offsets = [0, 64], sizes = [8, 32], strides = [1, 1]} : vector<8x128xf32> to vector<8x32xf32>
    %707 = vector.extract_strided_slice %702 {offsets = [0, 96], sizes = [8, 32], strides = [1, 1]} : vector<8x128xf32> to vector<8x32xf32>
    %708 = arith.mulf %705, %691 : vector<8x32xf32>
    %709 = arith.mulf %704, %706 : vector<8x32xf32>
    %710 = arith.addf %708, %709 : vector<8x32xf32>
    %711 = math.tanh %710 : vector<8x32xf32>
    %712 = arith.mulf %707, %711 : vector<8x32xf32>
    %c72_374 = arith.constant 72 : index
    %c0_375 = arith.constant 0 : index
    %713 = vector.load %arg7[%c72_374, %c0_375] : memref<80x32xf32, #tpu.memory_space<vmem>>, vector<8x32xf32>
    tpu.vector_store %arg7[%c72_374, %c0_375], %712 {strides = array<i32>} : memref<80x32xf32, #tpu.memory_space<vmem>>, vector<8x32xf32>,
    return
  }
  func.func @transform_0(%arg0: i32, %arg1: memref<80xi32, #tpu.memory_space<smem>>) -> (i32, i32) {
    %c0_i32 = arith.constant 0 : i32
    %c0_i32_0 = arith.constant 0 : i32
    %c0_i32_1 = arith.constant 0 : i32
    return %c0_i32, %c0_i32_0 : i32, i32
  }
  func.func @transform_1(%arg0: i32, %arg1: memref<80xi32, #tpu.memory_space<smem>>) -> (i32, i32) {
    %c0_i32 = arith.constant 0 : i32
    %c0_i32_0 = arith.constant 0 : i32
    %c0_i32_1 = arith.constant 0 : i32
    return %c0_i32, %c0_i32_0 : i32, i32
  }
  func.func @transform_2(%arg0: i32, %arg1: memref<80xi32, #tpu.memory_space<smem>>) -> (i32, i32) {
    %c0_i32 = arith.constant 0 : i32
    %c0_i32_0 = arith.constant 0 : i32
    %c0_i32_1 = arith.constant 0 : i32
    return %c0_i32, %c0_i32_0 : i32, i32
  }
  func.func @transform_3(%arg0: i32, %arg1: memref<80xi32, #tpu.memory_space<smem>>) -> (i32, i32) {
    %c0_i32 = arith.constant 0 : i32
    %c0_i32_0 = arith.constant 0 : i32
    %c0_i32_1 = arith.constant 0 : i32
    return %c0_i32, %c0_i32_0 : i32, i32
  }
  func.func @transform_4(%arg0: i32, %arg1: memref<80xi32, #tpu.memory_space<smem>>) -> (i32, i32) {
    %c0_i32 = arith.constant 0 : i32
    %c0_i32_0 = arith.constant 0 : i32
    %c0_i32_1 = arith.constant 0 : i32
    return %c0_i32, %c0_i32_0 : i32, i32
  }
  func.func @transform_5(%arg0: i32, %arg1: memref<80xi32, #tpu.memory_space<smem>>) -> (i32, i32) {
    %c0_i32 = arith.constant 0 : i32
    %c0_i32_0 = arith.constant 0 : i32
    %c0_i32_1 = arith.constant 0 : i32
    return %c0_i32, %c0_i32_0 : i32, i32
  }
}

</mosaic_0001>

<llo_original>
// kernel: encoder_forward.1
$region0: #{encoder_forward.1}
  #allocation0 [shape = 'u32[]', space=smem, size = 0x4, offset = 0x4, fixed_abs, tag = 'smem constant byte address 0x4 - core index']
  #allocation1 [shape = 'u32[144,128]{1,0:T(1,128)}', space=vmem, size = 0x12000, scoped, tag = 'internal scratch']
  #allocation2 [shape = 'f32[80,128]{1,0:T(8,128)}', space=vmem, size = 0xa000, scoped, tag = 'scratch operand']
  #allocation3 [shape = 'f32[80,32]{1,0:T(8,128)}', space=vmem, size = 0xa000, scoped, tag = 'scratch operand']
  #allocation4 [shape = 's32[1]{0}', space=sflag, size = 0x4, scoped, tag = 'scoped memory for encoder_forward.1']
  #allocation5 [shape = 'u8[512]{0}', space=smem, size = 0x200, scoped, tag = 'prefetched SMEM operand 0']
  %s0 = inlined_call_operand.vmem [shape: s32[80], index: 0, kind: input, shape index: {}]
  %s1 = inlined_call_operand.hbm [shape: f32[50,128], index: 1, kind: input, shape index: {}]
  %s2 = inlined_call_operand.vmem [shape: f32[32,128], index: 2, kind: input, shape index: {}]
  %s3 = inlined_call_operand.vmem [shape: bf16[32,128], index: 3, kind: input, shape index: {}]
  %s4 = inlined_call_operand.hbm [shape: f32[32,128], index: 4, kind: input, shape index: {}]
  %s5 = inlined_call_operand.hbm [shape: f32[1,128], index: 5, kind: input, shape index: {}]
  %s6 = inlined_call_operand.hbm [shape: f32[80,32], index: 6, kind: output, shape index: {}]
  %s7 = sld [smem:[#allocation0]]
  $region42: #{encoder_forward.1} parent=0
    _
  %s9 = ssub.s32 1, %s7
  %s10 = scalar_select 0, %s9, %s7
  %s11 = sshll.u32 %s0, 4
  %s12 = int_to_ptr.vmem [resolvable:$true] %s11
  %14 = dma.vmem_to_smem %s12, 16, [#allocation5], [#allocation4]
  %15 = dma.done [#allocation4], 16
  %16 = sfence
  $region1: #{encoder_forward.1} parent=0
    #allocation6 [shape = 'u8[28672]{0}', space=vmem, size = 0x7000, scoped, tag = 'input window, operand 1, single buffered']
    #allocation7 [shape = 's32[1]{0}', space=sflag, size = 0x4, scoped, tag = 'scoped memory for encoder_forward.1']
    #allocation8 [shape = 's32[1]{0}', space=sflag, size = 0x4, scoped, tag = 'scoped memory for encoder_forward.1']
    #allocation9 [shape = 'u8[16384]{0}', space=vmem, size = 0x4000, scoped, tag = 'input window, operand 4, single buffered']
    #allocation10 [shape = 's32[1]{0}', space=sflag, size = 0x4, scoped, tag = 'scoped memory for encoder_forward.1']
    #allocation11 [shape = 'u8[512]{0}', space=vmem, size = 0x400, scoped, tag = 'input window, operand 5, single buffered']
    #allocation12 [shape = 'u8[40960]{0}', space=vmem, size = 0xa000, scoped, tag = 'output window, operand 0, single buffered']
    %17 = vsyncpa [#allocation7], 0
    %18 = vsyncpa [#allocation10], 0
    %19 = vsyncpa [#allocation8], 0
    // Predicated region
    $region2: #{encoder_forward.1} parent=1 // pred_check
      _
    $region3: #{encoder_forward.1} parent=1 // pred_check_branch
      %21 = sbr.rel (0) target = $region5
    $region4: #{encoder_forward.1} parent=1 // pred_region
      %s23 = ssub.s32 896, 896
      %24 = vsyncadd [#allocation7], %s23
      %s25 = sshll.u32 [#allocation6], 4
      %s26 = int_to_ptr.vmem [resolvable:$true] %s25
      %31 = dma.hbm_to_vmem [thread:$0]  %s1, 896, %s26, [#allocation7], 128, 128, 8
    $region5: #{encoder_forward.1} parent=1 // pred_fallthru
      _
    // Predicated region
    $region6: #{encoder_forward.1} parent=1 // pred_check
      _
    $region7: #{encoder_forward.1} parent=1 // pred_check_branch
      %33 = sbr.rel (0) target = $region9
    $region8: #{encoder_forward.1} parent=1 // pred_region
      _
    $region9: #{encoder_forward.1} parent=1 // pred_fallthru
      _
    // Predicated region
    $region10: #{encoder_forward.1} parent=1 // pred_check
      _
    $region11: #{encoder_forward.1} parent=1 // pred_check_branch
      %35 = sbr.rel (0) target = $region13
    $region12: #{encoder_forward.1} parent=1 // pred_region
      _
    $region13: #{encoder_forward.1} parent=1 // pred_fallthru
      _
    // Predicated region
    $region14: #{encoder_forward.1} parent=1 // pred_check
      _
    $region15: #{encoder_forward.1} parent=1 // pred_check_branch
      %37 = sbr.rel (0) target = $region17
    $region16: #{encoder_forward.1} parent=1 // pred_region
      %s39 = ssub.s32 512, 512
      %40 = vsyncadd [#allocation10], %s39
      %s41 = sshll.u32 [#allocation9], 4
      %s42 = int_to_ptr.vmem [resolvable:$true] %s41
      %47 = dma.hbm_to_vmem [thread:$0]  %s4, 512, %s42, [#allocation10], 128, 128, 8
    $region17: #{encoder_forward.1} parent=1 // pred_fallthru
      _
    // Predicated region
    $region18: #{encoder_forward.1} parent=1 // pred_check
      _
    $region19: #{encoder_forward.1} parent=1 // pred_check_branch
      %49 = sbr.rel (0) target = $region21
    $region20: #{encoder_forward.1} parent=1 // pred_region
      %s51 = ssub.s32 16, 16
      %52 = vsyncadd [#allocation10], %s51
      %s54 = sshll.u32 [#allocation11], 4
      %s55 = int_to_ptr.vmem [resolvable:$true] %s54
      %57 = dma.hbm_to_vmem [thread:$0]  %s5, 16, %s55, [#allocation10]
    $region21: #{encoder_forward.1} parent=1 // pred_fallthru
      _
    // Predicated region
    $region22: #{encoder_forward.1} parent=1 // pred_check
      _
    $region23: #{encoder_forward.1} parent=1 // pred_check_branch
      %59 = sbr.rel (0) target = $region25
    $region24: #{encoder_forward.1} parent=1 // pred_region
      %60 = dma.done [#allocation7], 896
    $region25: #{encoder_forward.1} parent=1 // pred_fallthru
      _
    // Predicated region
    $region26: #{encoder_forward.1} parent=1 // pred_check
      _
    $region27: #{encoder_forward.1} parent=1 // pred_check_branch
      %62 = sbr.rel (0) target = $region29
    $region28: #{encoder_forward.1} parent=1 // pred_region
      %63 = dma.done [#allocation10], 512
    $region29: #{encoder_forward.1} parent=1 // pred_fallthru
      _
    // Predicated region
    $region30: #{encoder_forward.1} parent=1 // pred_check
      _
    $region31: #{encoder_forward.1} parent=1 // pred_check_branch
      %65 = sbr.rel (0) target = $region33
    $region32: #{encoder_forward.1} parent=1 // pred_region
      %66 = dma.done [#allocation10], 16
    $region33: #{encoder_forward.1} parent=1 // pred_fallthru
      _
    %s68 = sld [smem:[#allocation5]]
    %s69 = scalar_lea.vmem [#allocation6], %s68
    %v70 = vld [vmem:[%s69] sm:$0x1]
    %71 = vst [vmem:[#allocation2] sm:$0x1] %v70
    %s72 = sld [smem:[#allocation5 + $0x1]]
    %s73 = scalar_lea.vmem [#allocation6], %s72
    %v74 = vld [vmem:[%s73] sm:$0x1]
    %75 = vst [vmem:[#allocation2 + $0x1] sm:$0x1] %v74
    %s76 = sld [smem:[#allocation5 + $0x2]]
    %s77 = scalar_lea.vmem [#allocation6], %s76
    %v78 = vld [vmem:[%s77] sm:$0x1]
    %79 = vst [vmem:[#allocation2 + $0x2] sm:$0x1] %v78
    %s80 = sld [smem:[#allocation5 + $0x3]]
    %s81 = scalar_lea.vmem [#allocation6], %s80
    %v82 = vld [vmem:[%s81] sm:$0x1]
    %83 = vst [vmem:[#allocation2 + $0x3] sm:$0x1] %v82
    %s84 = sld [smem:[#allocation5 + $0x4]]
    %s85 = scalar_lea.vmem [#allocation6], %s84
    %v86 = vld [vmem:[%s85] sm:$0x1]
    %87 = vst [vmem:[#allocation2 + $0x4] sm:$0x1] %v86
    %s88 = sld [smem:[#allocation5 + $0x5]]
    %s89 = scalar_lea.vmem [#allocation6], %s88
    %v90 = vld [vmem:[%s89] sm:$0x1]
    %91 = vst [vmem:[#allocation2 + $0x5] sm:$0x1] %v90
    %s92 = sld [smem:[#allocation5 + $0x6]]
    %s93 = scalar_lea.vmem [#allocation6], %s92
    %v94 = vld [vmem:[%s93] sm:$0x1]
    %95 = vst [vmem:[#allocation2 + $0x6] sm:$0x1] %v94
    %s96 = sld [smem:[#allocation5 + $0x7]]
    %s97 = scalar_lea.vmem [#allocation6], %s96
    %v98 = vld [vmem:[%s97] sm:$0x1]
    %99 = vst [vmem:[#allocation2 + $0x7] sm:$0x1] %v98
    %s100 = sld [smem:[#allocation5 + $0x8]]
    %s101 = scalar_lea.vmem [#allocation6], %s100
    %v102 = vld [vmem:[%s101] sm:$0x1]
    %103 = vst [vmem:[#allocation2 + $0x8] sm:$0x1] %v102
    %s104 = sld [smem:[#allocation5 + $0x9]]
    %s105 = scalar_lea.vmem [#allocation6], %s104
    %v106 = vld [vmem:[%s105] sm:$0x1]
    %107 = vst [vmem:[#allocation2 + $0x9] sm:$0x1] %v106
    %s108 = sld [smem:[#allocation5 + $0xa]]
    %s109 = scalar_lea.vmem [#allocation6], %s108
    %v110 = vld [vmem:[%s109] sm:$0x1]
    %111 = vst [vmem:[#allocation2 + $0xa] sm:$0x1] %v110
    %s112 = sld [smem:[#allocation5 + $0xb]]
    %s113 = scalar_lea.vmem [#allocation6], %s112
    %v114 = vld [vmem:[%s113] sm:$0x1]
    %115 = vst [vmem:[#allocation2 + $0xb] sm:$0x1] %v114
    %s116 = sld [smem:[#allocation5 + $0xc]]
    %s117 = scalar_lea.vmem [#allocation6], %s116
    %v118 = vld [vmem:[%s117] sm:$0x1]
    %119 = vst [vmem:[#allocation2 + $0xc] sm:$0x1] %v118
    %s120 = sld [smem:[#allocation5 + $0xd]]
    %s121 = scalar_lea.vmem [#allocation6], %s120
    %v122 = vld [vmem:[%s121] sm:$0x1]
    %123 = vst [vmem:[#allocation2 + $0xd] sm:$0x1] %v122
    %s124 = sld [smem:[#allocation5 + $0xe]]
    %s125 = scalar_lea.vmem [#allocation6], %s124
    %v126 = vld [vmem:[%s125] sm:$0x1]
    %127 = vst [vmem:[#allocation2 + $0xe] sm:$0x1] %v126
    %s128 = sld [smem:[#allocation5 + $0xf]]
    %s129 = scalar_lea.vmem [#allocation6], %s128
    %v130 = vld [vmem:[%s129] sm:$0x1]
    %131 = vst [vmem:[#allocation2 + $0xf] sm:$0x1] %v130
    %s132 = sld [smem:[#allocation5 + $0x10]]
    %s133 = scalar_lea.vmem [#allocation6], %s132
    %v134 = vld [vmem:[%s133] sm:$0x1]
    %135 = vst [vmem:[#allocation2 + $0x10] sm:$0x1] %v134
    %s136 = sld [smem:[#allocation5 + $0x11]]
    %s137 = scalar_lea.vmem [#allocation6], %s136
    %v138 = vld [vmem:[%s137] sm:$0x1]
    %139 = vst [vmem:[#allocation2 + $0x11] sm:$0x1] %v138
    %s140 = sld [smem:[#allocation5 + $0x12]]
    %s141 = scalar_lea.vmem [#allocation6], %s140
    %v142 = vld [vmem:[%s141] sm:$0x1]
    %143 = vst [vmem:[#allocation2 + $0x12] sm:$0x1] %v142
    %s144 = sld [smem:[#allocation5 + $0x13]]
    %s145 = scalar_lea.vmem [#allocation6], %s144
    %v146 = vld [vmem:[%s145] sm:$0x1]
    %147 = vst [vmem:[#allocation2 + $0x13] sm:$0x1] %v146
    %s148 = sld [smem:[#allocation5 + $0x14]]
    %s149 = scalar_lea.vmem [#allocation6], %s148
    %v150 = vld [vmem:[%s149] sm:$0x1]
    %151 = vst [vmem:[#allocation2 + $0x14] sm:$0x1] %v150
    %s152 = sld [smem:[#allocation5 + $0x15]]
    %s153 = scalar_lea.vmem [#allocation6], %s152
    %v154 = vld [vmem:[%s153] sm:$0x1]
    %155 = vst [vmem:[#allocation2 + $0x15] sm:$0x1] %v154
    %s156 = sld [smem:[#allocation5 + $0x16]]
    %s157 = scalar_lea.vmem [#allocation6], %s156
    %v158 = vld [vmem:[%s157] sm:$0x1]
    %159 = vst [vmem:[#allocation2 + $0x16] sm:$0x1] %v158
    %s160 = sld [smem:[#allocation5 + $0x17]]
    %s161 = scalar_lea.vmem [#allocation6], %s160
    %v162 = vld [vmem:[%s161] sm:$0x1]
    %163 = vst [vmem:[#allocation2 + $0x17] sm:$0x1] %v162
    %s164 = sld [smem:[#allocation5 + $0x18]]
    %s165 = scalar_lea.vmem [#allocation6], %s164
    %v166 = vld [vmem:[%s165] sm:$0x1]
    %167 = vst [vmem:[#allocation2 + $0x18] sm:$0x1] %v166
    %s168 = sld [smem:[#allocation5 + $0x19]]
    %s169 = scalar_lea.vmem [#allocation6], %s168
    %v170 = vld [vmem:[%s169] sm:$0x1]
    %171 = vst [vmem:[#allocation2 + $0x19] sm:$0x1] %v170
    %s172 = sld [smem:[#allocation5 + $0x1a]]
    %s173 = scalar_lea.vmem [#allocation6], %s172
    %v174 = vld [vmem:[%s173] sm:$0x1]
    %175 = vst [vmem:[#allocation2 + $0x1a] sm:$0x1] %v174
    %s176 = sld [smem:[#allocation5 + $0x1b]]
    %s177 = scalar_lea.vmem [#allocation6], %s176
    %v178 = vld [vmem:[%s177] sm:$0x1]
    %179 = vst [vmem:[#allocation2 + $0x1b] sm:$0x1] %v178
    %s180 = sld [smem:[#allocation5 + $0x1c]]
    %s181 = scalar_lea.vmem [#allocation6], %s180
    %v182 = vld [vmem:[%s181] sm:$0x1]
    %183 = vst [vmem:[#allocation2 + $0x1c] sm:$0x1] %v182
    %s184 = sld [smem:[#allocation5 + $0x1d]]
    %s185 = scalar_lea.vmem [#allocation6], %s184
    %v186 = vld [vmem:[%s185] sm:$0x1]
    %187 = vst [vmem:[#allocation2 + $0x1d] sm:$0x1] %v186
    %s188 = sld [smem:[#allocation5 + $0x1e]]
    %s189 = scalar_lea.vmem [#allocation6], %s188
    %v190 = vld [vmem:[%s189] sm:$0x1]
    %191 = vst [vmem:[#allocation2 + $0x1e] sm:$0x1] %v190
    %s192 = sld [smem:[#allocation5 + $0x1f]]
    %s193 = scalar_lea.vmem [#allocation6], %s192
    %v194 = vld [vmem:[%s193] sm:$0x1]
    %195 = vst [vmem:[#allocation2 + $0x1f] sm:$0x1] %v194
    %s196 = sld [smem:[#allocation5 + $0x20]]
    %s197 = scalar_lea.vmem [#allocation6], %s196
    %v198 = vld [vmem:[%s197] sm:$0x1]
    %199 = vst [vmem:[#allocation2 + $0x20] sm:$0x1] %v198
    %s200 = sld [smem:[#allocation5 + $0x21]]
    %s201 = scalar_lea.vmem [#allocation6], %s200
    %v202 = vld [vmem:[%s201] sm:$0x1]
    %203 = vst [vmem:[#allocation2 + $0x21] sm:$0x1] %v202
    %s204 = sld [smem:[#allocation5 + $0x22]]
    %s205 = scalar_lea.vmem [#allocation6], %s204
    %v206 = vld [vmem:[%s205] sm:$0x1]
    %207 = vst [vmem:[#allocation2 + $0x22] sm:$0x1] %v206
    %s208 = sld [smem:[#allocation5 + $0x23]]
    %s209 = scalar_lea.vmem [#allocation6], %s208
    %v210 = vld [vmem:[%s209] sm:$0x1]
    %211 = vst [vmem:[#allocation2 + $0x23] sm:$0x1] %v210
    %s212 = sld [smem:[#allocation5 + $0x24]]
    %s213 = scalar_lea.vmem [#allocation6], %s212
    %v214 = vld [vmem:[%s213] sm:$0x1]
    %215 = vst [vmem:[#allocation2 + $0x24] sm:$0x1] %v214
    %s216 = sld [smem:[#allocation5 + $0x25]]
    %s217 = scalar_lea.vmem [#allocation6], %s216
    %v218 = vld [vmem:[%s217] sm:$0x1]
    %219 = vst [vmem:[#allocation2 + $0x25] sm:$0x1] %v218
    %s220 = sld [smem:[#allocation5 + $0x26]]
    %s221 = scalar_lea.vmem [#allocation6], %s220
    %v222 = vld [vmem:[%s221] sm:$0x1]
    %223 = vst [vmem:[#allocation2 + $0x26] sm:$0x1] %v222
    %s224 = sld [smem:[#allocation5 + $0x27]]
    %s225 = scalar_lea.vmem [#allocation6], %s224
    %v226 = vld [vmem:[%s225] sm:$0x1]
    %227 = vst [vmem:[#allocation2 + $0x27] sm:$0x1] %v226
    %s228 = sld [smem:[#allocation5 + $0x28]]
    %s229 = scalar_lea.vmem [#allocation6], %s228
    %v230 = vld [vmem:[%s229] sm:$0x1]
    %231 = vst [vmem:[#allocation2 + $0x28] sm:$0x1] %v230
    %s232 = sld [smem:[#allocation5 + $0x29]]
    %s233 = scalar_lea.vmem [#allocation6], %s232
    %v234 = vld [vmem:[%s233] sm:$0x1]
    %235 = vst [vmem:[#allocation2 + $0x29] sm:$0x1] %v234
    %s236 = sld [smem:[#allocation5 + $0x2a]]
    %s237 = scalar_lea.vmem [#allocation6], %s236
    %v238 = vld [vmem:[%s237] sm:$0x1]
    %239 = vst [vmem:[#allocation2 + $0x2a] sm:$0x1] %v238
    %s240 = sld [smem:[#allocation5 + $0x2b]]
    %s241 = scalar_lea.vmem [#allocation6], %s240
    %v242 = vld [vmem:[%s241] sm:$0x1]
    %243 = vst [vmem:[#allocation2 + $0x2b] sm:$0x1] %v242
    %s244 = sld [smem:[#allocation5 + $0x2c]]
    %s245 = scalar_lea.vmem [#allocation6], %s244
    %v246 = vld [vmem:[%s245] sm:$0x1]
    %247 = vst [vmem:[#allocation2 + $0x2c] sm:$0x1] %v246
    %s248 = sld [smem:[#allocation5 + $0x2d]]
    %s249 = scalar_lea.vmem [#allocation6], %s248
    %v250 = vld [vmem:[%s249] sm:$0x1]
    %251 = vst [vmem:[#allocation2 + $0x2d] sm:$0x1] %v250
    %s252 = sld [smem:[#allocation5 + $0x2e]]
    %s253 = scalar_lea.vmem [#allocation6], %s252
    %v254 = vld [vmem:[%s253] sm:$0x1]
    %255 = vst [vmem:[#allocation2 + $0x2e] sm:$0x1] %v254
    %s256 = sld [smem:[#allocation5 + $0x2f]]
    %s257 = scalar_lea.vmem [#allocation6], %s256
    %v258 = vld [vmem:[%s257] sm:$0x1]
    %259 = vst [vmem:[#allocation2 + $0x2f] sm:$0x1] %v258
    %s260 = sld [smem:[#allocation5 + $0x30]]
    %s261 = scalar_lea.vmem [#allocation6], %s260
    %v262 = vld [vmem:[%s261] sm:$0x1]
    %263 = vst [vmem:[#allocation2 + $0x30] sm:$0x1] %v262
    %s264 = sld [smem:[#allocation5 + $0x31]]
    %s265 = scalar_lea.vmem [#allocation6], %s264
    %v266 = vld [vmem:[%s265] sm:$0x1]
    %267 = vst [vmem:[#allocation2 + $0x31] sm:$0x1] %v266
    %s268 = sld [smem:[#allocation5 + $0x32]]
    %s269 = scalar_lea.vmem [#allocation6], %s268
    %v270 = vld [vmem:[%s269] sm:$0x1]
    %271 = vst [vmem:[#allocation2 + $0x32] sm:$0x1] %v270
    %s272 = sld [smem:[#allocation5 + $0x33]]
    %s273 = scalar_lea.vmem [#allocation6], %s272
    %v274 = vld [vmem:[%s273] sm:$0x1]
    %275 = vst [vmem:[#allocation2 + $0x33] sm:$0x1] %v274
    %s276 = sld [smem:[#allocation5 + $0x34]]
    %s277 = scalar_lea.vmem [#allocation6], %s276
    %v278 = vld [vmem:[%s277] sm:$0x1]
    %279 = vst [vmem:[#allocation2 + $0x34] sm:$0x1] %v278
    %s280 = sld [smem:[#allocation5 + $0x35]]
    %s281 = scalar_lea.vmem [#allocation6], %s280
    %v282 = vld [vmem:[%s281] sm:$0x1]
    %283 = vst [vmem:[#allocation2 + $0x35] sm:$0x1] %v282
    %s284 = sld [smem:[#allocation5 + $0x36]]
    %s285 = scalar_lea.vmem [#allocation6], %s284
    %v286 = vld [vmem:[%s285] sm:$0x1]
    %287 = vst [vmem:[#allocation2 + $0x36] sm:$0x1] %v286
    %s288 = sld [smem:[#allocation5 + $0x37]]
    %s289 = scalar_lea.vmem [#allocation6], %s288
    %v290 = vld [vmem:[%s289] sm:$0x1]
    %291 = vst [vmem:[#allocation2 + $0x37] sm:$0x1] %v290
    %s292 = sld [smem:[#allocation5 + $0x38]]
    %s293 = scalar_lea.vmem [#allocation6], %s292
    %v294 = vld [vmem:[%s293] sm:$0x1]
    %295 = vst [vmem:[#allocation2 + $0x38] sm:$0x1] %v294
    %s296 = sld [smem:[#allocation5 + $0x39]]
    %s297 = scalar_lea.vmem [#allocation6], %s296
    %v298 = vld [vmem:[%s297] sm:$0x1]
    %299 = vst [vmem:[#allocation2 + $0x39] sm:$0x1] %v298
    %s300 = sld [smem:[#allocation5 + $0x3a]]
    %s301 = scalar_lea.vmem [#allocation6], %s300
    %v302 = vld [vmem:[%s301] sm:$0x1]
    %303 = vst [vmem:[#allocation2 + $0x3a] sm:$0x1] %v302
    %s304 = sld [smem:[#allocation5 + $0x3b]]
    %s305 = scalar_lea.vmem [#allocation6], %s304
    %v306 = vld [vmem:[%s305] sm:$0x1]
    %307 = vst [vmem:[#allocation2 + $0x3b] sm:$0x1] %v306
    %s308 = sld [smem:[#allocation5 + $0x3c]]
    %s309 = scalar_lea.vmem [#allocation6], %s308
    %v310 = vld [vmem:[%s309] sm:$0x1]
    %311 = vst [vmem:[#allocation2 + $0x3c] sm:$0x1] %v310
    %s312 = sld [smem:[#allocation5 + $0x3d]]
    %s313 = scalar_lea.vmem [#allocation6], %s312
    %v314 = vld [vmem:[%s313] sm:$0x1]
    %315 = vst [vmem:[#allocation2 + $0x3d] sm:$0x1] %v314
    %s316 = sld [smem:[#allocation5 + $0x3e]]
    %s317 = scalar_lea.vmem [#allocation6], %s316
    %v318 = vld [vmem:[%s317] sm:$0x1]
    %319 = vst [vmem:[#allocation2 + $0x3e] sm:$0x1] %v318
    %s320 = sld [smem:[#allocation5 + $0x3f]]
    %s321 = scalar_lea.vmem [#allocation6], %s320
    %v322 = vld [vmem:[%s321] sm:$0x1]
    %323 = vst [vmem:[#allocation2 + $0x3f] sm:$0x1] %v322
    %s324 = sld [smem:[#allocation5 + $0x40]]
    %s325 = scalar_lea.vmem [#allocation6], %s324
    %v326 = vld [vmem:[%s325] sm:$0x1]
    %327 = vst [vmem:[#allocation2 + $0x40] sm:$0x1] %v326
    %s328 = sld [smem:[#allocation5 + $0x41]]
    %s329 = scalar_lea.vmem [#allocation6], %s328
    %v330 = vld [vmem:[%s329] sm:$0x1]
    %331 = vst [vmem:[#allocation2 + $0x41] sm:$0x1] %v330
    %s332 = sld [smem:[#allocation5 + $0x42]]
    %s333 = scalar_lea.vmem [#allocation6], %s332
    %v334 = vld [vmem:[%s333] sm:$0x1]
    %335 = vst [vmem:[#allocation2 + $0x42] sm:$0x1] %v334
    %s336 = sld [smem:[#allocation5 + $0x43]]
    %s337 = scalar_lea.vmem [#allocation6], %s336
    %v338 = vld [vmem:[%s337] sm:$0x1]
    %339 = vst [vmem:[#allocation2 + $0x43] sm:$0x1] %v338
    %s340 = sld [smem:[#allocation5 + $0x44]]
    %s341 = scalar_lea.vmem [#allocation6], %s340
    %v342 = vld [vmem:[%s341] sm:$0x1]
    %343 = vst [vmem:[#allocation2 + $0x44] sm:$0x1] %v342
    %s344 = sld [smem:[#allocation5 + $0x45]]
    %s345 = scalar_lea.vmem [#allocation6], %s344
    %v346 = vld [vmem:[%s345] sm:$0x1]
    %347 = vst [vmem:[#allocation2 + $0x45] sm:$0x1] %v346
    %s348 = sld [smem:[#allocation5 + $0x46]]
    %s349 = scalar_lea.vmem [#allocation6], %s348
    %v350 = vld [vmem:[%s349] sm:$0x1]
    %351 = vst [vmem:[#allocation2 + $0x46] sm:$0x1] %v350
    %s352 = sld [smem:[#allocation5 + $0x47]]
    %s353 = scalar_lea.vmem [#allocation6], %s352
    %v354 = vld [vmem:[%s353] sm:$0x1]
    %355 = vst [vmem:[#allocation2 + $0x47] sm:$0x1] %v354
    %s356 = sld [smem:[#allocation5 + $0x48]]
    %s357 = scalar_lea.vmem [#allocation6], %s356
    %v358 = vld [vmem:[%s357] sm:$0x1]
    %359 = vst [vmem:[#allocation2 + $0x48] sm:$0x1] %v358
    %s360 = sld [smem:[#allocation5 + $0x49]]
    %s361 = scalar_lea.vmem [#allocation6], %s360
    %v362 = vld [vmem:[%s361] sm:$0x1]
    %363 = vst [vmem:[#allocation2 + $0x49] sm:$0x1] %v362
    %s364 = sld [smem:[#allocation5 + $0x4a]]
    %s365 = scalar_lea.vmem [#allocation6], %s364
    %v366 = vld [vmem:[%s365] sm:$0x1]
    %367 = vst [vmem:[#allocation2 + $0x4a] sm:$0x1] %v366
    %s368 = sld [smem:[#allocation5 + $0x4b]]
    %s369 = scalar_lea.vmem [#allocation6], %s368
    %v370 = vld [vmem:[%s369] sm:$0x1]
    %371 = vst [vmem:[#allocation2 + $0x4b] sm:$0x1] %v370
    %s372 = sld [smem:[#allocation5 + $0x4c]]
    %s373 = scalar_lea.vmem [#allocation6], %s372
    %v374 = vld [vmem:[%s373] sm:$0x1]
    %375 = vst [vmem:[#allocation2 + $0x4c] sm:$0x1] %v374
    %s376 = sld [smem:[#allocation5 + $0x4d]]
    %s377 = scalar_lea.vmem [#allocation6], %s376
    %v378 = vld [vmem:[%s377] sm:$0x1]
    %379 = vst [vmem:[#allocation2 + $0x4d] sm:$0x1] %v378
    %s380 = sld [smem:[#allocation5 + $0x4e]]
    %s381 = scalar_lea.vmem [#allocation6], %s380
    %v382 = vld [vmem:[%s381] sm:$0x1]
    %383 = vst [vmem:[#allocation2 + $0x4e] sm:$0x1] %v382
    %s384 = sld [smem:[#allocation5 + $0x4f]]
    %s385 = scalar_lea.vmem [#allocation6], %s384
    %v386 = vld [vmem:[%s385] sm:$0x1]
    %387 = vst [vmem:[#allocation2 + $0x4f] sm:$0x1] %v386
    %v388 = vld [vmem:[%s2] sm:$0xff]
    %v389 = vld [vmem:[%s2 + $0x8] sm:$0xff]
    %v390 = vld [vmem:[%s2 + $0x10] sm:$0xff]
    %v391 = vld [vmem:[%s2 + $0x18] sm:$0xff]
    %v392 = vld [vmem:[#allocation2] sm:$0xff]
    %vm393 = vcmask 261120
    %v395 = vsel %vm393, 0.0, 0
    %397 = vmatprep.subr.mxu0 0.0
    %398 = vmatpush1.msra.mxu0 0.0
    %399 = vmatprep.subr.mxu0 0.0
    %400 = vmatpush1.msra.mxu0 0.0
    %401 = vmatprep.subr.mxu0 0.0
    %402 = vmatpush1.msra.mxu0 0.0
    %403 = vmatprep.subr.mxu0 0.0
    %404 = vmatpush1.msra.mxu0 0.0
    %405 = vmatprep.subr.mxu0 0.0
    %406 = vmatpush1.msra.mxu0 0.0
    %407 = vmatprep.subr.mxu0 0.0
    %408 = vmatpush1.msra.mxu0 0.0
    %409 = vmatprep.subr.mxu0 0.0
    %410 = vmatpush1.msra.mxu0 0.0
    %411 = vmatprep.subr.mxu0 0.0
    %412 = vmatpush1.msra.mxu0 0.0
    %413 = vmatprep.subr.mxu0 0.0
    %414 = vmatpush1.msra.mxu0 0.0
    %415 = vmatprep.subr.mxu0 0.0
    %416 = vmatpush1.msra.mxu0 0.0
    %417 = vmatprep.subr.mxu0 0.0
    %418 = vmatpush1.msra.mxu0 0.0
    %419 = vmatprep.subr.mxu0 0.0
    %420 = vmatpush1.msra.mxu0 0.0
    %421 = vmatprep.subr.mxu0 0.0
    %422 = vmatpush1.msra.mxu0 %v391
    %423 = vmatprep.subr.mxu0 0.0
    %424 = vmatpush1.msra.mxu0 %v390
    %425 = vmatprep.subr.mxu0 0.0
    %426 = vmatpush1.msra.mxu0 %v389
    %427 = vmatprep.subr.mxu0 0.0
    %428 = vmatpush1.msra.mxu0 %v388
    %429 = vmatprep.subr.mxu0 0.0
    %430 = vmatpush2.msra.mxu0 0.0
    %431 = vmatprep.subr.mxu0 0.0
    %432 = vmatpush2.msra.mxu0 0.0
    %433 = vmatprep.subr.mxu0 0.0
    %434 = vmatpush2.msra.mxu0 0.0
    %435 = vmatprep.subr.mxu0 0.0
    %436 = vmatpush2.msra.mxu0 0.0
    %437 = vmatprep.subr.mxu0 0.0
    %438 = vmatpush2.msra.mxu0 0.0
    %439 = vmatprep.subr.mxu0 0.0
    %440 = vmatpush2.msra.mxu0 0.0
    %441 = vmatprep.subr.mxu0 0.0
    %442 = vmatpush2.msra.mxu0 0.0
    %443 = vmatprep.subr.mxu0 0.0
    %444 = vmatpush2.msra.mxu0 0.0
    %445 = vmatprep.subr.mxu0 0.0
    %446 = vmatpush2.msra.mxu0 0.0
    %447 = vmatprep.subr.mxu0 0.0
    %448 = vmatpush2.msra.mxu0 0.0
    %449 = vmatprep.subr.mxu0 0.0
    %450 = vmatpush2.msra.mxu0 0.0
    %451 = vmatprep.subr.mxu0 0.0
    %452 = vmatpush2.msra.mxu0 0.0
    %453 = vmatprep.subr.mxu0 0.0
    %454 = vmatpush2.msra.mxu0 0.0
    %455 = vmatprep.subr.mxu0 0.0
    %456 = vmatpush2.msra.mxu0 0.0
    %457 = vmatprep.subr.mxu0 0.0
    %458 = vmatpush2.msra.mxu0 0.0
    %459 = vmatprep.subr.mxu0 0.0
    %460 = vmatpush2.msra.mxu0 0.0
    %461 = vmatprep.mubr.f32.mxu0 0.0
    %462 = vmatmul.mubr.f32.gmra.mxu0 %v395
    %v463 = vpop.f32.mrf.mxu0
    %v464 = vadd.f32 0.0, %v463
    %v465 = vpop.f32.mrf.mxu0
    %466 = vdwg.mxu0
    %v467 = vadd.f32 %v392, %v464
    %v468 = vxor.u32 %v467, 2147483648
    %v469 = vmul.f32 %v468, 1.442695
    %v470 = vpow.pop %v469
    %v471 = vadd.f32 %v470, 1.0
    %v472 = vrcp.pop %v471
    %v473 = vmul.f32 1.0, %v472
    %v474 = vtanh.pop %v467
    %v475 = vmul.f32 %v473, 0.0
    %477 = vrot.lane.b32.xlu0 %v474, 64
    %v478 = vpop.permute.xlu0 %477
    %v480 = vmul.f32 %v473, %v478
    %482 = vrot.lane.b32.xlu0 %v480, 32
    %v483 = vpop.permute.xlu0 %482
    %v485 = vadd.f32 %v475, %v483
    %v486 = vtanh.pop %v485
    %488 = vrot.lane.b32.xlu0 %v486, 64
    %v489 = vpop.permute.xlu0 %488
    %v491 = vmul.f32 %v473, %v489
    %493 = vrot.lane.b32.xlu0 %v491, 32
    %v494 = vpop.permute.xlu0 %493
    %496 = vst.msk [vmem:[#allocation3] sm:$0xff] %vm393, %v494
    %v497 = vld [vmem:[#allocation2 + $0x8] sm:$0xff]
    %v498 = vsel %vm393, %v494, 0
    %500 = vmatprep.subr.mxu0 0.0
    %501 = vmatpush1.msra.mxu0 0.0
    %502 = vmatprep.subr.mxu0 0.0
    %503 = vmatpush1.msra.mxu0 0.0
    %504 = vmatprep.subr.mxu0 0.0
    %505 = vmatpush1.msra.mxu0 0.0
    %506 = vmatprep.subr.mxu0 0.0
    %507 = vmatpush1.msra.mxu0 0.0
    %508 = vmatprep.subr.mxu0 0.0
    %509 = vmatpush1.msra.mxu0 0.0
    %510 = vmatprep.subr.mxu0 0.0
    %511 = vmatpush1.msra.mxu0 0.0
    %512 = vmatprep.subr.mxu0 0.0
    %513 = vmatpush1.msra.mxu0 0.0
    %514 = vmatprep.subr.mxu0 0.0
    %515 = vmatpush1.msra.mxu0 0.0
    %516 = vmatprep.subr.mxu0 0.0
    %517 = vmatpush1.msra.mxu0 0.0
    %518 = vmatprep.subr.mxu0 0.0
    %519 = vmatpush1.msra.mxu0 0.0
    %520 = vmatprep.subr.mxu0 0.0
    %521 = vmatpush1.msra.mxu0 0.0
    %522 = vmatprep.subr.mxu0 0.0
    %523 = vmatpush1.msra.mxu0 0.0
    %524 = vmatprep.subr.mxu0 0.0
    %525 = vmatpush1.msra.mxu0 %v391
    %526 = vmatprep.subr.mxu0 0.0
    %527 = vmatpush1.msra.mxu0 %v390
    %528 = vmatprep.subr.mxu0 0.0
    %529 = vmatpush1.msra.mxu0 %v389
    %530 = vmatprep.subr.mxu0 0.0
    %531 = vmatpush1.msra.mxu0 %v388
    %532 = vmatprep.subr.mxu0 0.0
    %533 = vmatpush2.msra.mxu0 0.0
    %534 = vmatprep.subr.mxu0 0.0
    %535 = vmatpush2.msra.mxu0 0.0
    %536 = vmatprep.subr.mxu0 0.0
    %537 = vmatpush2.msra.mxu0 0.0
    %538 = vmatprep.subr.mxu0 0.0
    %539 = vmatpush2.msra.mxu0 0.0
    %540 = vmatprep.subr.mxu0 0.0
    %541 = vmatpush2.msra.mxu0 0.0
    %542 = vmatprep.subr.mxu0 0.0
    %543 = vmatpush2.msra.mxu0 0.0
    %544 = vmatprep.subr.mxu0 0.0
    %545 = vmatpush2.msra.mxu0 0.0
    %546 = vmatprep.subr.mxu0 0.0
    %547 = vmatpush2.msra.mxu0 0.0
    %548 = vmatprep.subr.mxu0 0.0
    %549 = vmatpush2.msra.mxu0 0.0
    %550 = vmatprep.subr.mxu0 0.0
    %551 = vmatpush2.msra.mxu0 0.0
    %552 = vmatprep.subr.mxu0 0.0
    %553 = vmatpush2.msra.mxu0 0.0
    %554 = vmatprep.subr.mxu0 0.0
    %555 = vmatpush2.msra.mxu0 0.0
    %556 = vmatprep.subr.mxu0 0.0
    %557 = vmatpush2.msra.mxu0 0.0
    %558 = vmatprep.subr.mxu0 0.0
    %559 = vmatpush2.msra.mxu0 0.0
    %560 = vmatprep.subr.mxu0 0.0
    %561 = vmatpush2.msra.mxu0 0.0
    %562 = vmatprep.subr.mxu0 0.0
    %563 = vmatpush2.msra.mxu0 0.0
    %564 = vmatprep.mubr.f32.mxu0 0.0
    %565 = vmatmul.mubr.f32.gmra.mxu0 %v498
    %v566 = vpop.f32.mrf.mxu0
    %v567 = vadd.f32 0.0, %v566
    %v568 = vpop.f32.mrf.mxu0
    %569 = vdwg.mxu0
    %v570 = vadd.f32 %v497, %v567
    %v571 = vxor.u32 %v570, 2147483648
    %v572 = vmul.f32 %v571, 1.442695
    %v573 = vpow.pop %v572
    %v574 = vadd.f32 %v573, 1.0
    %v575 = vrcp.pop %v574
    %v576 = vmul.f32 1.0, %v575
    %v577 = vtanh.pop %v570
    %v578 = vmul.f32 %v576, %v485
    %580 = vrot.lane.b32.xlu0 %v577, 64
    %v581 = vpop.permute.xlu0 %580
    %v583 = vmul.f32 %v576, %v581
    %585 = vrot.lane.b32.xlu0 %v583, 32
    %v586 = vpop.permute.xlu0 %585
    %v588 = vadd.f32 %v578, %v586
    %v589 = vtanh.pop %v588
    %591 = vrot.lane.b32.xlu0 %v589, 64
    %v592 = vpop.permute.xlu0 %591
    %v594 = vmul.f32 %v576, %v592
    %596 = vrot.lane.b32.xlu0 %v594, 32
    %v597 = vpop.permute.xlu0 %596
    %599 = vst.msk [vmem:[#allocation3 + $0x8] sm:$0xff] %vm393, %v597
    %v600 = vld [vmem:[#allocation2 + $0x10] sm:$0xff]
    %v601 = vsel %vm393, %v597, 0
    %603 = vmatprep.subr.mxu0 0.0
    %604 = vmatpush1.msra.mxu0 0.0
    %605 = vmatprep.subr.mxu0 0.0
    %606 = vmatpush1.msra.mxu0 0.0
    %607 = vmatprep.subr.mxu0 0.0
    %608 = vmatpush1.msra.mxu0 0.0
    %609 = vmatprep.subr.mxu0 0.0
    %610 = vmatpush1.msra.mxu0 0.0
    %611 = vmatprep.subr.mxu0 0.0
    %612 = vmatpush1.msra.mxu0 0.0
    %613 = vmatprep.subr.mxu0 0.0
    %614 = vmatpush1.msra.mxu0 0.0
    %615 = vmatprep.subr.mxu0 0.0
    %616 = vmatpush1.msra.mxu0 0.0
    %617 = vmatprep.subr.mxu0 0.0
    %618 = vmatpush1.msra.mxu0 0.0
    %619 = vmatprep.subr.mxu0 0.0
    %620 = vmatpush1.msra.mxu0 0.0
    %621 = vmatprep.subr.mxu0 0.0
    %622 = vmatpush1.msra.mxu0 0.0
    %623 = vmatprep.subr.mxu0 0.0
    %624 = vmatpush1.msra.mxu0 0.0
    %625 = vmatprep.subr.mxu0 0.0
    %626 = vmatpush1.msra.mxu0 0.0
    %627 = vmatprep.subr.mxu0 0.0
    %628 = vmatpush1.msra.mxu0 %v391
    %629 = vmatprep.subr.mxu0 0.0
    %630 = vmatpush1.msra.mxu0 %v390
    %631 = vmatprep.subr.mxu0 0.0
    %632 = vmatpush1.msra.mxu0 %v389
    %633 = vmatprep.subr.mxu0 0.0
    %634 = vmatpush1.msra.mxu0 %v388
    %635 = vmatprep.subr.mxu0 0.0
    %636 = vmatpush2.msra.mxu0 0.0
    %637 = vmatprep.subr.mxu0 0.0
    %638 = vmatpush2.msra.mxu0 0.0
    %639 = vmatprep.subr.mxu0 0.0
    %640 = vmatpush2.msra.mxu0 0.0
    %641 = vmatprep.subr.mxu0 0.0
    %642 = vmatpush2.msra.mxu0 0.0
    %643 = vmatprep.subr.mxu0 0.0
    %644 = vmatpush2.msra.mxu0 0.0
    %645 = vmatprep.subr.mxu0 0.0
    %646 = vmatpush2.msra.mxu0 0.0
    %647 = vmatprep.subr.mxu0 0.0
    %648 = vmatpush2.msra.mxu0 0.0
    %649 = vmatprep.subr.mxu0 0.0
    %650 = vmatpush2.msra.mxu0 0.0
    %651 = vmatprep.subr.mxu0 0.0
    %652 = vmatpush2.msra.mxu0 0.0
    %653 = vmatprep.subr.mxu0 0.0
    %654 = vmatpush2.msra.mxu0 0.0
    %655 = vmatprep.subr.mxu0 0.0
    %656 = vmatpush2.msra.mxu0 0.0
    %657 = vmatprep.subr.mxu0 0.0
    %658 = vmatpush2.msra.mxu0 0.0
    %659 = vmatprep.subr.mxu0 0.0
    %660 = vmatpush2.msra.mxu0 0.0
    %661 = vmatprep.subr.mxu0 0.0
    %662 = vmatpush2.msra.mxu0 0.0
    %663 = vmatprep.subr.mxu0 0.0
    %664 = vmatpush2.msra.mxu0 0.0
    %665 = vmatprep.subr.mxu0 0.0
    %666 = vmatpush2.msra.mxu0 0.0
    %667 = vmatprep.mubr.f32.mxu0 0.0
    %668 = vmatmul.mubr.f32.gmra.mxu0 %v601
    %v669 = vpop.f32.mrf.mxu0
    %v670 = vadd.f32 0.0, %v669
    %v671 = vpop.f32.mrf.mxu0
    %672 = vdwg.mxu0
    %v673 = vadd.f32 %v600, %v670
    %v674 = vxor.u32 %v673, 2147483648
    %v675 = vmul.f32 %v674, 1.442695
    %v676 = vpow.pop %v675
    %v677 = vadd.f32 %v676, 1.0
    %v678 = vrcp.pop %v677
    %v679 = vmul.f32 1.0, %v678
    %v680 = vtanh.pop %v673
    %v681 = vmul.f32 %v679, %v588
    %683 = vrot.lane.b32.xlu0 %v680, 64
    %v684 = vpop.permute.xlu0 %683
    %v686 = vmul.f32 %v679, %v684
    %688 = vrot.lane.b32.xlu0 %v686, 32
    %v689 = vpop.permute.xlu0 %688
    %v691 = vadd.f32 %v681, %v689
    %v692 = vtanh.pop %v691
    %694 = vrot.lane.b32.xlu0 %v692, 64
    %v695 = vpop.permute.xlu0 %694
    %v697 = vmul.f32 %v679, %v695
    %699 = vrot.lane.b32.xlu0 %v697, 32
    %v700 = vpop.permute.xlu0 %699
    %702 = vst.msk [vmem:[#allocation3 + $0x10] sm:$0xff] %vm393, %v700
    %v703 = vld [vmem:[#allocation2 + $0x18] sm:$0xff]
    %v704 = vsel %vm393, %v700, 0
    %706 = vmatprep.subr.mxu0 0.0
    %707 = vmatpush1.msra.mxu0 0.0
    %708 = vmatprep.subr.mxu0 0.0
    %709 = vmatpush1.msra.mxu0 0.0
    %710 = vmatprep.subr.mxu0 0.0
    %711 = vmatpush1.msra.mxu0 0.0
    %712 = vmatprep.subr.mxu0 0.0
    %713 = vmatpush1.msra.mxu0 0.0
    %714 = vmatprep.subr.mxu0 0.0
    %715 = vmatpush1.msra.mxu0 0.0
    %716 = vmatprep.subr.mxu0 0.0
    %717 = vmatpush1.msra.mxu0 0.0
    %718 = vmatprep.subr.mxu0 0.0
    %719 = vmatpush1.msra.mxu0 0.0
    %720 = vmatprep.subr.mxu0 0.0
    %721 = vmatpush1.msra.mxu0 0.0
    %722 = vmatprep.subr.mxu0 0.0
    %723 = vmatpush1.msra.mxu0 0.0
    %724 = vmatprep.subr.mxu0 0.0
    %725 = vmatpush1.msra.mxu0 0.0
    %726 = vmatprep.subr.mxu0 0.0
    %727 = vmatpush1.msra.mxu0 0.0
    %728 = vmatprep.subr.mxu0 0.0
    %729 = vmatpush1.msra.mxu0 0.0
    %730 = vmatprep.subr.mxu0 0.0
    %731 = vmatpush1.msra.mxu0 %v391
    %732 = vmatprep.subr.mxu0 0.0
    %733 = vmatpush1.msra.mxu0 %v390
    %734 = vmatprep.subr.mxu0 0.0
    %735 = vmatpush1.msra.mxu0 %v389
    %736 = vmatprep.subr.mxu0 0.0
    %737 = vmatpush1.msra.mxu0 %v388
    %738 = vmatprep.subr.mxu0 0.0
    %739 = vmatpush2.msra.mxu0 0.0
    %740 = vmatprep.subr.mxu0 0.0
    %741 = vmatpush2.msra.mxu0 0.0
    %742 = vmatprep.subr.mxu0 0.0
    %743 = vmatpush2.msra.mxu0 0.0
    %744 = vmatprep.subr.mxu0 0.0
    %745 = vmatpush2.msra.mxu0 0.0
    %746 = vmatprep.subr.mxu0 0.0
    %747 = vmatpush2.msra.mxu0 0.0
    %748 = vmatprep.subr.mxu0 0.0
    %749 = vmatpush2.msra.mxu0 0.0
    %750 = vmatprep.subr.mxu0 0.0
    %751 = vmatpush2.msra.mxu0 0.0
    %752 = vmatprep.subr.mxu0 0.0
    %753 = vmatpush2.msra.mxu0 0.0
    %754 = vmatprep.subr.mxu0 0.0
    %755 = vmatpush2.msra.mxu0 0.0
    %756 = vmatprep.subr.mxu0 0.0
    %757 = vmatpush2.msra.mxu0 0.0
    %758 = vmatprep.subr.mxu0 0.0
    %759 = vmatpush2.msra.mxu0 0.0
    %760 = vmatprep.subr.mxu0 0.0
    %761 = vmatpush2.msra.mxu0 0.0
    %762 = vmatprep.subr.mxu0 0.0
    %763 = vmatpush2.msra.mxu0 0.0
    %764 = vmatprep.subr.mxu0 0.0
    %765 = vmatpush2.msra.mxu0 0.0
    %766 = vmatprep.subr.mxu0 0.0
    %767 = vmatpush2.msra.mxu0 0.0
    %768 = vmatprep.subr.mxu0 0.0
    %769 = vmatpush2.msra.mxu0 0.0
    %770 = vmatprep.mubr.f32.mxu0 0.0
    %771 = vmatmul.mubr.f32.gmra.mxu0 %v704
    %v772 = vpop.f32.mrf.mxu0
    %v773 = vadd.f32 0.0, %v772
    %v774 = vpop.f32.mrf.mxu0
    %775 = vdwg.mxu0
    %v776 = vadd.f32 %v703, %v773
    %v777 = vxor.u32 %v776, 2147483648
    %v778 = vmul.f32 %v777, 1.442695
    %v779 = vpow.pop %v778
    %v780 = vadd.f32 %v779, 1.0
    %v781 = vrcp.pop %v780
    %v782 = vmul.f32 1.0, %v781
    %v783 = vtanh.pop %v776
    %v784 = vmul.f32 %v782, %v691
    %786 = vrot.lane.b32.xlu0 %v783, 64
    %v787 = vpop.permute.xlu0 %786
    %v789 = vmul.f32 %v782, %v787
    %791 = vrot.lane.b32.xlu0 %v789, 32
    %v792 = vpop.permute.xlu0 %791
    %v794 = vadd.f32 %v784, %v792
    %v795 = vtanh.pop %v794
    %797 = vrot.lane.b32.xlu0 %v795, 64
    %v798 = vpop.permute.xlu0 %797
    %v800 = vmul.f32 %v782, %v798
    %802 = vrot.lane.b32.xlu0 %v800, 32
    %v803 = vpop.permute.xlu0 %802
    %805 = vst.msk [vmem:[#allocation3 + $0x18] sm:$0xff] %vm393, %v803
    %v806 = vld [vmem:[#allocation2 + $0x20] sm:$0xff]
    %v807 = vsel %vm393, %v803, 0
    %809 = vmatprep.subr.mxu0 0.0
    %810 = vmatpush1.msra.mxu0 0.0
    %811 = vmatprep.subr.mxu0 0.0
    %812 = vmatpush1.msra.mxu0 0.0
    %813 = vmatprep.subr.mxu0 0.0
    %814 = vmatpush1.msra.mxu0 0.0
    %815 = vmatprep.subr.mxu0 0.0
    %816 = vmatpush1.msra.mxu0 0.0
    %817 = vmatprep.subr.mxu0 0.0
    %818 = vmatpush1.msra.mxu0 0.0
    %819 = vmatprep.subr.mxu0 0.0
    %820 = vmatpush1.msra.mxu0 0.0
    %821 = vmatprep.subr.mxu0 0.0
    %822 = vmatpush1.msra.mxu0 0.0
    %823 = vmatprep.subr.mxu0 0.0
    %824 = vmatpush1.msra.mxu0 0.0
    %825 = vmatprep.subr.mxu0 0.0
    %826 = vmatpush1.msra.mxu0 0.0
    %827 = vmatprep.subr.mxu0 0.0
    %828 = vmatpush1.msra.mxu0 0.0
    %829 = vmatprep.subr.mxu0 0.0
    %830 = vmatpush1.msra.mxu0 0.0
    %831 = vmatprep.subr.mxu0 0.0
    %832 = vmatpush1.msra.mxu0 0.0
    %833 = vmatprep.subr.mxu0 0.0
    %834 = vmatpush1.msra.mxu0 %v391
    %835 = vmatprep.subr.mxu0 0.0
    %836 = vmatpush1.msra.mxu0 %v390
    %837 = vmatprep.subr.mxu0 0.0
    %838 = vmatpush1.msra.mxu0 %v389
    %839 = vmatprep.subr.mxu0 0.0
    %840 = vmatpush1.msra.mxu0 %v388
    %841 = vmatprep.subr.mxu0 0.0
    %842 = vmatpush2.msra.mxu0 0.0
    %843 = vmatprep.subr.mxu0 0.0
    %844 = vmatpush2.msra.mxu0 0.0
    %845 = vmatprep.subr.mxu0 0.0
    %846 = vmatpush2.msra.mxu0 0.0
    %847 = vmatprep.subr.mxu0 0.0
    %848 = vmatpush2.msra.mxu0 0.0
    %849 = vmatprep.subr.mxu0 0.0
    %850 = vmatpush2.msra.mxu0 0.0
    %851 = vmatprep.subr.mxu0 0.0
    %852 = vmatpush2.msra.mxu0 0.0
    %853 = vmatprep.subr.mxu0 0.0
    %854 = vmatpush2.msra.mxu0 0.0
    %855 = vmatprep.subr.mxu0 0.0
    %856 = vmatpush2.msra.mxu0 0.0
    %857 = vmatprep.subr.mxu0 0.0
    %858 = vmatpush2.msra.mxu0 0.0
    %859 = vmatprep.subr.mxu0 0.0
    %860 = vmatpush2.msra.mxu0 0.0
    %861 = vmatprep.subr.mxu0 0.0
    %862 = vmatpush2.msra.mxu0 0.0
    %863 = vmatprep.subr.mxu0 0.0
    %864 = vmatpush2.msra.mxu0 0.0
    %865 = vmatprep.subr.mxu0 0.0
    %866 = vmatpush2.msra.mxu0 0.0
    %867 = vmatprep.subr.mxu0 0.0
    %868 = vmatpush2.msra.mxu0 0.0
    %869 = vmatprep.subr.mxu0 0.0
    %870 = vmatpush2.msra.mxu0 0.0
    %871 = vmatprep.subr.mxu0 0.0
    %872 = vmatpush2.msra.mxu0 0.0
    %873 = vmatprep.mubr.f32.mxu0 0.0
    %874 = vmatmul.mubr.f32.gmra.mxu0 %v807
    %v875 = vpop.f32.mrf.mxu0
    %v876 = vadd.f32 0.0, %v875
    %v877 = vpop.f32.mrf.mxu0
    %878 = vdwg.mxu0
    %v879 = vadd.f32 %v806, %v876
    %v880 = vxor.u32 %v879, 2147483648
    %v881 = vmul.f32 %v880, 1.442695
    %v882 = vpow.pop %v881
    %v883 = vadd.f32 %v882, 1.0
    %v884 = vrcp.pop %v883
    %v885 = vmul.f32 1.0, %v884
    %v886 = vtanh.pop %v879
    %v887 = vmul.f32 %v885, %v794
    %889 = vrot.lane.b32.xlu0 %v886, 64
    %v890 = vpop.permute.xlu0 %889
    %v892 = vmul.f32 %v885, %v890
    %894 = vrot.lane.b32.xlu0 %v892, 32
    %v895 = vpop.permute.xlu0 %894
    %v897 = vadd.f32 %v887, %v895
    %v898 = vtanh.pop %v897
    %900 = vrot.lane.b32.xlu0 %v898, 64
    %v901 = vpop.permute.xlu0 %900
    %v903 = vmul.f32 %v885, %v901
    %905 = vrot.lane.b32.xlu0 %v903, 32
    %v906 = vpop.permute.xlu0 %905
    %908 = vst.msk [vmem:[#allocation3 + $0x20] sm:$0xff] %vm393, %v906
    %v909 = vld [vmem:[#allocation2 + $0x28] sm:$0xff]
    %v910 = vsel %vm393, %v906, 0
    %912 = vmatprep.subr.mxu0 0.0
    %913 = vmatpush1.msra.mxu0 0.0
    %914 = vmatprep.subr.mxu0 0.0
    %915 = vmatpush1.msra.mxu0 0.0
    %916 = vmatprep.subr.mxu0 0.0
    %917 = vmatpush1.msra.mxu0 0.0
    %918 = vmatprep.subr.mxu0 0.0
    %919 = vmatpush1.msra.mxu0 0.0
    %920 = vmatprep.subr.mxu0 0.0
    %921 = vmatpush1.msra.mxu0 0.0
    %922 = vmatprep.subr.mxu0 0.0
    %923 = vmatpush1.msra.mxu0 0.0
    %924 = vmatprep.subr.mxu0 0.0
    %925 = vmatpush1.msra.mxu0 0.0
    %926 = vmatprep.subr.mxu0 0.0
    %927 = vmatpush1.msra.mxu0 0.0
    %928 = vmatprep.subr.mxu0 0.0
    %929 = vmatpush1.msra.mxu0 0.0
    %930 = vmatprep.subr.mxu0 0.0
    %931 = vmatpush1.msra.mxu0 0.0
    %932 = vmatprep.subr.mxu0 0.0
    %933 = vmatpush1.msra.mxu0 0.0
    %934 = vmatprep.subr.mxu0 0.0
    %935 = vmatpush1.msra.mxu0 0.0
    %936 = vmatprep.subr.mxu0 0.0
    %937 = vmatpush1.msra.mxu0 %v391
    %938 = vmatprep.subr.mxu0 0.0
    %939 = vmatpush1.msra.mxu0 %v390
    %940 = vmatprep.subr.mxu0 0.0
    %941 = vmatpush1.msra.mxu0 %v389
    %942 = vmatprep.subr.mxu0 0.0
    %943 = vmatpush1.msra.mxu0 %v388
    %944 = vmatprep.subr.mxu0 0.0
    %945 = vmatpush2.msra.mxu0 0.0
    %946 = vmatprep.subr.mxu0 0.0
    %947 = vmatpush2.msra.mxu0 0.0
    %948 = vmatprep.subr.mxu0 0.0
    %949 = vmatpush2.msra.mxu0 0.0
    %950 = vmatprep.subr.mxu0 0.0
    %951 = vmatpush2.msra.mxu0 0.0
    %952 = vmatprep.subr.mxu0 0.0
    %953 = vmatpush2.msra.mxu0 0.0
    %954 = vmatprep.subr.mxu0 0.0
    %955 = vmatpush2.msra.mxu0 0.0
    %956 = vmatprep.subr.mxu0 0.0
    %957 = vmatpush2.msra.mxu0 0.0
    %958 = vmatprep.subr.mxu0 0.0
    %959 = vmatpush2.msra.mxu0 0.0
    %960 = vmatprep.subr.mxu0 0.0
    %961 = vmatpush2.msra.mxu0 0.0
    %962 = vmatprep.subr.mxu0 0.0
    %963 = vmatpush2.msra.mxu0 0.0
    %964 = vmatprep.subr.mxu0 0.0
    %965 = vmatpush2.msra.mxu0 0.0
    %966 = vmatprep.subr.mxu0 0.0
    %967 = vmatpush2.msra.mxu0 0.0
    %968 = vmatprep.subr.mxu0 0.0
    %969 = vmatpush2.msra.mxu0 0.0
    %970 = vmatprep.subr.mxu0 0.0
    %971 = vmatpush2.msra.mxu0 0.0
    %972 = vmatprep.subr.mxu0 0.0
    %973 = vmatpush2.msra.mxu0 0.0
    %974 = vmatprep.subr.mxu0 0.0
    %975 = vmatpush2.msra.mxu0 0.0
    %976 = vmatprep.mubr.f32.mxu0 0.0
    %977 = vmatmul.mubr.f32.gmra.mxu0 %v910
    %v978 = vpop.f32.mrf.mxu0
    %v979 = vadd.f32 0.0, %v978
    %v980 = vpop.f32.mrf.mxu0
    %981 = vdwg.mxu0
    %v982 = vadd.f32 %v909, %v979
    %v983 = vxor.u32 %v982, 2147483648
    %v984 = vmul.f32 %v983, 1.442695
    %v985 = vpow.pop %v984
    %v986 = vadd.f32 %v985, 1.0
    %v987 = vrcp.pop %v986
    %v988 = vmul.f32 1.0, %v987
    %v989 = vtanh.pop %v982
    %v990 = vmul.f32 %v988, %v897
    %992 = vrot.lane.b32.xlu0 %v989, 64
    %v993 = vpop.permute.xlu0 %992
    %v995 = vmul.f32 %v988, %v993
    %997 = vrot.lane.b32.xlu0 %v995, 32
    %v998 = vpop.permute.xlu0 %997
    %v1000 = vadd.f32 %v990, %v998
    %v1001 = vtanh.pop %v1000
    %1003 = vrot.lane.b32.xlu0 %v1001, 64
    %v1004 = vpop.permute.xlu0 %1003
    %v1006 = vmul.f32 %v988, %v1004
    %1008 = vrot.lane.b32.xlu0 %v1006, 32
    %v1009 = vpop.permute.xlu0 %1008
    %1011 = vst.msk [vmem:[#allocation3 + $0x28] sm:$0xff] %vm393, %v1009
    %v1012 = vld [vmem:[#allocation2 + $0x30] sm:$0xff]
    %v1013 = vsel %vm393, %v1009, 0
    %1015 = vmatprep.subr.mxu0 0.0
    %1016 = vmatpush1.msra.mxu0 0.0
    %1017 = vmatprep.subr.mxu0 0.0
    %1018 = vmatpush1.msra.mxu0 0.0
    %1019 = vmatprep.subr.mxu0 0.0
    %1020 = vmatpush1.msra.mxu0 0.0
    %1021 = vmatprep.subr.mxu0 0.0
    %1022 = vmatpush1.msra.mxu0 0.0
    %1023 = vmatprep.subr.mxu0 0.0
    %1024 = vmatpush1.msra.mxu0 0.0
    %1025 = vmatprep.subr.mxu0 0.0
    %1026 = vmatpush1.msra.mxu0 0.0
    %1027 = vmatprep.subr.mxu0 0.0
    %1028 = vmatpush1.msra.mxu0 0.0
    %1029 = vmatprep.subr.mxu0 0.0
    %1030 = vmatpush1.msra.mxu0 0.0
    %1031 = vmatprep.subr.mxu0 0.0
    %1032 = vmatpush1.msra.mxu0 0.0
    %1033 = vmatprep.subr.mxu0 0.0
    %1034 = vmatpush1.msra.mxu0 0.0
    %1035 = vmatprep.subr.mxu0 0.0
    %1036 = vmatpush1.msra.mxu0 0.0
    %1037 = vmatprep.subr.mxu0 0.0
    %1038 = vmatpush1.msra.mxu0 0.0
    %1039 = vmatprep.subr.mxu0 0.0
    %1040 = vmatpush1.msra.mxu0 %v391
    %1041 = vmatprep.subr.mxu0 0.0
    %1042 = vmatpush1.msra.mxu0 %v390
    %1043 = vmatprep.subr.mxu0 0.0
    %1044 = vmatpush1.msra.mxu0 %v389
    %1045 = vmatprep.subr.mxu0 0.0
    %1046 = vmatpush1.msra.mxu0 %v388
    %1047 = vmatprep.subr.mxu0 0.0
    %1048 = vmatpush2.msra.mxu0 0.0
    %1049 = vmatprep.subr.mxu0 0.0
    %1050 = vmatpush2.msra.mxu0 0.0
    %1051 = vmatprep.subr.mxu0 0.0
    %1052 = vmatpush2.msra.mxu0 0.0
    %1053 = vmatprep.subr.mxu0 0.0
    %1054 = vmatpush2.msra.mxu0 0.0
    %1055 = vmatprep.subr.mxu0 0.0
    %1056 = vmatpush2.msra.mxu0 0.0
    %1057 = vmatprep.subr.mxu0 0.0
    %1058 = vmatpush2.msra.mxu0 0.0
    %1059 = vmatprep.subr.mxu0 0.0
    %1060 = vmatpush2.msra.mxu0 0.0
    %1061 = vmatprep.subr.mxu0 0.0
    %1062 = vmatpush2.msra.mxu0 0.0
    %1063 = vmatprep.subr.mxu0 0.0
    %1064 = vmatpush2.msra.mxu0 0.0
    %1065 = vmatprep.subr.mxu0 0.0
    %1066 = vmatpush2.msra.mxu0 0.0
    %1067 = vmatprep.subr.mxu0 0.0
    %1068 = vmatpush2.msra.mxu0 0.0
    %1069 = vmatprep.subr.mxu0 0.0
    %1070 = vmatpush2.msra.mxu0 0.0
    %1071 = vmatprep.subr.mxu0 0.0
    %1072 = vmatpush2.msra.mxu0 0.0
    %1073 = vmatprep.subr.mxu0 0.0
    %1074 = vmatpush2.msra.mxu0 0.0
    %1075 = vmatprep.subr.mxu0 0.0
    %1076 = vmatpush2.msra.mxu0 0.0
    %1077 = vmatprep.subr.mxu0 0.0
    %1078 = vmatpush2.msra.mxu0 0.0
    %1079 = vmatprep.mubr.f32.mxu0 0.0
    %1080 = vmatmul.mubr.f32.gmra.mxu0 %v1013
    %v1081 = vpop.f32.mrf.mxu0
    %v1082 = vadd.f32 0.0, %v1081
    %v1083 = vpop.f32.mrf.mxu0
    %1084 = vdwg.mxu0
    %v1085 = vadd.f32 %v1012, %v1082
    %v1086 = vxor.u32 %v1085, 2147483648
    %v1087 = vmul.f32 %v1086, 1.442695
    %v1088 = vpow.pop %v1087
    %v1089 = vadd.f32 %v1088, 1.0
    %v1090 = vrcp.pop %v1089
    %v1091 = vmul.f32 1.0, %v1090
    %v1092 = vtanh.pop %v1085
    %v1093 = vmul.f32 %v1091, %v1000
    %1095 = vrot.lane.b32.xlu0 %v1092, 64
    %v1096 = vpop.permute.xlu0 %1095
    %v1098 = vmul.f32 %v1091, %v1096
    %1100 = vrot.lane.b32.xlu0 %v1098, 32
    %v1101 = vpop.permute.xlu0 %1100
    %v1103 = vadd.f32 %v1093, %v1101
    %v1104 = vtanh.pop %v1103
    %1106 = vrot.lane.b32.xlu0 %v1104, 64
    %v1107 = vpop.permute.xlu0 %1106
    %v1109 = vmul.f32 %v1091, %v1107
    %1111 = vrot.lane.b32.xlu0 %v1109, 32
    %v1112 = vpop.permute.xlu0 %1111
    %1114 = vst.msk [vmem:[#allocation3 + $0x30] sm:$0xff] %vm393, %v1112
    %v1115 = vld [vmem:[#allocation2 + $0x38] sm:$0xff]
    %v1116 = vsel %vm393, %v1112, 0
    %1118 = vmatprep.subr.mxu0 0.0
    %1119 = vmatpush1.msra.mxu0 0.0
    %1120 = vmatprep.subr.mxu0 0.0
    %1121 = vmatpush1.msra.mxu0 0.0
    %1122 = vmatprep.subr.mxu0 0.0
    %1123 = vmatpush1.msra.mxu0 0.0
    %1124 = vmatprep.subr.mxu0 0.0
    %1125 = vmatpush1.msra.mxu0 0.0
    %1126 = vmatprep.subr.mxu0 0.0
    %1127 = vmatpush1.msra.mxu0 0.0
    %1128 = vmatprep.subr.mxu0 0.0
    %1129 = vmatpush1.msra.mxu0 0.0
    %1130 = vmatprep.subr.mxu0 0.0
    %1131 = vmatpush1.msra.mxu0 0.0
    %1132 = vmatprep.subr.mxu0 0.0
    %1133 = vmatpush1.msra.mxu0 0.0
    %1134 = vmatprep.subr.mxu0 0.0
    %1135 = vmatpush1.msra.mxu0 0.0
    %1136 = vmatprep.subr.mxu0 0.0
    %1137 = vmatpush1.msra.mxu0 0.0
    %1138 = vmatprep.subr.mxu0 0.0
    %1139 = vmatpush1.msra.mxu0 0.0
    %1140 = vmatprep.subr.mxu0 0.0
    %1141 = vmatpush1.msra.mxu0 0.0
    %1142 = vmatprep.subr.mxu0 0.0
    %1143 = vmatpush1.msra.mxu0 %v391
    %1144 = vmatprep.subr.mxu0 0.0
    %1145 = vmatpush1.msra.mxu0 %v390
    %1146 = vmatprep.subr.mxu0 0.0
    %1147 = vmatpush1.msra.mxu0 %v389
    %1148 = vmatprep.subr.mxu0 0.0
    %1149 = vmatpush1.msra.mxu0 %v388
    %1150 = vmatprep.subr.mxu0 0.0
    %1151 = vmatpush2.msra.mxu0 0.0
    %1152 = vmatprep.subr.mxu0 0.0
    %1153 = vmatpush2.msra.mxu0 0.0
    %1154 = vmatprep.subr.mxu0 0.0
    %1155 = vmatpush2.msra.mxu0 0.0
    %1156 = vmatprep.subr.mxu0 0.0
    %1157 = vmatpush2.msra.mxu0 0.0
    %1158 = vmatprep.subr.mxu0 0.0
    %1159 = vmatpush2.msra.mxu0 0.0
    %1160 = vmatprep.subr.mxu0 0.0
    %1161 = vmatpush2.msra.mxu0 0.0
    %1162 = vmatprep.subr.mxu0 0.0
    %1163 = vmatpush2.msra.mxu0 0.0
    %1164 = vmatprep.subr.mxu0 0.0
    %1165 = vmatpush2.msra.mxu0 0.0
    %1166 = vmatprep.subr.mxu0 0.0
    %1167 = vmatpush2.msra.mxu0 0.0
    %1168 = vmatprep.subr.mxu0 0.0
    %1169 = vmatpush2.msra.mxu0 0.0
    %1170 = vmatprep.subr.mxu0 0.0
    %1171 = vmatpush2.msra.mxu0 0.0
    %1172 = vmatprep.subr.mxu0 0.0
    %1173 = vmatpush2.msra.mxu0 0.0
    %1174 = vmatprep.subr.mxu0 0.0
    %1175 = vmatpush2.msra.mxu0 0.0
    %1176 = vmatprep.subr.mxu0 0.0
    %1177 = vmatpush2.msra.mxu0 0.0
    %1178 = vmatprep.subr.mxu0 0.0
    %1179 = vmatpush2.msra.mxu0 0.0
    %1180 = vmatprep.subr.mxu0 0.0
    %1181 = vmatpush2.msra.mxu0 0.0
    %1182 = vmatprep.mubr.f32.mxu0 0.0
    %1183 = vmatmul.mubr.f32.gmra.mxu0 %v1116
    %v1184 = vpop.f32.mrf.mxu0
    %v1185 = vadd.f32 0.0, %v1184
    %v1186 = vpop.f32.mrf.mxu0
    %1187 = vdwg.mxu0
    %v1188 = vadd.f32 %v1115, %v1185
    %v1189 = vxor.u32 %v1188, 2147483648
    %v1190 = vmul.f32 %v1189, 1.442695
    %v1191 = vpow.pop %v1190
    %v1192 = vadd.f32 %v1191, 1.0
    %v1193 = vrcp.pop %v1192
    %v1194 = vmul.f32 1.0, %v1193
    %v1195 = vtanh.pop %v1188
    %v1196 = vmul.f32 %v1194, %v1103
    %1198 = vrot.lane.b32.xlu0 %v1195, 64
    %v1199 = vpop.permute.xlu0 %1198
    %v1201 = vmul.f32 %v1194, %v1199
    %1203 = vrot.lane.b32.xlu0 %v1201, 32
    %v1204 = vpop.permute.xlu0 %1203
    %v1206 = vadd.f32 %v1196, %v1204
    %v1207 = vtanh.pop %v1206
    %1209 = vrot.lane.b32.xlu0 %v1207, 64
    %v1210 = vpop.permute.xlu0 %1209
    %v1212 = vmul.f32 %v1194, %v1210
    %1214 = vrot.lane.b32.xlu0 %v1212, 32
    %v1215 = vpop.permute.xlu0 %1214
    %1217 = vst.msk [vmem:[#allocation3 + $0x38] sm:$0xff] %vm393, %v1215
    %v1218 = vld [vmem:[#allocation2 + $0x40] sm:$0xff]
    %v1219 = vsel %vm393, %v1215, 0
    %1221 = vmatprep.subr.mxu0 0.0
    %1222 = vmatpush1.msra.mxu0 0.0
    %1223 = vmatprep.subr.mxu0 0.0
    %1224 = vmatpush1.msra.mxu0 0.0
    %1225 = vmatprep.subr.mxu0 0.0
    %1226 = vmatpush1.msra.mxu0 0.0
    %1227 = vmatprep.subr.mxu0 0.0
    %1228 = vmatpush1.msra.mxu0 0.0
    %1229 = vmatprep.subr.mxu0 0.0
    %1230 = vmatpush1.msra.mxu0 0.0
    %1231 = vmatprep.subr.mxu0 0.0
    %1232 = vmatpush1.msra.mxu0 0.0
    %1233 = vmatprep.subr.mxu0 0.0
    %1234 = vmatpush1.msra.mxu0 0.0
    %1235 = vmatprep.subr.mxu0 0.0
    %1236 = vmatpush1.msra.mxu0 0.0
    %1237 = vmatprep.subr.mxu0 0.0
    %1238 = vmatpush1.msra.mxu0 0.0
    %1239 = vmatprep.subr.mxu0 0.0
    %1240 = vmatpush1.msra.mxu0 0.0
    %1241 = vmatprep.subr.mxu0 0.0
    %1242 = vmatpush1.msra.mxu0 0.0
    %1243 = vmatprep.subr.mxu0 0.0
    %1244 = vmatpush1.msra.mxu0 0.0
    %1245 = vmatprep.subr.mxu0 0.0
    %1246 = vmatpush1.msra.mxu0 %v391
    %1247 = vmatprep.subr.mxu0 0.0
    %1248 = vmatpush1.msra.mxu0 %v390
    %1249 = vmatprep.subr.mxu0 0.0
    %1250 = vmatpush1.msra.mxu0 %v389
    %1251 = vmatprep.subr.mxu0 0.0
    %1252 = vmatpush1.msra.mxu0 %v388
    %1253 = vmatprep.subr.mxu0 0.0
    %1254 = vmatpush2.msra.mxu0 0.0
    %1255 = vmatprep.subr.mxu0 0.0
    %1256 = vmatpush2.msra.mxu0 0.0
    %1257 = vmatprep.subr.mxu0 0.0
    %1258 = vmatpush2.msra.mxu0 0.0
    %1259 = vmatprep.subr.mxu0 0.0
    %1260 = vmatpush2.msra.mxu0 0.0
    %1261 = vmatprep.subr.mxu0 0.0
    %1262 = vmatpush2.msra.mxu0 0.0
    %1263 = vmatprep.subr.mxu0 0.0
    %1264 = vmatpush2.msra.mxu0 0.0
    %1265 = vmatprep.subr.mxu0 0.0
    %1266 = vmatpush2.msra.mxu0 0.0
    %1267 = vmatprep.subr.mxu0 0.0
    %1268 = vmatpush2.msra.mxu0 0.0
    %1269 = vmatprep.subr.mxu0 0.0
    %1270 = vmatpush2.msra.mxu0 0.0
    %1271 = vmatprep.subr.mxu0 0.0
    %1272 = vmatpush2.msra.mxu0 0.0
    %1273 = vmatprep.subr.mxu0 0.0
    %1274 = vmatpush2.msra.mxu0 0.0
    %1275 = vmatprep.subr.mxu0 0.0
    %1276 = vmatpush2.msra.mxu0 0.0
    %1277 = vmatprep.subr.mxu0 0.0
    %1278 = vmatpush2.msra.mxu0 0.0
    %1279 = vmatprep.subr.mxu0 0.0
    %1280 = vmatpush2.msra.mxu0 0.0
    %1281 = vmatprep.subr.mxu0 0.0
    %1282 = vmatpush2.msra.mxu0 0.0
    %1283 = vmatprep.subr.mxu0 0.0
    %1284 = vmatpush2.msra.mxu0 0.0
    %1285 = vmatprep.mubr.f32.mxu0 0.0
    %1286 = vmatmul.mubr.f32.gmra.mxu0 %v1219
    %v1287 = vpop.f32.mrf.mxu0
    %v1288 = vadd.f32 0.0, %v1287
    %v1289 = vpop.f32.mrf.mxu0
    %1290 = vdwg.mxu0
    %v1291 = vadd.f32 %v1218, %v1288
    %v1292 = vxor.u32 %v1291, 2147483648
    %v1293 = vmul.f32 %v1292, 1.442695
    %v1294 = vpow.pop %v1293
    %v1295 = vadd.f32 %v1294, 1.0
    %v1296 = vrcp.pop %v1295
    %v1297 = vmul.f32 1.0, %v1296
    %v1298 = vtanh.pop %v1291
    %v1299 = vmul.f32 %v1297, %v1206
    %1301 = vrot.lane.b32.xlu0 %v1298, 64
    %v1302 = vpop.permute.xlu0 %1301
    %v1304 = vmul.f32 %v1297, %v1302
    %1306 = vrot.lane.b32.xlu0 %v1304, 32
    %v1307 = vpop.permute.xlu0 %1306
    %v1309 = vadd.f32 %v1299, %v1307
    %v1310 = vtanh.pop %v1309
    %1312 = vrot.lane.b32.xlu0 %v1310, 64
    %v1313 = vpop.permute.xlu0 %1312
    %v1315 = vmul.f32 %v1297, %v1313
    %1317 = vrot.lane.b32.xlu0 %v1315, 32
    %v1318 = vpop.permute.xlu0 %1317
    %1320 = vst.msk [vmem:[#allocation3 + $0x40] sm:$0xff] %vm393, %v1318
    %v1321 = vld [vmem:[#allocation2 + $0x48] sm:$0xff]
    %v1322 = vsel %vm393, %v1318, 0
    %1324 = vmatprep.subr.mxu0 0.0
    %1325 = vmatpush1.msra.mxu0 0.0
    %1326 = vmatprep.subr.mxu0 0.0
    %1327 = vmatpush1.msra.mxu0 0.0
    %1328 = vmatprep.subr.mxu0 0.0
    %1329 = vmatpush1.msra.mxu0 0.0
    %1330 = vmatprep.subr.mxu0 0.0
    %1331 = vmatpush1.msra.mxu0 0.0
    %1332 = vmatprep.subr.mxu0 0.0
    %1333 = vmatpush1.msra.mxu0 0.0
    %1334 = vmatprep.subr.mxu0 0.0
    %1335 = vmatpush1.msra.mxu0 0.0
    %1336 = vmatprep.subr.mxu0 0.0
    %1337 = vmatpush1.msra.mxu0 0.0
    %1338 = vmatprep.subr.mxu0 0.0
    %1339 = vmatpush1.msra.mxu0 0.0
    %1340 = vmatprep.subr.mxu0 0.0
    %1341 = vmatpush1.msra.mxu0 0.0
    %1342 = vmatprep.subr.mxu0 0.0
    %1343 = vmatpush1.msra.mxu0 0.0
    %1344 = vmatprep.subr.mxu0 0.0
    %1345 = vmatpush1.msra.mxu0 0.0
    %1346 = vmatprep.subr.mxu0 0.0
    %1347 = vmatpush1.msra.mxu0 0.0
    %1348 = vmatprep.subr.mxu0 0.0
    %1349 = vmatpush1.msra.mxu0 %v391
    %1350 = vmatprep.subr.mxu0 0.0
    %1351 = vmatpush1.msra.mxu0 %v390
    %1352 = vmatprep.subr.mxu0 0.0
    %1353 = vmatpush1.msra.mxu0 %v389
    %1354 = vmatprep.subr.mxu0 0.0
    %1355 = vmatpush1.msra.mxu0 %v388
    %1356 = vmatprep.subr.mxu0 0.0
    %1357 = vmatpush2.msra.mxu0 0.0
    %1358 = vmatprep.subr.mxu0 0.0
    %1359 = vmatpush2.msra.mxu0 0.0
    %1360 = vmatprep.subr.mxu0 0.0
    %1361 = vmatpush2.msra.mxu0 0.0
    %1362 = vmatprep.subr.mxu0 0.0
    %1363 = vmatpush2.msra.mxu0 0.0
    %1364 = vmatprep.subr.mxu0 0.0
    %1365 = vmatpush2.msra.mxu0 0.0
    %1366 = vmatprep.subr.mxu0 0.0
    %1367 = vmatpush2.msra.mxu0 0.0
    %1368 = vmatprep.subr.mxu0 0.0
    %1369 = vmatpush2.msra.mxu0 0.0
    %1370 = vmatprep.subr.mxu0 0.0
    %1371 = vmatpush2.msra.mxu0 0.0
    %1372 = vmatprep.subr.mxu0 0.0
    %1373 = vmatpush2.msra.mxu0 0.0
    %1374 = vmatprep.subr.mxu0 0.0
    %1375 = vmatpush2.msra.mxu0 0.0
    %1376 = vmatprep.subr.mxu0 0.0
    %1377 = vmatpush2.msra.mxu0 0.0
    %1378 = vmatprep.subr.mxu0 0.0
    %1379 = vmatpush2.msra.mxu0 0.0
    %1380 = vmatprep.subr.mxu0 0.0
    %1381 = vmatpush2.msra.mxu0 0.0
    %1382 = vmatprep.subr.mxu0 0.0
    %1383 = vmatpush2.msra.mxu0 0.0
    %1384 = vmatprep.subr.mxu0 0.0
    %1385 = vmatpush2.msra.mxu0 0.0
    %1386 = vmatprep.subr.mxu0 0.0
    %1387 = vmatpush2.msra.mxu0 0.0
    %1388 = vmatprep.mubr.f32.mxu0 0.0
    %1389 = vmatmul.mubr.f32.gmra.mxu0 %v1322
    %v1390 = vpop.f32.mrf.mxu0
    %v1391 = vadd.f32 0.0, %v1390
    %v1392 = vpop.f32.mrf.mxu0
    %1393 = vdwg.mxu0
    %v1394 = vadd.f32 %v1321, %v1391
    %v1395 = vxor.u32 %v1394, 2147483648
    %v1396 = vmul.f32 %v1395, 1.442695
    %v1397 = vpow.pop %v1396
    %v1398 = vadd.f32 %v1397, 1.0
    %v1399 = vrcp.pop %v1398
    %v1400 = vmul.f32 1.0, %v1399
    %v1401 = vtanh.pop %v1394
    %v1402 = vmul.f32 %v1400, %v1309
    %1404 = vrot.lane.b32.xlu0 %v1401, 64
    %v1405 = vpop.permute.xlu0 %1404
    %v1407 = vmul.f32 %v1400, %v1405
    %1409 = vrot.lane.b32.xlu0 %v1407, 32
    %v1410 = vpop.permute.xlu0 %1409
    %v1412 = vadd.f32 %v1402, %v1410
    %v1413 = vtanh.pop %v1412
    %1415 = vrot.lane.b32.xlu0 %v1413, 64
    %v1416 = vpop.permute.xlu0 %1415
    %v1418 = vmul.f32 %v1400, %v1416
    %1420 = vrot.lane.b32.xlu0 %v1418, 32
    %v1421 = vpop.permute.xlu0 %1420
    %1423 = vst.msk [vmem:[#allocation3 + $0x48] sm:$0xff] %vm393, %v1421
    %v1424 = vld [vmem:[#allocation3] sm:$0xff]
    %v1425 = vld [vmem:[#allocation3 + $0x8] sm:$0xff]
    %v1426 = vld [vmem:[#allocation3 + $0x10] sm:$0xff]
    %v1427 = vld [vmem:[#allocation3 + $0x18] sm:$0xff]
    %v1428 = vld [vmem:[#allocation3 + $0x20] sm:$0xff]
    %v1429 = vld [vmem:[#allocation3 + $0x28] sm:$0xff]
    %v1430 = vld [vmem:[#allocation3 + $0x30] sm:$0xff]
    %v1431 = vld [vmem:[#allocation3 + $0x38] sm:$0xff]
    %v1432 = vld [vmem:[#allocation3 + $0x40] sm:$0xff]
    %v1433 = vld [vmem:[#allocation3 + $0x48] sm:$0xff]
    %v1434 = vpack.c.bf16 %v1425, %v1424
    %v1435 = vpack.c.bf16 %v1427, %v1426
    %v1436 = vpack.c.bf16 %v1429, %v1428
    %v1437 = vpack.c.bf16 %v1431, %v1430
    %v1438 = vpack.c.bf16 %v1433, %v1432
    %v1439 = vld [vmem:[%s3] sm:$0xf]
    %v1440 = vld [vmem:[%s3 + $0x4] sm:$0xf]
    %v1441 = vld [vmem:[%s3 + $0x8] sm:$0xf]
    %v1442 = vld [vmem:[%s3 + $0xc] sm:$0xf]
    %v1443 = vld [vmem:[#allocation11] sm:$0x1]
    %v1445 = vlaneseq
    %v1446 = vshrl.u32 %v1445, 7
    %v1447 = vsub.s32 0, %v1446
    %v1448 = vrot.slane %v1443, %v1447
    %v1454 = vunpack.c.l.b16 %v1439
    %v1455 = vunpack.c.l.b16 %v1440
    %v1456 = vunpack.c.l.b16 %v1441
    %v1457 = vunpack.c.l.b16 %v1442
    %v1458 = vpack.c.b16 %v1455, %v1454
    %v1459 = vpack.c.b16 %v1457, %v1456
    %v1463 = vsel %vm393, %v1434, 0
    %v1466 = vsel %vm393, %v1435, 0
    %v1469 = vsel %vm393, %v1436, 0
    %v1472 = vsel %vm393, %v1437, 0
    %v1475 = vsel %vm393, %v1438, 0
    %1477 = vmatprep.subr.bf16.mxu0 0
    %1478 = vmatpush1.bf16.msra.mxu0 0
    %1479 = vmatprep.subr.bf16.mxu0 0
    %1480 = vmatpush1.bf16.msra.mxu0 0
    %1481 = vmatprep.subr.bf16.mxu0 0
    %1482 = vmatpush1.bf16.msra.mxu0 0
    %1483 = vmatprep.subr.bf16.mxu0 0
    %1484 = vmatpush1.bf16.msra.mxu0 0
    %1485 = vmatprep.subr.bf16.mxu0 0
    %1486 = vmatpush1.bf16.msra.mxu0 0
    %1487 = vmatprep.subr.bf16.mxu0 0
    %1488 = vmatpush1.bf16.msra.mxu0 0
    %1489 = vmatprep.subr.bf16.mxu0 0
    %1490 = vmatpush1.bf16.msra.mxu0 %v1459
    %1491 = vmatprep.subr.bf16.mxu0 0
    %1492 = vmatpush1.bf16.msra.mxu0 %v1458
    %1493 = vmatprep.subr.bf16.mxu0 0
    %1494 = vmatpush2.bf16.msra.mxu0 0
    %1495 = vmatprep.subr.bf16.mxu0 0
    %1496 = vmatpush2.bf16.msra.mxu0 0
    %1497 = vmatprep.subr.bf16.mxu0 0
    %1498 = vmatpush2.bf16.msra.mxu0 0
    %1499 = vmatprep.subr.bf16.mxu0 0
    %1500 = vmatpush2.bf16.msra.mxu0 0
    %1501 = vmatprep.subr.bf16.mxu0 0
    %1502 = vmatpush2.bf16.msra.mxu0 0
    %1503 = vmatprep.subr.bf16.mxu0 0
    %1504 = vmatpush2.bf16.msra.mxu0 0
    %1505 = vmatprep.subr.bf16.mxu0 0
    %1506 = vmatpush2.bf16.msra.mxu0 0
    %1507 = vmatprep.subr.bf16.mxu0 0
    %1508 = vmatpush2.bf16.msra.mxu0 0
    %1509 = vmatprep.mubr.bf16.mxu0 0
    %1510 = vmatmul.mubr.bf16.gmra.mxu0 %v1463
    %v1511 = vpop.f32.mrf.mxu0
    %v1512 = vadd.f32 %v1448, %v1511
    %v1513 = vpop.f32.mrf.mxu0
    %v1514 = vpop.f32.mrf.mxu0
    %v1515 = vadd.f32 %v1448, %v1514
    %v1516 = vpop.f32.mrf.mxu0
    %1517 = vmatprep.mubr.bf16.mxu0 0
    %1518 = vmatmul.mubr.bf16.gmra.mxu0 %v1466
    %v1519 = vpop.f32.mrf.mxu0
    %v1520 = vadd.f32 %v1448, %v1519
    %v1521 = vpop.f32.mrf.mxu0
    %v1522 = vpop.f32.mrf.mxu0
    %v1523 = vadd.f32 %v1448, %v1522
    %v1524 = vpop.f32.mrf.mxu0
    %1525 = vmatprep.mubr.bf16.mxu0 0
    %1526 = vmatmul.mubr.bf16.gmra.mxu0 %v1469
    %v1527 = vpop.f32.mrf.mxu0
    %v1528 = vadd.f32 %v1448, %v1527
    %v1529 = vpop.f32.mrf.mxu0
    %v1530 = vpop.f32.mrf.mxu0
    %v1531 = vadd.f32 %v1448, %v1530
    %v1532 = vpop.f32.mrf.mxu0
    %1533 = vmatprep.mubr.bf16.mxu0 0
    %1534 = vmatmul.mubr.bf16.gmra.mxu0 %v1472
    %v1535 = vpop.f32.mrf.mxu0
    %v1536 = vadd.f32 %v1448, %v1535
    %v1537 = vpop.f32.mrf.mxu0
    %v1538 = vpop.f32.mrf.mxu0
    %v1539 = vadd.f32 %v1448, %v1538
    %v1540 = vpop.f32.mrf.mxu0
    %1541 = vmatprep.mubr.bf16.mxu0 0
    %1542 = vmatmul.mubr.bf16.gmra.mxu0 %v1475
    %v1543 = vpop.f32.mrf.mxu0
    %v1544 = vadd.f32 %v1448, %v1543
    %v1545 = vpop.f32.mrf.mxu0
    %v1546 = vpop.f32.mrf.mxu0
    %v1547 = vadd.f32 %v1448, %v1546
    %v1548 = vpop.f32.mrf.mxu0
    %1549 = vdwg.mxu0
    %1550 = vst [vmem:[#allocation2] sm:$0xff] %v1512
    %1551 = vst [vmem:[#allocation2 + $0x8] sm:$0xff] %v1515
    %1552 = vst [vmem:[#allocation2 + $0x10] sm:$0xff] %v1520
    %1553 = vst [vmem:[#allocation2 + $0x18] sm:$0xff] %v1523
    %1554 = vst [vmem:[#allocation2 + $0x20] sm:$0xff] %v1528
    %1555 = vst [vmem:[#allocation2 + $0x28] sm:$0xff] %v1531
    %1556 = vst [vmem:[#allocation2 + $0x30] sm:$0xff] %v1536
    %1557 = vst [vmem:[#allocation2 + $0x38] sm:$0xff] %v1539
    %1558 = vst [vmem:[#allocation2 + $0x40] sm:$0xff] %v1544
    %1559 = vst [vmem:[#allocation2 + $0x48] sm:$0xff] %v1547
    %v1560 = vld [vmem:[#allocation9] sm:$0xff]
    %v1561 = vld [vmem:[#allocation9 + $0x8] sm:$0xff]
    %v1562 = vld [vmem:[#allocation9 + $0x10] sm:$0xff]
    %v1563 = vld [vmem:[#allocation9 + $0x18] sm:$0xff]
    %v1564 = vld [vmem:[#allocation2] sm:$0xff]
    %1565 = vmatprep.subr.mxu0 0.0
    %1566 = vmatpush1.msra.mxu0 0.0
    %1567 = vmatprep.subr.mxu0 0.0
    %1568 = vmatpush1.msra.mxu0 0.0
    %1569 = vmatprep.subr.mxu0 0.0
    %1570 = vmatpush1.msra.mxu0 0.0
    %1571 = vmatprep.subr.mxu0 0.0
    %1572 = vmatpush1.msra.mxu0 0.0
    %1573 = vmatprep.subr.mxu0 0.0
    %1574 = vmatpush1.msra.mxu0 0.0
    %1575 = vmatprep.subr.mxu0 0.0
    %1576 = vmatpush1.msra.mxu0 0.0
    %1577 = vmatprep.subr.mxu0 0.0
    %1578 = vmatpush1.msra.mxu0 0.0
    %1579 = vmatprep.subr.mxu0 0.0
    %1580 = vmatpush1.msra.mxu0 0.0
    %1581 = vmatprep.subr.mxu0 0.0
    %1582 = vmatpush1.msra.mxu0 0.0
    %1583 = vmatprep.subr.mxu0 0.0
    %1584 = vmatpush1.msra.mxu0 0.0
    %1585 = vmatprep.subr.mxu0 0.0
    %1586 = vmatpush1.msra.mxu0 0.0
    %1587 = vmatprep.subr.mxu0 0.0
    %1588 = vmatpush1.msra.mxu0 0.0
    %1589 = vmatprep.subr.mxu0 0.0
    %1590 = vmatpush1.msra.mxu0 %v1563
    %1591 = vmatprep.subr.mxu0 0.0
    %1592 = vmatpush1.msra.mxu0 %v1562
    %1593 = vmatprep.subr.mxu0 0.0
    %1594 = vmatpush1.msra.mxu0 %v1561
    %1595 = vmatprep.subr.mxu0 0.0
    %1596 = vmatpush1.msra.mxu0 %v1560
    %1597 = vmatprep.subr.mxu0 0.0
    %1598 = vmatpush2.msra.mxu0 0.0
    %1599 = vmatprep.subr.mxu0 0.0
    %1600 = vmatpush2.msra.mxu0 0.0
    %1601 = vmatprep.subr.mxu0 0.0
    %1602 = vmatpush2.msra.mxu0 0.0
    %1603 = vmatprep.subr.mxu0 0.0
    %1604 = vmatpush2.msra.mxu0 0.0
    %1605 = vmatprep.subr.mxu0 0.0
    %1606 = vmatpush2.msra.mxu0 0.0
    %1607 = vmatprep.subr.mxu0 0.0
    %1608 = vmatpush2.msra.mxu0 0.0
    %1609 = vmatprep.subr.mxu0 0.0
    %1610 = vmatpush2.msra.mxu0 0.0
    %1611 = vmatprep.subr.mxu0 0.0
    %1612 = vmatpush2.msra.mxu0 0.0
    %1613 = vmatprep.subr.mxu0 0.0
    %1614 = vmatpush2.msra.mxu0 0.0
    %1615 = vmatprep.subr.mxu0 0.0
    %1616 = vmatpush2.msra.mxu0 0.0
    %1617 = vmatprep.subr.mxu0 0.0
    %1618 = vmatpush2.msra.mxu0 0.0
    %1619 = vmatprep.subr.mxu0 0.0
    %1620 = vmatpush2.msra.mxu0 0.0
    %1621 = vmatprep.subr.mxu0 0.0
    %1622 = vmatpush2.msra.mxu0 0.0
    %1623 = vmatprep.subr.mxu0 0.0
    %1624 = vmatpush2.msra.mxu0 0.0
    %1625 = vmatprep.subr.mxu0 0.0
    %1626 = vmatpush2.msra.mxu0 0.0
    %1627 = vmatprep.subr.mxu0 0.0
    %1628 = vmatpush2.msra.mxu0 0.0
    %1629 = vmatprep.mubr.f32.mxu0 0.0
    %1630 = vmatmul.mubr.f32.gmra.mxu0 %v395
    %v1631 = vpop.f32.mrf.mxu0
    %v1632 = vadd.f32 0.0, %v1631
    %v1633 = vpop.f32.mrf.mxu0
    %1634 = vdwg.mxu0
    %v1635 = vadd.f32 %v1564, %v1632
    %v1636 = vxor.u32 %v1635, 2147483648
    %v1637 = vmul.f32 %v1636, 1.442695
    %v1638 = vpow.pop %v1637
    %v1639 = vadd.f32 %v1638, 1.0
    %v1640 = vrcp.pop %v1639
    %v1641 = vmul.f32 1.0, %v1640
    %v1642 = vtanh.pop %v1635
    %v1643 = vmul.f32 %v1641, 0.0
    %1645 = vrot.lane.b32.xlu0 %v1642, 64
    %v1646 = vpop.permute.xlu0 %1645
    %v1648 = vmul.f32 %v1641, %v1646
    %1650 = vrot.lane.b32.xlu0 %v1648, 32
    %v1651 = vpop.permute.xlu0 %1650
    %v1653 = vadd.f32 %v1643, %v1651
    %v1654 = vtanh.pop %v1653
    %1656 = vrot.lane.b32.xlu0 %v1654, 64
    %v1657 = vpop.permute.xlu0 %1656
    %v1659 = vmul.f32 %v1641, %v1657
    %1661 = vrot.lane.b32.xlu0 %v1659, 32
    %v1662 = vpop.permute.xlu0 %1661
    %1664 = vst.msk [vmem:[#allocation12] sm:$0xff] %vm393, %v1662
    %v1665 = vld [vmem:[#allocation2 + $0x8] sm:$0xff]
    %v1666 = vsel %vm393, %v1662, 0
    %1668 = vmatprep.subr.mxu0 0.0
    %1669 = vmatpush1.msra.mxu0 0.0
    %1670 = vmatprep.subr.mxu0 0.0
    %1671 = vmatpush1.msra.mxu0 0.0
    %1672 = vmatprep.subr.mxu0 0.0
    %1673 = vmatpush1.msra.mxu0 0.0
    %1674 = vmatprep.subr.mxu0 0.0
    %1675 = vmatpush1.msra.mxu0 0.0
    %1676 = vmatprep.subr.mxu0 0.0
    %1677 = vmatpush1.msra.mxu0 0.0
    %1678 = vmatprep.subr.mxu0 0.0
    %1679 = vmatpush1.msra.mxu0 0.0
    %1680 = vmatprep.subr.mxu0 0.0
    %1681 = vmatpush1.msra.mxu0 0.0
    %1682 = vmatprep.subr.mxu0 0.0
    %1683 = vmatpush1.msra.mxu0 0.0
    %1684 = vmatprep.subr.mxu0 0.0
    %1685 = vmatpush1.msra.mxu0 0.0
    %1686 = vmatprep.subr.mxu0 0.0
    %1687 = vmatpush1.msra.mxu0 0.0
    %1688 = vmatprep.subr.mxu0 0.0
    %1689 = vmatpush1.msra.mxu0 0.0
    %1690 = vmatprep.subr.mxu0 0.0
    %1691 = vmatpush1.msra.mxu0 0.0
    %1692 = vmatprep.subr.mxu0 0.0
    %1693 = vmatpush1.msra.mxu0 %v1563
    %1694 = vmatprep.subr.mxu0 0.0
    %1695 = vmatpush1.msra.mxu0 %v1562
    %1696 = vmatprep.subr.mxu0 0.0
    %1697 = vmatpush1.msra.mxu0 %v1561
    %1698 = vmatprep.subr.mxu0 0.0
    %1699 = vmatpush1.msra.mxu0 %v1560
    %1700 = vmatprep.subr.mxu0 0.0
    %1701 = vmatpush2.msra.mxu0 0.0
    %1702 = vmatprep.subr.mxu0 0.0
    %1703 = vmatpush2.msra.mxu0 0.0
    %1704 = vmatprep.subr.mxu0 0.0
    %1705 = vmatpush2.msra.mxu0 0.0
    %1706 = vmatprep.subr.mxu0 0.0
    %1707 = vmatpush2.msra.mxu0 0.0
    %1708 = vmatprep.subr.mxu0 0.0
    %1709 = vmatpush2.msra.mxu0 0.0
    %1710 = vmatprep.subr.mxu0 0.0
    %1711 = vmatpush2.msra.mxu0 0.0
    %1712 = vmatprep.subr.mxu0 0.0
    %1713 = vmatpush2.msra.mxu0 0.0
    %1714 = vmatprep.subr.mxu0 0.0
    %1715 = vmatpush2.msra.mxu0 0.0
    %1716 = vmatprep.subr.mxu0 0.0
    %1717 = vmatpush2.msra.mxu0 0.0
    %1718 = vmatprep.subr.mxu0 0.0
    %1719 = vmatpush2.msra.mxu0 0.0
    %1720 = vmatprep.subr.mxu0 0.0
    %1721 = vmatpush2.msra.mxu0 0.0
    %1722 = vmatprep.subr.mxu0 0.0
    %1723 = vmatpush2.msra.mxu0 0.0
    %1724 = vmatprep.subr.mxu0 0.0
    %1725 = vmatpush2.msra.mxu0 0.0
    %1726 = vmatprep.subr.mxu0 0.0
    %1727 = vmatpush2.msra.mxu0 0.0
    %1728 = vmatprep.subr.mxu0 0.0
    %1729 = vmatpush2.msra.mxu0 0.0
    %1730 = vmatprep.subr.mxu0 0.0
    %1731 = vmatpush2.msra.mxu0 0.0
    %1732 = vmatprep.mubr.f32.mxu0 0.0
    %1733 = vmatmul.mubr.f32.gmra.mxu0 %v1666
    %v1734 = vpop.f32.mrf.mxu0
    %v1735 = vadd.f32 0.0, %v1734
    %v1736 = vpop.f32.mrf.mxu0
    %1737 = vdwg.mxu0
    %v1738 = vadd.f32 %v1665, %v1735
    %v1739 = vxor.u32 %v1738, 2147483648
    %v1740 = vmul.f32 %v1739, 1.442695
    %v1741 = vpow.pop %v1740
    %v1742 = vadd.f32 %v1741, 1.0
    %v1743 = vrcp.pop %v1742
    %v1744 = vmul.f32 1.0, %v1743
    %v1745 = vtanh.pop %v1738
    %v1746 = vmul.f32 %v1744, %v1653
    %1748 = vrot.lane.b32.xlu0 %v1745, 64
    %v1749 = vpop.permute.xlu0 %1748
    %v1751 = vmul.f32 %v1744, %v1749
    %1753 = vrot.lane.b32.xlu0 %v1751, 32
    %v1754 = vpop.permute.xlu0 %1753
    %v1756 = vadd.f32 %v1746, %v1754
    %v1757 = vtanh.pop %v1756
    %1759 = vrot.lane.b32.xlu0 %v1757, 64
    %v1760 = vpop.permute.xlu0 %1759
    %v1762 = vmul.f32 %v1744, %v1760
    %1764 = vrot.lane.b32.xlu0 %v1762, 32
    %v1765 = vpop.permute.xlu0 %1764
    %1767 = vst.msk [vmem:[#allocation12 + $0x8] sm:$0xff] %vm393, %v1765
    %v1768 = vld [vmem:[#allocation2 + $0x10] sm:$0xff]
    %v1769 = vsel %vm393, %v1765, 0
    %1771 = vmatprep.subr.mxu0 0.0
    %1772 = vmatpush1.msra.mxu0 0.0
    %1773 = vmatprep.subr.mxu0 0.0
    %1774 = vmatpush1.msra.mxu0 0.0
    %1775 = vmatprep.subr.mxu0 0.0
    %1776 = vmatpush1.msra.mxu0 0.0
    %1777 = vmatprep.subr.mxu0 0.0
    %1778 = vmatpush1.msra.mxu0 0.0
    %1779 = vmatprep.subr.mxu0 0.0
    %1780 = vmatpush1.msra.mxu0 0.0
    %1781 = vmatprep.subr.mxu0 0.0
    %1782 = vmatpush1.msra.mxu0 0.0
    %1783 = vmatprep.subr.mxu0 0.0
    %1784 = vmatpush1.msra.mxu0 0.0
    %1785 = vmatprep.subr.mxu0 0.0
    %1786 = vmatpush1.msra.mxu0 0.0
    %1787 = vmatprep.subr.mxu0 0.0
    %1788 = vmatpush1.msra.mxu0 0.0
    %1789 = vmatprep.subr.mxu0 0.0
    %1790 = vmatpush1.msra.mxu0 0.0
    %1791 = vmatprep.subr.mxu0 0.0
    %1792 = vmatpush1.msra.mxu0 0.0
    %1793 = vmatprep.subr.mxu0 0.0
    %1794 = vmatpush1.msra.mxu0 0.0
    %1795 = vmatprep.subr.mxu0 0.0
    %1796 = vmatpush1.msra.mxu0 %v1563
    %1797 = vmatprep.subr.mxu0 0.0
    %1798 = vmatpush1.msra.mxu0 %v1562
    %1799 = vmatprep.subr.mxu0 0.0
    %1800 = vmatpush1.msra.mxu0 %v1561
    %1801 = vmatprep.subr.mxu0 0.0
    %1802 = vmatpush1.msra.mxu0 %v1560
    %1803 = vmatprep.subr.mxu0 0.0
    %1804 = vmatpush2.msra.mxu0 0.0
    %1805 = vmatprep.subr.mxu0 0.0
    %1806 = vmatpush2.msra.mxu0 0.0
    %1807 = vmatprep.subr.mxu0 0.0
    %1808 = vmatpush2.msra.mxu0 0.0
    %1809 = vmatprep.subr.mxu0 0.0
    %1810 = vmatpush2.msra.mxu0 0.0
    %1811 = vmatprep.subr.mxu0 0.0
    %1812 = vmatpush2.msra.mxu0 0.0
    %1813 = vmatprep.subr.mxu0 0.0
    %1814 = vmatpush2.msra.mxu0 0.0
    %1815 = vmatprep.subr.mxu0 0.0
    %1816 = vmatpush2.msra.mxu0 0.0
    %1817 = vmatprep.subr.mxu0 0.0
    %1818 = vmatpush2.msra.mxu0 0.0
    %1819 = vmatprep.subr.mxu0 0.0
    %1820 = vmatpush2.msra.mxu0 0.0
    %1821 = vmatprep.subr.mxu0 0.0
    %1822 = vmatpush2.msra.mxu0 0.0
    %1823 = vmatprep.subr.mxu0 0.0
    %1824 = vmatpush2.msra.mxu0 0.0
    %1825 = vmatprep.subr.mxu0 0.0
    %1826 = vmatpush2.msra.mxu0 0.0
    %1827 = vmatprep.subr.mxu0 0.0
    %1828 = vmatpush2.msra.mxu0 0.0
    %1829 = vmatprep.subr.mxu0 0.0
    %1830 = vmatpush2.msra.mxu0 0.0
    %1831 = vmatprep.subr.mxu0 0.0
    %1832 = vmatpush2.msra.mxu0 0.0
    %1833 = vmatprep.subr.mxu0 0.0
    %1834 = vmatpush2.msra.mxu0 0.0
    %1835 = vmatprep.mubr.f32.mxu0 0.0
    %1836 = vmatmul.mubr.f32.gmra.mxu0 %v1769
    %v1837 = vpop.f32.mrf.mxu0
    %v1838 = vadd.f32 0.0, %v1837
    %v1839 = vpop.f32.mrf.mxu0
    %1840 = vdwg.mxu0
    %v1841 = vadd.f32 %v1768, %v1838
    %v1842 = vxor.u32 %v1841, 2147483648
    %v1843 = vmul.f32 %v1842, 1.442695
    %v1844 = vpow.pop %v1843
    %v1845 = vadd.f32 %v1844, 1.0
    %v1846 = vrcp.pop %v1845
    %v1847 = vmul.f32 1.0, %v1846
    %v1848 = vtanh.pop %v1841
    %v1849 = vmul.f32 %v1847, %v1756
    %1851 = vrot.lane.b32.xlu0 %v1848, 64
    %v1852 = vpop.permute.xlu0 %1851
    %v1854 = vmul.f32 %v1847, %v1852
    %1856 = vrot.lane.b32.xlu0 %v1854, 32
    %v1857 = vpop.permute.xlu0 %1856
    %v1859 = vadd.f32 %v1849, %v1857
    %v1860 = vtanh.pop %v1859
    %1862 = vrot.lane.b32.xlu0 %v1860, 64
    %v1863 = vpop.permute.xlu0 %1862
    %v1865 = vmul.f32 %v1847, %v1863
    %1867 = vrot.lane.b32.xlu0 %v1865, 32
    %v1868 = vpop.permute.xlu0 %1867
    %1870 = vst.msk [vmem:[#allocation12 + $0x10] sm:$0xff] %vm393, %v1868
    %v1871 = vld [vmem:[#allocation2 + $0x18] sm:$0xff]
    %v1872 = vsel %vm393, %v1868, 0
    %1874 = vmatprep.subr.mxu0 0.0
    %1875 = vmatpush1.msra.mxu0 0.0
    %1876 = vmatprep.subr.mxu0 0.0
    %1877 = vmatpush1.msra.mxu0 0.0
    %1878 = vmatprep.subr.mxu0 0.0
    %1879 = vmatpush1.msra.mxu0 0.0
    %1880 = vmatprep.subr.mxu0 0.0
    %1881 = vmatpush1.msra.mxu0 0.0
    %1882 = vmatprep.subr.mxu0 0.0
    %1883 = vmatpush1.msra.mxu0 0.0
    %1884 = vmatprep.subr.mxu0 0.0
    %1885 = vmatpush1.msra.mxu0 0.0
    %1886 = vmatprep.subr.mxu0 0.0
    %1887 = vmatpush1.msra.mxu0 0.0
    %1888 = vmatprep.subr.mxu0 0.0
    %1889 = vmatpush1.msra.mxu0 0.0
    %1890 = vmatprep.subr.mxu0 0.0
    %1891 = vmatpush1.msra.mxu0 0.0
    %1892 = vmatprep.subr.mxu0 0.0
    %1893 = vmatpush1.msra.mxu0 0.0
    %1894 = vmatprep.subr.mxu0 0.0
    %1895 = vmatpush1.msra.mxu0 0.0
    %1896 = vmatprep.subr.mxu0 0.0
    %1897 = vmatpush1.msra.mxu0 0.0
    %1898 = vmatprep.subr.mxu0 0.0
    %1899 = vmatpush1.msra.mxu0 %v1563
    %1900 = vmatprep.subr.mxu0 0.0
    %1901 = vmatpush1.msra.mxu0 %v1562
    %1902 = vmatprep.subr.mxu0 0.0
    %1903 = vmatpush1.msra.mxu0 %v1561
    %1904 = vmatprep.subr.mxu0 0.0
    %1905 = vmatpush1.msra.mxu0 %v1560
    %1906 = vmatprep.subr.mxu0 0.0
    %1907 = vmatpush2.msra.mxu0 0.0
    %1908 = vmatprep.subr.mxu0 0.0
    %1909 = vmatpush2.msra.mxu0 0.0
    %1910 = vmatprep.subr.mxu0 0.0
    %1911 = vmatpush2.msra.mxu0 0.0
    %1912 = vmatprep.subr.mxu0 0.0
    %1913 = vmatpush2.msra.mxu0 0.0
    %1914 = vmatprep.subr.mxu0 0.0
    %1915 = vmatpush2.msra.mxu0 0.0
    %1916 = vmatprep.subr.mxu0 0.0
    %1917 = vmatpush2.msra.mxu0 0.0
    %1918 = vmatprep.subr.mxu0 0.0
    %1919 = vmatpush2.msra.mxu0 0.0
    %1920 = vmatprep.subr.mxu0 0.0
    %1921 = vmatpush2.msra.mxu0 0.0
    %1922 = vmatprep.subr.mxu0 0.0
    %1923 = vmatpush2.msra.mxu0 0.0
    %1924 = vmatprep.subr.mxu0 0.0
    %1925 = vmatpush2.msra.mxu0 0.0
    %1926 = vmatprep.subr.mxu0 0.0
    %1927 = vmatpush2.msra.mxu0 0.0
    %1928 = vmatprep.subr.mxu0 0.0
    %1929 = vmatpush2.msra.mxu0 0.0
    %1930 = vmatprep.subr.mxu0 0.0
    %1931 = vmatpush2.msra.mxu0 0.0
    %1932 = vmatprep.subr.mxu0 0.0
    %1933 = vmatpush2.msra.mxu0 0.0
    %1934 = vmatprep.subr.mxu0 0.0
    %1935 = vmatpush2.msra.mxu0 0.0
    %1936 = vmatprep.subr.mxu0 0.0
    %1937 = vmatpush2.msra.mxu0 0.0
    %1938 = vmatprep.mubr.f32.mxu0 0.0
    %1939 = vmatmul.mubr.f32.gmra.mxu0 %v1872
    %v1940 = vpop.f32.mrf.mxu0
    %v1941 = vadd.f32 0.0, %v1940
    %v1942 = vpop.f32.mrf.mxu0
    %1943 = vdwg.mxu0
    %v1944 = vadd.f32 %v1871, %v1941
    %v1945 = vxor.u32 %v1944, 2147483648
    %v1946 = vmul.f32 %v1945, 1.442695
    %v1947 = vpow.pop %v1946
    %v1948 = vadd.f32 %v1947, 1.0
    %v1949 = vrcp.pop %v1948
    %v1950 = vmul.f32 1.0, %v1949
    %v1951 = vtanh.pop %v1944
    %v1952 = vmul.f32 %v1950, %v1859
    %1954 = vrot.lane.b32.xlu0 %v1951, 64
    %v1955 = vpop.permute.xlu0 %1954
    %v1957 = vmul.f32 %v1950, %v1955
    %1959 = vrot.lane.b32.xlu0 %v1957, 32
    %v1960 = vpop.permute.xlu0 %1959
    %v1962 = vadd.f32 %v1952, %v1960
    %v1963 = vtanh.pop %v1962
    %1965 = vrot.lane.b32.xlu0 %v1963, 64
    %v1966 = vpop.permute.xlu0 %1965
    %v1968 = vmul.f32 %v1950, %v1966
    %1970 = vrot.lane.b32.xlu0 %v1968, 32
    %v1971 = vpop.permute.xlu0 %1970
    %1973 = vst.msk [vmem:[#allocation12 + $0x18] sm:$0xff] %vm393, %v1971
    %v1974 = vld [vmem:[#allocation2 + $0x20] sm:$0xff]
    %v1975 = vsel %vm393, %v1971, 0
    %1977 = vmatprep.subr.mxu0 0.0
    %1978 = vmatpush1.msra.mxu0 0.0
    %1979 = vmatprep.subr.mxu0 0.0
    %1980 = vmatpush1.msra.mxu0 0.0
    %1981 = vmatprep.subr.mxu0 0.0
    %1982 = vmatpush1.msra.mxu0 0.0
    %1983 = vmatprep.subr.mxu0 0.0
    %1984 = vmatpush1.msra.mxu0 0.0
    %1985 = vmatprep.subr.mxu0 0.0
    %1986 = vmatpush1.msra.mxu0 0.0
    %1987 = vmatprep.subr.mxu0 0.0
    %1988 = vmatpush1.msra.mxu0 0.0
    %1989 = vmatprep.subr.mxu0 0.0
    %1990 = vmatpush1.msra.mxu0 0.0
    %1991 = vmatprep.subr.mxu0 0.0
    %1992 = vmatpush1.msra.mxu0 0.0
    %1993 = vmatprep.subr.mxu0 0.0
    %1994 = vmatpush1.msra.mxu0 0.0
    %1995 = vmatprep.subr.mxu0 0.0
    %1996 = vmatpush1.msra.mxu0 0.0
    %1997 = vmatprep.subr.mxu0 0.0
    %1998 = vmatpush1.msra.mxu0 0.0
    %1999 = vmatprep.subr.mxu0 0.0
    %2000 = vmatpush1.msra.mxu0 0.0
    %2001 = vmatprep.subr.mxu0 0.0
    %2002 = vmatpush1.msra.mxu0 %v1563
    %2003 = vmatprep.subr.mxu0 0.0
    %2004 = vmatpush1.msra.mxu0 %v1562
    %2005 = vmatprep.subr.mxu0 0.0
    %2006 = vmatpush1.msra.mxu0 %v1561
    %2007 = vmatprep.subr.mxu0 0.0
    %2008 = vmatpush1.msra.mxu0 %v1560
    %2009 = vmatprep.subr.mxu0 0.0
    %2010 = vmatpush2.msra.mxu0 0.0
    %2011 = vmatprep.subr.mxu0 0.0
    %2012 = vmatpush2.msra.mxu0 0.0
    %2013 = vmatprep.subr.mxu0 0.0
    %2014 = vmatpush2.msra.mxu0 0.0
    %2015 = vmatprep.subr.mxu0 0.0
    %2016 = vmatpush2.msra.mxu0 0.0
    %2017 = vmatprep.subr.mxu0 0.0
    %2018 = vmatpush2.msra.mxu0 0.0
    %2019 = vmatprep.subr.mxu0 0.0
    %2020 = vmatpush2.msra.mxu0 0.0
    %2021 = vmatprep.subr.mxu0 0.0
    %2022 = vmatpush2.msra.mxu0 0.0
    %2023 = vmatprep.subr.mxu0 0.0
    %2024 = vmatpush2.msra.mxu0 0.0
    %2025 = vmatprep.subr.mxu0 0.0
    %2026 = vmatpush2.msra.mxu0 0.0
    %2027 = vmatprep.subr.mxu0 0.0
    %2028 = vmatpush2.msra.mxu0 0.0
    %2029 = vmatprep.subr.mxu0 0.0
    %2030 = vmatpush2.msra.mxu0 0.0
    %2031 = vmatprep.subr.mxu0 0.0
    %2032 = vmatpush2.msra.mxu0 0.0
    %2033 = vmatprep.subr.mxu0 0.0
    %2034 = vmatpush2.msra.mxu0 0.0
    %2035 = vmatprep.subr.mxu0 0.0
    %2036 = vmatpush2.msra.mxu0 0.0
    %2037 = vmatprep.subr.mxu0 0.0
    %2038 = vmatpush2.msra.mxu0 0.0
    %2039 = vmatprep.subr.mxu0 0.0
    %2040 = vmatpush2.msra.mxu0 0.0
    %2041 = vmatprep.mubr.f32.mxu0 0.0
    %2042 = vmatmul.mubr.f32.gmra.mxu0 %v1975
    %v2043 = vpop.f32.mrf.mxu0
    %v2044 = vadd.f32 0.0, %v2043
    %v2045 = vpop.f32.mrf.mxu0
    %2046 = vdwg.mxu0
    %v2047 = vadd.f32 %v1974, %v2044
    %v2048 = vxor.u32 %v2047, 2147483648
    %v2049 = vmul.f32 %v2048, 1.442695
    %v2050 = vpow.pop %v2049
    %v2051 = vadd.f32 %v2050, 1.0
    %v2052 = vrcp.pop %v2051
    %v2053 = vmul.f32 1.0, %v2052
    %v2054 = vtanh.pop %v2047
    %v2055 = vmul.f32 %v2053, %v1962
    %2057 = vrot.lane.b32.xlu0 %v2054, 64
    %v2058 = vpop.permute.xlu0 %2057
    %v2060 = vmul.f32 %v2053, %v2058
    %2062 = vrot.lane.b32.xlu0 %v2060, 32
    %v2063 = vpop.permute.xlu0 %2062
    %v2065 = vadd.f32 %v2055, %v2063
    %v2066 = vtanh.pop %v2065
    %2068 = vrot.lane.b32.xlu0 %v2066, 64
    %v2069 = vpop.permute.xlu0 %2068
    %v2071 = vmul.f32 %v2053, %v2069
    %2073 = vrot.lane.b32.xlu0 %v2071, 32
    %v2074 = vpop.permute.xlu0 %2073
    %2076 = vst.msk [vmem:[#allocation12 + $0x20] sm:$0xff] %vm393, %v2074
    %v2077 = vld [vmem:[#allocation2 + $0x28] sm:$0xff]
    %v2078 = vsel %vm393, %v2074, 0
    %2080 = vmatprep.subr.mxu0 0.0
    %2081 = vmatpush1.msra.mxu0 0.0
    %2082 = vmatprep.subr.mxu0 0.0
    %2083 = vmatpush1.msra.mxu0 0.0
    %2084 = vmatprep.subr.mxu0 0.0
    %2085 = vmatpush1.msra.mxu0 0.0
    %2086 = vmatprep.subr.mxu0 0.0
    %2087 = vmatpush1.msra.mxu0 0.0
    %2088 = vmatprep.subr.mxu0 0.0
    %2089 = vmatpush1.msra.mxu0 0.0
    %2090 = vmatprep.subr.mxu0 0.0
    %2091 = vmatpush1.msra.mxu0 0.0
    %2092 = vmatprep.subr.mxu0 0.0
    %2093 = vmatpush1.msra.mxu0 0.0
    %2094 = vmatprep.subr.mxu0 0.0
    %2095 = vmatpush1.msra.mxu0 0.0
    %2096 = vmatprep.subr.mxu0 0.0
    %2097 = vmatpush1.msra.mxu0 0.0
    %2098 = vmatprep.subr.mxu0 0.0
    %2099 = vmatpush1.msra.mxu0 0.0
    %2100 = vmatprep.subr.mxu0 0.0
    %2101 = vmatpush1.msra.mxu0 0.0
    %2102 = vmatprep.subr.mxu0 0.0
    %2103 = vmatpush1.msra.mxu0 0.0
    %2104 = vmatprep.subr.mxu0 0.0
    %2105 = vmatpush1.msra.mxu0 %v1563
    %2106 = vmatprep.subr.mxu0 0.0
    %2107 = vmatpush1.msra.mxu0 %v1562
    %2108 = vmatprep.subr.mxu0 0.0
    %2109 = vmatpush1.msra.mxu0 %v1561
    %2110 = vmatprep.subr.mxu0 0.0
    %2111 = vmatpush1.msra.mxu0 %v1560
    %2112 = vmatprep.subr.mxu0 0.0
    %2113 = vmatpush2.msra.mxu0 0.0
    %2114 = vmatprep.subr.mxu0 0.0
    %2115 = vmatpush2.msra.mxu0 0.0
    %2116 = vmatprep.subr.mxu0 0.0
    %2117 = vmatpush2.msra.mxu0 0.0
    %2118 = vmatprep.subr.mxu0 0.0
    %2119 = vmatpush2.msra.mxu0 0.0
    %2120 = vmatprep.subr.mxu0 0.0
    %2121 = vmatpush2.msra.mxu0 0.0
    %2122 = vmatprep.subr.mxu0 0.0
    %2123 = vmatpush2.msra.mxu0 0.0
    %2124 = vmatprep.subr.mxu0 0.0
    %2125 = vmatpush2.msra.mxu0 0.0
    %2126 = vmatprep.subr.mxu0 0.0
    %2127 = vmatpush2.msra.mxu0 0.0
    %2128 = vmatprep.subr.mxu0 0.0
    %2129 = vmatpush2.msra.mxu0 0.0
    %2130 = vmatprep.subr.mxu0 0.0
    %2131 = vmatpush2.msra.mxu0 0.0
    %2132 = vmatprep.subr.mxu0 0.0
    %2133 = vmatpush2.msra.mxu0 0.0
    %2134 = vmatprep.subr.mxu0 0.0
    %2135 = vmatpush2.msra.mxu0 0.0
    %2136 = vmatprep.subr.mxu0 0.0
    %2137 = vmatpush2.msra.mxu0 0.0
    %2138 = vmatprep.subr.mxu0 0.0
    %2139 = vmatpush2.msra.mxu0 0.0
    %2140 = vmatprep.subr.mxu0 0.0
    %2141 = vmatpush2.msra.mxu0 0.0
    %2142 = vmatprep.subr.mxu0 0.0
    %2143 = vmatpush2.msra.mxu0 0.0
    %2144 = vmatprep.mubr.f32.mxu0 0.0
    %2145 = vmatmul.mubr.f32.gmra.mxu0 %v2078
    %v2146 = vpop.f32.mrf.mxu0
    %v2147 = vadd.f32 0.0, %v2146
    %v2148 = vpop.f32.mrf.mxu0
    %2149 = vdwg.mxu0
    %v2150 = vadd.f32 %v2077, %v2147
    %v2151 = vxor.u32 %v2150, 2147483648
    %v2152 = vmul.f32 %v2151, 1.442695
    %v2153 = vpow.pop %v2152
    %v2154 = vadd.f32 %v2153, 1.0
    %v2155 = vrcp.pop %v2154
    %v2156 = vmul.f32 1.0, %v2155
    %v2157 = vtanh.pop %v2150
    %v2158 = vmul.f32 %v2156, %v2065
    %2160 = vrot.lane.b32.xlu0 %v2157, 64
    %v2161 = vpop.permute.xlu0 %2160
    %v2163 = vmul.f32 %v2156, %v2161
    %2165 = vrot.lane.b32.xlu0 %v2163, 32
    %v2166 = vpop.permute.xlu0 %2165
    %v2168 = vadd.f32 %v2158, %v2166
    %v2169 = vtanh.pop %v2168
    %2171 = vrot.lane.b32.xlu0 %v2169, 64
    %v2172 = vpop.permute.xlu0 %2171
    %v2174 = vmul.f32 %v2156, %v2172
    %2176 = vrot.lane.b32.xlu0 %v2174, 32
    %v2177 = vpop.permute.xlu0 %2176
    %2179 = vst.msk [vmem:[#allocation12 + $0x28] sm:$0xff] %vm393, %v2177
    %v2180 = vld [vmem:[#allocation2 + $0x30] sm:$0xff]
    %v2181 = vsel %vm393, %v2177, 0
    %2183 = vmatprep.subr.mxu0 0.0
    %2184 = vmatpush1.msra.mxu0 0.0
    %2185 = vmatprep.subr.mxu0 0.0
    %2186 = vmatpush1.msra.mxu0 0.0
    %2187 = vmatprep.subr.mxu0 0.0
    %2188 = vmatpush1.msra.mxu0 0.0
    %2189 = vmatprep.subr.mxu0 0.0
    %2190 = vmatpush1.msra.mxu0 0.0
    %2191 = vmatprep.subr.mxu0 0.0
    %2192 = vmatpush1.msra.mxu0 0.0
    %2193 = vmatprep.subr.mxu0 0.0
    %2194 = vmatpush1.msra.mxu0 0.0
    %2195 = vmatprep.subr.mxu0 0.0
    %2196 = vmatpush1.msra.mxu0 0.0
    %2197 = vmatprep.subr.mxu0 0.0
    %2198 = vmatpush1.msra.mxu0 0.0
    %2199 = vmatprep.subr.mxu0 0.0
    %2200 = vmatpush1.msra.mxu0 0.0
    %2201 = vmatprep.subr.mxu0 0.0
    %2202 = vmatpush1.msra.mxu0 0.0
    %2203 = vmatprep.subr.mxu0 0.0
    %2204 = vmatpush1.msra.mxu0 0.0
    %2205 = vmatprep.subr.mxu0 0.0
    %2206 = vmatpush1.msra.mxu0 0.0
    %2207 = vmatprep.subr.mxu0 0.0
    %2208 = vmatpush1.msra.mxu0 %v1563
    %2209 = vmatprep.subr.mxu0 0.0
    %2210 = vmatpush1.msra.mxu0 %v1562
    %2211 = vmatprep.subr.mxu0 0.0
    %2212 = vmatpush1.msra.mxu0 %v1561
    %2213 = vmatprep.subr.mxu0 0.0
    %2214 = vmatpush1.msra.mxu0 %v1560
    %2215 = vmatprep.subr.mxu0 0.0
    %2216 = vmatpush2.msra.mxu0 0.0
    %2217 = vmatprep.subr.mxu0 0.0
    %2218 = vmatpush2.msra.mxu0 0.0
    %2219 = vmatprep.subr.mxu0 0.0
    %2220 = vmatpush2.msra.mxu0 0.0
    %2221 = vmatprep.subr.mxu0 0.0
    %2222 = vmatpush2.msra.mxu0 0.0
    %2223 = vmatprep.subr.mxu0 0.0
    %2224 = vmatpush2.msra.mxu0 0.0
    %2225 = vmatprep.subr.mxu0 0.0
    %2226 = vmatpush2.msra.mxu0 0.0
    %2227 = vmatprep.subr.mxu0 0.0
    %2228 = vmatpush2.msra.mxu0 0.0
    %2229 = vmatprep.subr.mxu0 0.0
    %2230 = vmatpush2.msra.mxu0 0.0
    %2231 = vmatprep.subr.mxu0 0.0
    %2232 = vmatpush2.msra.mxu0 0.0
    %2233 = vmatprep.subr.mxu0 0.0
    %2234 = vmatpush2.msra.mxu0 0.0
    %2235 = vmatprep.subr.mxu0 0.0
    %2236 = vmatpush2.msra.mxu0 0.0
    %2237 = vmatprep.subr.mxu0 0.0
    %2238 = vmatpush2.msra.mxu0 0.0
    %2239 = vmatprep.subr.mxu0 0.0
    %2240 = vmatpush2.msra.mxu0 0.0
    %2241 = vmatprep.subr.mxu0 0.0
    %2242 = vmatpush2.msra.mxu0 0.0
    %2243 = vmatprep.subr.mxu0 0.0
    %2244 = vmatpush2.msra.mxu0 0.0
    %2245 = vmatprep.subr.mxu0 0.0
    %2246 = vmatpush2.msra.mxu0 0.0
    %2247 = vmatprep.mubr.f32.mxu0 0.0
    %2248 = vmatmul.mubr.f32.gmra.mxu0 %v2181
    %v2249 = vpop.f32.mrf.mxu0
    %v2250 = vadd.f32 0.0, %v2249
    %v2251 = vpop.f32.mrf.mxu0
    %2252 = vdwg.mxu0
    %v2253 = vadd.f32 %v2180, %v2250
    %v2254 = vxor.u32 %v2253, 2147483648
    %v2255 = vmul.f32 %v2254, 1.442695
    %v2256 = vpow.pop %v2255
    %v2257 = vadd.f32 %v2256, 1.0
    %v2258 = vrcp.pop %v2257
    %v2259 = vmul.f32 1.0, %v2258
    %v2260 = vtanh.pop %v2253
    %v2261 = vmul.f32 %v2259, %v2168
    %2263 = vrot.lane.b32.xlu0 %v2260, 64
    %v2264 = vpop.permute.xlu0 %2263
    %v2266 = vmul.f32 %v2259, %v2264
    %2268 = vrot.lane.b32.xlu0 %v2266, 32
    %v2269 = vpop.permute.xlu0 %2268
    %v2271 = vadd.f32 %v2261, %v2269
    %v2272 = vtanh.pop %v2271
    %2274 = vrot.lane.b32.xlu0 %v2272, 64
    %v2275 = vpop.permute.xlu0 %2274
    %v2277 = vmul.f32 %v2259, %v2275
    %2279 = vrot.lane.b32.xlu0 %v2277, 32
    %v2280 = vpop.permute.xlu0 %2279
    %2282 = vst.msk [vmem:[#allocation12 + $0x30] sm:$0xff] %vm393, %v2280
    %v2283 = vld [vmem:[#allocation2 + $0x38] sm:$0xff]
    %v2284 = vsel %vm393, %v2280, 0
    %2286 = vmatprep.subr.mxu0 0.0
    %2287 = vmatpush1.msra.mxu0 0.0
    %2288 = vmatprep.subr.mxu0 0.0
    %2289 = vmatpush1.msra.mxu0 0.0
    %2290 = vmatprep.subr.mxu0 0.0
    %2291 = vmatpush1.msra.mxu0 0.0
    %2292 = vmatprep.subr.mxu0 0.0
    %2293 = vmatpush1.msra.mxu0 0.0
    %2294 = vmatprep.subr.mxu0 0.0
    %2295 = vmatpush1.msra.mxu0 0.0
    %2296 = vmatprep.subr.mxu0 0.0
    %2297 = vmatpush1.msra.mxu0 0.0
    %2298 = vmatprep.subr.mxu0 0.0
    %2299 = vmatpush1.msra.mxu0 0.0
    %2300 = vmatprep.subr.mxu0 0.0
    %2301 = vmatpush1.msra.mxu0 0.0
    %2302 = vmatprep.subr.mxu0 0.0
    %2303 = vmatpush1.msra.mxu0 0.0
    %2304 = vmatprep.subr.mxu0 0.0
    %2305 = vmatpush1.msra.mxu0 0.0
    %2306 = vmatprep.subr.mxu0 0.0
    %2307 = vmatpush1.msra.mxu0 0.0
    %2308 = vmatprep.subr.mxu0 0.0
    %2309 = vmatpush1.msra.mxu0 0.0
    %2310 = vmatprep.subr.mxu0 0.0
    %2311 = vmatpush1.msra.mxu0 %v1563
    %2312 = vmatprep.subr.mxu0 0.0
    %2313 = vmatpush1.msra.mxu0 %v1562
    %2314 = vmatprep.subr.mxu0 0.0
    %2315 = vmatpush1.msra.mxu0 %v1561
    %2316 = vmatprep.subr.mxu0 0.0
    %2317 = vmatpush1.msra.mxu0 %v1560
    %2318 = vmatprep.subr.mxu0 0.0
    %2319 = vmatpush2.msra.mxu0 0.0
    %2320 = vmatprep.subr.mxu0 0.0
    %2321 = vmatpush2.msra.mxu0 0.0
    %2322 = vmatprep.subr.mxu0 0.0
    %2323 = vmatpush2.msra.mxu0 0.0
    %2324 = vmatprep.subr.mxu0 0.0
    %2325 = vmatpush2.msra.mxu0 0.0
    %2326 = vmatprep.subr.mxu0 0.0
    %2327 = vmatpush2.msra.mxu0 0.0
    %2328 = vmatprep.subr.mxu0 0.0
    %2329 = vmatpush2.msra.mxu0 0.0
    %2330 = vmatprep.subr.mxu0 0.0
    %2331 = vmatpush2.msra.mxu0 0.0
    %2332 = vmatprep.subr.mxu0 0.0
    %2333 = vmatpush2.msra.mxu0 0.0
    %2334 = vmatprep.subr.mxu0 0.0
    %2335 = vmatpush2.msra.mxu0 0.0
    %2336 = vmatprep.subr.mxu0 0.0
    %2337 = vmatpush2.msra.mxu0 0.0
    %2338 = vmatprep.subr.mxu0 0.0
    %2339 = vmatpush2.msra.mxu0 0.0
    %2340 = vmatprep.subr.mxu0 0.0
    %2341 = vmatpush2.msra.mxu0 0.0
    %2342 = vmatprep.subr.mxu0 0.0
    %2343 = vmatpush2.msra.mxu0 0.0
    %2344 = vmatprep.subr.mxu0 0.0
    %2345 = vmatpush2.msra.mxu0 0.0
    %2346 = vmatprep.subr.mxu0 0.0
    %2347 = vmatpush2.msra.mxu0 0.0
    %2348 = vmatprep.subr.mxu0 0.0
    %2349 = vmatpush2.msra.mxu0 0.0
    %2350 = vmatprep.mubr.f32.mxu0 0.0
    %2351 = vmatmul.mubr.f32.gmra.mxu0 %v2284
    %v2352 = vpop.f32.mrf.mxu0
    %v2353 = vadd.f32 0.0, %v2352
    %v2354 = vpop.f32.mrf.mxu0
    %2355 = vdwg.mxu0
    %v2356 = vadd.f32 %v2283, %v2353
    %v2357 = vxor.u32 %v2356, 2147483648
    %v2358 = vmul.f32 %v2357, 1.442695
    %v2359 = vpow.pop %v2358
    %v2360 = vadd.f32 %v2359, 1.0
    %v2361 = vrcp.pop %v2360
    %v2362 = vmul.f32 1.0, %v2361
    %v2363 = vtanh.pop %v2356
    %v2364 = vmul.f32 %v2362, %v2271
    %2366 = vrot.lane.b32.xlu0 %v2363, 64
    %v2367 = vpop.permute.xlu0 %2366
    %v2369 = vmul.f32 %v2362, %v2367
    %2371 = vrot.lane.b32.xlu0 %v2369, 32
    %v2372 = vpop.permute.xlu0 %2371
    %v2374 = vadd.f32 %v2364, %v2372
    %v2375 = vtanh.pop %v2374
    %2377 = vrot.lane.b32.xlu0 %v2375, 64
    %v2378 = vpop.permute.xlu0 %2377
    %v2380 = vmul.f32 %v2362, %v2378
    %2382 = vrot.lane.b32.xlu0 %v2380, 32
    %v2383 = vpop.permute.xlu0 %2382
    %2385 = vst.msk [vmem:[#allocation12 + $0x38] sm:$0xff] %vm393, %v2383
    %v2386 = vld [vmem:[#allocation2 + $0x40] sm:$0xff]
    %v2387 = vsel %vm393, %v2383, 0
    %2389 = vmatprep.subr.mxu0 0.0
    %2390 = vmatpush1.msra.mxu0 0.0
    %2391 = vmatprep.subr.mxu0 0.0
    %2392 = vmatpush1.msra.mxu0 0.0
    %2393 = vmatprep.subr.mxu0 0.0
    %2394 = vmatpush1.msra.mxu0 0.0
    %2395 = vmatprep.subr.mxu0 0.0
    %2396 = vmatpush1.msra.mxu0 0.0
    %2397 = vmatprep.subr.mxu0 0.0
    %2398 = vmatpush1.msra.mxu0 0.0
    %2399 = vmatprep.subr.mxu0 0.0
    %2400 = vmatpush1.msra.mxu0 0.0
    %2401 = vmatprep.subr.mxu0 0.0
    %2402 = vmatpush1.msra.mxu0 0.0
    %2403 = vmatprep.subr.mxu0 0.0
    %2404 = vmatpush1.msra.mxu0 0.0
    %2405 = vmatprep.subr.mxu0 0.0
    %2406 = vmatpush1.msra.mxu0 0.0
    %2407 = vmatprep.subr.mxu0 0.0
    %2408 = vmatpush1.msra.mxu0 0.0
    %2409 = vmatprep.subr.mxu0 0.0
    %2410 = vmatpush1.msra.mxu0 0.0
    %2411 = vmatprep.subr.mxu0 0.0
    %2412 = vmatpush1.msra.mxu0 0.0
    %2413 = vmatprep.subr.mxu0 0.0
    %2414 = vmatpush1.msra.mxu0 %v1563
    %2415 = vmatprep.subr.mxu0 0.0
    %2416 = vmatpush1.msra.mxu0 %v1562
    %2417 = vmatprep.subr.mxu0 0.0
    %2418 = vmatpush1.msra.mxu0 %v1561
    %2419 = vmatprep.subr.mxu0 0.0
    %2420 = vmatpush1.msra.mxu0 %v1560
    %2421 = vmatprep.subr.mxu0 0.0
    %2422 = vmatpush2.msra.mxu0 0.0
    %2423 = vmatprep.subr.mxu0 0.0
    %2424 = vmatpush2.msra.mxu0 0.0
    %2425 = vmatprep.subr.mxu0 0.0
    %2426 = vmatpush2.msra.mxu0 0.0
    %2427 = vmatprep.subr.mxu0 0.0
    %2428 = vmatpush2.msra.mxu0 0.0
    %2429 = vmatprep.subr.mxu0 0.0
    %2430 = vmatpush2.msra.mxu0 0.0
    %2431 = vmatprep.subr.mxu0 0.0
    %2432 = vmatpush2.msra.mxu0 0.0
    %2433 = vmatprep.subr.mxu0 0.0
    %2434 = vmatpush2.msra.mxu0 0.0
    %2435 = vmatprep.subr.mxu0 0.0
    %2436 = vmatpush2.msra.mxu0 0.0
    %2437 = vmatprep.subr.mxu0 0.0
    %2438 = vmatpush2.msra.mxu0 0.0
    %2439 = vmatprep.subr.mxu0 0.0
    %2440 = vmatpush2.msra.mxu0 0.0
    %2441 = vmatprep.subr.mxu0 0.0
    %2442 = vmatpush2.msra.mxu0 0.0
    %2443 = vmatprep.subr.mxu0 0.0
    %2444 = vmatpush2.msra.mxu0 0.0
    %2445 = vmatprep.subr.mxu0 0.0
    %2446 = vmatpush2.msra.mxu0 0.0
    %2447 = vmatprep.subr.mxu0 0.0
    %2448 = vmatpush2.msra.mxu0 0.0
    %2449 = vmatprep.subr.mxu0 0.0
    %2450 = vmatpush2.msra.mxu0 0.0
    %2451 = vmatprep.subr.mxu0 0.0
    %2452 = vmatpush2.msra.mxu0 0.0
    %2453 = vmatprep.mubr.f32.mxu0 0.0
    %2454 = vmatmul.mubr.f32.gmra.mxu0 %v2387
    %v2455 = vpop.f32.mrf.mxu0
    %v2456 = vadd.f32 0.0, %v2455
    %v2457 = vpop.f32.mrf.mxu0
    %2458 = vdwg.mxu0
    %v2459 = vadd.f32 %v2386, %v2456
    %v2460 = vxor.u32 %v2459, 2147483648
    %v2461 = vmul.f32 %v2460, 1.442695
    %v2462 = vpow.pop %v2461
    %v2463 = vadd.f32 %v2462, 1.0
    %v2464 = vrcp.pop %v2463
    %v2465 = vmul.f32 1.0, %v2464
    %v2466 = vtanh.pop %v2459
    %v2467 = vmul.f32 %v2465, %v2374
    %2469 = vrot.lane.b32.xlu0 %v2466, 64
    %v2470 = vpop.permute.xlu0 %2469
    %v2472 = vmul.f32 %v2465, %v2470
    %2474 = vrot.lane.b32.xlu0 %v2472, 32
    %v2475 = vpop.permute.xlu0 %2474
    %v2477 = vadd.f32 %v2467, %v2475
    %v2478 = vtanh.pop %v2477
    %2480 = vrot.lane.b32.xlu0 %v2478, 64
    %v2481 = vpop.permute.xlu0 %2480
    %v2483 = vmul.f32 %v2465, %v2481
    %2485 = vrot.lane.b32.xlu0 %v2483, 32
    %v2486 = vpop.permute.xlu0 %2485
    %2488 = vst.msk [vmem:[#allocation12 + $0x40] sm:$0xff] %vm393, %v2486
    %v2489 = vld [vmem:[#allocation2 + $0x48] sm:$0xff]
    %v2490 = vsel %vm393, %v2486, 0
    %2492 = vmatprep.subr.mxu0 0.0
    %2493 = vmatpush1.msra.mxu0 0.0
    %2494 = vmatprep.subr.mxu0 0.0
    %2495 = vmatpush1.msra.mxu0 0.0
    %2496 = vmatprep.subr.mxu0 0.0
    %2497 = vmatpush1.msra.mxu0 0.0
    %2498 = vmatprep.subr.mxu0 0.0
    %2499 = vmatpush1.msra.mxu0 0.0
    %2500 = vmatprep.subr.mxu0 0.0
    %2501 = vmatpush1.msra.mxu0 0.0
    %2502 = vmatprep.subr.mxu0 0.0
    %2503 = vmatpush1.msra.mxu0 0.0
    %2504 = vmatprep.subr.mxu0 0.0
    %2505 = vmatpush1.msra.mxu0 0.0
    %2506 = vmatprep.subr.mxu0 0.0
    %2507 = vmatpush1.msra.mxu0 0.0
    %2508 = vmatprep.subr.mxu0 0.0
    %2509 = vmatpush1.msra.mxu0 0.0
    %2510 = vmatprep.subr.mxu0 0.0
    %2511 = vmatpush1.msra.mxu0 0.0
    %2512 = vmatprep.subr.mxu0 0.0
    %2513 = vmatpush1.msra.mxu0 0.0
    %2514 = vmatprep.subr.mxu0 0.0
    %2515 = vmatpush1.msra.mxu0 0.0
    %2516 = vmatprep.subr.mxu0 0.0
    %2517 = vmatpush1.msra.mxu0 %v1563
    %2518 = vmatprep.subr.mxu0 0.0
    %2519 = vmatpush1.msra.mxu0 %v1562
    %2520 = vmatprep.subr.mxu0 0.0
    %2521 = vmatpush1.msra.mxu0 %v1561
    %2522 = vmatprep.subr.mxu0 0.0
    %2523 = vmatpush1.msra.mxu0 %v1560
    %2524 = vmatprep.subr.mxu0 0.0
    %2525 = vmatpush2.msra.mxu0 0.0
    %2526 = vmatprep.subr.mxu0 0.0
    %2527 = vmatpush2.msra.mxu0 0.0
    %2528 = vmatprep.subr.mxu0 0.0
    %2529 = vmatpush2.msra.mxu0 0.0
    %2530 = vmatprep.subr.mxu0 0.0
    %2531 = vmatpush2.msra.mxu0 0.0
    %2532 = vmatprep.subr.mxu0 0.0
    %2533 = vmatpush2.msra.mxu0 0.0
    %2534 = vmatprep.subr.mxu0 0.0
    %2535 = vmatpush2.msra.mxu0 0.0
    %2536 = vmatprep.subr.mxu0 0.0
    %2537 = vmatpush2.msra.mxu0 0.0
    %2538 = vmatprep.subr.mxu0 0.0
    %2539 = vmatpush2.msra.mxu0 0.0
    %2540 = vmatprep.subr.mxu0 0.0
    %2541 = vmatpush2.msra.mxu0 0.0
    %2542 = vmatprep.subr.mxu0 0.0
    %2543 = vmatpush2.msra.mxu0 0.0
    %2544 = vmatprep.subr.mxu0 0.0
    %2545 = vmatpush2.msra.mxu0 0.0
    %2546 = vmatprep.subr.mxu0 0.0
    %2547 = vmatpush2.msra.mxu0 0.0
    %2548 = vmatprep.subr.mxu0 0.0
    %2549 = vmatpush2.msra.mxu0 0.0
    %2550 = vmatprep.subr.mxu0 0.0
    %2551 = vmatpush2.msra.mxu0 0.0
    %2552 = vmatprep.subr.mxu0 0.0
    %2553 = vmatpush2.msra.mxu0 0.0
    %2554 = vmatprep.subr.mxu0 0.0
    %2555 = vmatpush2.msra.mxu0 0.0
    %2556 = vmatprep.mubr.f32.mxu0 0.0
    %2557 = vmatmul.mubr.f32.gmra.mxu0 %v2490
    %v2558 = vpop.f32.mrf.mxu0
    %v2559 = vadd.f32 0.0, %v2558
    %v2560 = vpop.f32.mrf.mxu0
    %2561 = vdwg.mxu0
    %v2562 = vadd.f32 %v2489, %v2559
    %v2563 = vxor.u32 %v2562, 2147483648
    %v2564 = vmul.f32 %v2563, 1.442695
    %v2565 = vpow.pop %v2564
    %v2566 = vadd.f32 %v2565, 1.0
    %v2567 = vrcp.pop %v2566
    %v2568 = vmul.f32 1.0, %v2567
    %v2569 = vtanh.pop %v2562
    %v2570 = vmul.f32 %v2568, %v2477
    %2572 = vrot.lane.b32.xlu0 %v2569, 64
    %v2573 = vpop.permute.xlu0 %2572
    %v2575 = vmul.f32 %v2568, %v2573
    %2577 = vrot.lane.b32.xlu0 %v2575, 32
    %v2578 = vpop.permute.xlu0 %2577
    %v2580 = vadd.f32 %v2570, %v2578
    %v2581 = vtanh.pop %v2580
    %2583 = vrot.lane.b32.xlu0 %v2581, 64
    %v2584 = vpop.permute.xlu0 %2583
    %v2586 = vmul.f32 %v2568, %v2584
    %2588 = vrot.lane.b32.xlu0 %v2586, 32
    %v2589 = vpop.permute.xlu0 %2588
    %2591 = vst.msk [vmem:[#allocation12 + $0x48] sm:$0xff] %vm393, %v2589
    // Predicated region
    $region34: #{encoder_forward.1} parent=1 // pred_check
      _
    $region35: #{encoder_forward.1} parent=1 // pred_check_branch
      %2593 = sbr.rel (0) target = $region37
    $region36: #{encoder_forward.1} parent=1 // pred_region
      %s2595 = ssub.s32 1280, 1280
      %2596 = vsyncadd [#allocation8], %s2595
      %s2597 = sshll.u32 [#allocation12], 4
      %s2598 = int_to_ptr.vmem [resolvable:$true] %s2597
      %2603 = dma.vmem_to_hbm [thread:$0]  %s2598, 1280, %s6, [#allocation8], 128, 128, 8
    $region37: #{encoder_forward.1} parent=1 // pred_fallthru
      _
    // Predicated region
    $region38: #{encoder_forward.1} parent=1 // pred_check
      _
    $region39: #{encoder_forward.1} parent=1 // pred_check_branch
      %2605 = sbr.rel (0) target = $region41
    $region40: #{encoder_forward.1} parent=1 // pred_region
      %2606 = dma.done [#allocation8], 1280
    $region41: #{encoder_forward.1} parent=1 // pred_fallthru
      _
    %2607 = vsyncpa [#allocation7], 1
    %2608 = vsyncpa [#allocation10], 1
    %2609 = vsyncpa [#allocation8], 1

</llo_original>
